<compile_context>
chip_gen: v6e
topology: v6e:2x2x1
jax: 0.10.0
libtpu: 0.0.40
codegen_flags: <defaults>
</compile_context>

<pallas_src>
import functools

import jax
import jax.numpy as jnp
from jax import lax
from jax.experimental import pallas as pl
from jax.experimental.pallas import tpu as pltpu

BN_EPS = 1e-5
LEAKY_SLOPE = 0.2
MAX_TN = 4096                       # hard cap on the lane-axis tile width


# ---------------------------------------------------------------------------
# Generation-aware VMEM budgeting
# ---------------------------------------------------------------------------
@functools.lru_cache(maxsize=1)
def _vmem_limit_bytes():
    """Scoped-VMEM limit: ~3/4 of physical per-core VMEM, capped at 100 MiB.

    v5e/v6e (128 MiB physical) -> ~96 MiB; v7x (64 MiB per TC) -> ~48 MiB.
    Falls back to a 32 MiB limit (safe on every generation) if the query
    is unavailable.
    """
    default = 32 * 1024 * 1024
    try:
        phys = getattr(pltpu.get_tpu_info(), "vmem_capacity_bytes", None)
    except Exception:
        phys = None
    if not phys:
        return default
    return int(min(phys * 3 // 4, 100 * 1024 * 1024))


def _compiler_params(sem):
    return pltpu.CompilerParams(dimension_semantics=sem,
                                vmem_limit_bytes=_vmem_limit_bytes())


def _choose_tn(m, fixed_bytes, bytes_per_col):
    """Pick the lane tile TN for an (.., M) output from its VMEM footprint.

    `fixed_bytes`  : VMEM cost independent of TN (e.g. double-buffered weight).
    `bytes_per_col`: VMEM cost per output column (all double-buffered blocks
                     whose lane width is TN).
    Returns (tn, num_tiles, m_valid) where m_valid is None when TN divides M
    exactly (no masking needed) and the true M otherwise (ragged last tile).
    """
    budget = _vmem_limit_bytes() // 2          # headroom for pipeline/compiler
    cap = (budget - fixed_bytes) // max(bytes_per_col, 1)
    cap = max(128, min(MAX_TN, cap))
    if m <= cap:
        return m, 1, None                      # single full block (full-dim rule)
    for tn in (4096, 2048, 1024, 512, 256, 128):
        if tn <= cap and m % tn == 0:
            return tn, m // tn, None
    # Ragged fallback (never hit for standard DCGAN shapes): cdiv grid; OOB
    # tail columns are masked in-kernel for reductions and dropped by Pallas
    # on output copy-back.  No HBM-wide jnp.pad copies.
    tn = cap - cap % 128
    return tn, pl.cdiv(m, tn), m


# ---------------------------------------------------------------------------
# Pallas kernels
# ---------------------------------------------------------------------------
def _conv_act_kernel(w_ref, p_ref, o_ref, *, act):
    """(Cout, K) @ (K, TN) on the MXU (bf16 in, f32 acc) + fused activation."""
    acc = jnp.dot(w_ref[...], p_ref[...], preferred_element_type=jnp.float32)
    if act == "leaky":
        acc = jnp.where(acc >= 0, acc, LEAKY_SLOPE * acc)
    o_ref[...] = acc.astype(o_ref.dtype)


def _conv_stats_kernel(w_ref, p_ref, y_ref, s1_ref, s2_ref, *, tn, m_valid):
    """Conv matmul + per-tile partial BatchNorm sums (sum / sum-of-squares).

    Partial sums are written to per-tile output blocks (no shared resident
    accumulator), so the M grid axis can be "parallel" (v7x megacore).
    """
    acc = jnp.dot(w_ref[...], p_ref[...], preferred_element_type=jnp.float32)
    y_ref[...] = acc.astype(y_ref.dtype)       # bf16 intermediate (half traffic)
    if m_valid is not None:                    # mask OOB tail of ragged last tile
        col = pl.program_id(0) * tn + lax.broadcasted_iota(jnp.int32, acc.shape, 1)
        acc = jnp.where(col < m_valid, acc, 0.0)
    s1_ref[0] = jnp.sum(acc, axis=1, keepdims=True)        # (Cout, 1) f32
    s2_ref[0] = jnp.sum(acc * acc, axis=1, keepdims=True)  # (Cout, 1) f32


def _affine_leaky_kernel(y_ref, scale_ref, shift_ref, o_ref):
    """Folded BatchNorm affine + LeakyReLU(0.2); lane-dense, bf16 in/out."""
    y = y_ref[...].astype(jnp.float32) * scale_ref[...] + shift_ref[...]
    o_ref[...] = jnp.where(y >= 0, y, LEAKY_SLOPE * y).astype(o_ref.dtype)


def _head_kernel(w_ref, p_ref, o_ref):
    """Final 4x4 conv: (K,1) x (K,TN) -> (1,TN) on the MXU + stable sigmoid."""
    logit = lax.dot_general(w_ref[...], p_ref[...],
                            dimension_numbers=(((0,), (0,)), ((), ())),
                            preferred_element_type=jnp.float32)
    o_ref[...] = 0.5 * (jnp.tanh(0.5 * logit) + 1.0)       # == sigmoid(logit)


# ---------------------------------------------------------------------------
# Kernel wrappers
# ---------------------------------------------------------------------------
def conv_act(wmat, patches, act, out_dtype):
    """wmat: (Cout, K) bf16, patches: (K, M) bf16 -> (Cout, M) out_dtype."""
    cout, k = wmat.shape
    m = patches.shape[1]
    fixed = 2 * cout * k * wmat.dtype.itemsize
    per_col = 2 * k * patches.dtype.itemsize + 2 * cout * jnp.dtype(out_dtype).itemsize
    tn, nt, _ = _choose_tn(m, fixed, per_col)
    return pl.pallas_call(
        functools.partial(_conv_act_kernel, act=act),
        out_shape=jax.ShapeDtypeStruct((cout, m), out_dtype),
        grid_spec=pltpu.PrefetchScalarGridSpec(
            num_scalar_prefetch=0,
            grid=(nt,),
            in_specs=[
                pl.BlockSpec((cout, k), lambda i: (0, 0)),   # invariant weight
                pl.BlockSpec((k, tn), lambda i: (0, i)),
            ],
            out_specs=pl.BlockSpec((cout, tn), lambda i: (0, i)),
        ),
        compiler_params=_compiler_params(("parallel",)),
    )(wmat, patches)


def conv_bn_stats(wmat, patches, y_dtype=jnp.bfloat16):
    """Conv matmul emitting bf16 (Cout, M) plus per-channel sum / sumsq (f32)."""
    cout, k = wmat.shape
    m = patches.shape[1]
    fixed = 2 * cout * k * wmat.dtype.itemsize
    per_col = 2 * k * patches.dtype.itemsize + 2 * cout * jnp.dtype(y_dtype).itemsize
    tn, nt, m_valid = _choose_tn(m, fixed, per_col)
    y, p1, p2 = pl.pallas_call(
        functools.partial(_conv_stats_kernel, tn=tn, m_valid=m_valid),
        out_shape=(jax.ShapeDtypeStruct((cout, m), y_dtype),
                   jax.ShapeDtypeStruct((nt, cout, 1), jnp.float32),
                   jax.ShapeDtypeStruct((nt, cout, 1), jnp.float32)),
        grid_spec=pltpu.PrefetchScalarGridSpec(
            num_scalar_prefetch=0,
            grid=(nt,),
            in_specs=[
                pl.BlockSpec((cout, k), lambda i: (0, 0)),
                pl.BlockSpec((k, tn), lambda i: (0, i)),
            ],
            out_specs=(
                pl.BlockSpec((cout, tn), lambda i: (0, i)),
                pl.BlockSpec((1, cout, 1), lambda i: (i, 0, 0)),  # per-tile partial
                pl.BlockSpec((1, cout, 1), lambda i: (i, 0, 0)),  # per-tile partial
            ),
        ),
        compiler_params=_compiler_params(("parallel",)),   # no shared acc -> safe
    )(wmat, patches)
    # Tiny (nt, Cout) tree-reduction in XLA.
    s1 = jnp.sum(p1, axis=0)   # (Cout, 1)
    s2 = jnp.sum(p2, axis=0)   # (Cout, 1)
    return y, s1, s2


def affine_leaky(y, scale, shift, out_dtype):
    """y: (Cout, M) bf16; scale/shift: (Cout, 1) f32 -> LeakyReLU(y*s+b) bf16."""
    cout, m = y.shape
    fixed = 2 * 2 * cout * 4                   # scale + shift, double-buffered
    per_col = 2 * cout * y.dtype.itemsize + 2 * cout * jnp.dtype(out_dtype).itemsize
    tn, nt, _ = _choose_tn(m, fixed, per_col)
    return pl.pallas_call(
        _affine_leaky_kernel,
        out_shape=jax.ShapeDtypeStruct((cout, m), out_dtype),
        grid_spec=pltpu.PrefetchScalarGridSpec(
            num_scalar_prefetch=0,
            grid=(nt,),
            in_specs=[
                pl.BlockSpec((cout, tn), lambda i: (0, i)),
                pl.BlockSpec((cout, 1), lambda i: (0, 0)),
                pl.BlockSpec((cout, 1), lambda i: (0, 0)),
            ],
            out_specs=pl.BlockSpec((cout, tn), lambda i: (0, i)),
        ),
        compiler_params=_compiler_params(("parallel",)),
    )(y, scale, shift)


def head_sigmoid(wvec, patches):
    """wvec: (K, 1) bf16, patches: (K, N) bf16 -> sigmoid logits (1, N) f32."""
    k, m = patches.shape
    fixed = 2 * k * wvec.dtype.itemsize
    per_col = 2 * k * patches.dtype.itemsize + 2 * 4
    tn, nt, _ = _choose_tn(m, fixed, per_col)
    return pl.pallas_call(
        _head_kernel,
        out_shape=jax.ShapeDtypeStruct((1, m), jnp.float32),
        grid_spec=pltpu.PrefetchScalarGridSpec(
            num_scalar_prefetch=0,
            grid=(nt,),
            in_specs=[
                pl.BlockSpec((k, 1), lambda i: (0, 0)),
                pl.BlockSpec((k, tn), lambda i: (0, i)),
            ],
            out_specs=pl.BlockSpec((1, tn), lambda i: (0, i)),
        ),
        compiler_params=_compiler_params(("parallel",)),
    )(wvec, patches)


# ---------------------------------------------------------------------------
# Glue: patch extraction (XLA) and layer composition
# ---------------------------------------------------------------------------
def extract_patches(act_4d, ksize, stride, pad, in_spec):
    """Return (K, M) = (Cin*k*k, N*Ho*Wo) patches, channel-major K ordering.

    Channel-major ordering (cin*k*k + i*k + j) matches the PyTorch weight
    flattening w.reshape(Cout, Cin*k*k); verified against the f32 reference
    convolution in __main__.
    """
    patches = lax.conv_general_dilated_patches(
        act_4d, (ksize, ksize), (stride, stride), [(pad, pad), (pad, pad)],
        dimension_numbers=(in_spec, "OIHW", "CNHW"))
    kk, n, ho, wo = patches.shape
    return patches.reshape(kk, n * ho * wo), (n, ho, wo)


def discriminator_forward(x, params):
    """x: (N, 3, 64, 64) NCHW float32 -> (N, 1, 1, 1) in (0, 1)."""
    n = x.shape[0]
    x_bf16 = x.astype(jnp.bfloat16)

    # conv1 (4x4, stride 2, pad 1) + LeakyReLU (fused into the matmul epilogue)
    w1 = params["w1"]
    p, (_, ho, wo) = extract_patches(x_bf16, 4, 2, 1, "NCHW")
    act = conv_act(w1.reshape(w1.shape[0], -1).astype(jnp.bfloat16), p,
                   act="leaky", out_dtype=jnp.bfloat16)        # (f, N*32*32)
    shape4d = (w1.shape[0], n, ho, wo)

    # conv{2,3,4} + BatchNorm(training-mode batch stats) + LeakyReLU
    for idx in (2, 3, 4):
        w = params[f"w{idx}"]
        gamma = params[f"gamma{idx}"]
        beta = params[f"beta{idx}"]
        cout = w.shape[0]
        p, (_, ho, wo) = extract_patches(act.reshape(shape4d), 4, 2, 1, "CNHW")
        y, s1, s2 = conv_bn_stats(w.reshape(cout, -1).astype(jnp.bfloat16), p)
        # Tiny (Cout,) finishing math in XLA: mean / biased var / fold affine.
        m_count = float(p.shape[1])
        mean = s1 / m_count                                    # (Cout, 1)
        var = jnp.maximum(s2 / m_count - mean * mean, 0.0)     # biased, PyTorch train
        scale = gamma.reshape(cout, 1) / jnp.sqrt(var + BN_EPS)
        shift = beta.reshape(cout, 1) - mean * scale
        act = affine_leaky(y, scale.astype(jnp.float32), shift.astype(jnp.float32),
                           out_dtype=jnp.bfloat16)             # (Cout, N*Ho*Wo)
        shape4d = (cout, n, ho, wo)

    # conv5 (4x4, stride 1, pad 0, Cout=1) + Sigmoid on the MXU
    p, _ = extract_patches(act.reshape(shape4d), 4, 1, 0, "CNHW")   # (K, N)
    w5 = params["w5"].reshape(-1, 1).astype(jnp.bfloat16)           # (K, 1)
    out = head_sigmoid(w5, p)                                       # (1, N)
    return out.reshape(n, 1, 1, 1)


# ---------------------------------------------------------------------------
# Pure-XLA f32 reference (validates patch ordering / BN semantics)
# ---------------------------------------------------------------------------
def reference_forward(x, params):
    def conv(h, w, stride, pad):
        return lax.conv_general_dilated(
            h, w, (stride, stride), [(pad, pad), (pad, pad)],
            dimension_numbers=("NCHW", "OIHW", "NCHW"))

    def leaky(h):
        return jnp.where(h >= 0, h, LEAKY_SLOPE * h)

    h = leaky(conv(x, params["w1"], 2, 1))
    for idx in (2, 3, 4):
        h = conv(h, params[f"w{idx}"], 2, 1)
        mean = jnp.mean(h, axis=(0, 2, 3), keepdims=True)
        var = jnp.mean(jnp.square(h - mean), axis=(0, 2, 3), keepdims=True)
        h = (h - mean) / jnp.sqrt(var + BN_EPS)
        h = h * params[f"gamma{idx}"].reshape(1, -1, 1, 1) \
            + params[f"beta{idx}"].reshape(1, -1, 1, 1)
        h = leaky(h)
    h = conv(h, params["w5"], 1, 0)
    return jax.nn.sigmoid(h)


# ---------------------------------------------------------------------------
# Deterministic parameter construction (DCGAN-style init, no checkpoint load)
# ---------------------------------------------------------------------------
def make_params(init_filter, key):
    nc = 3
    f = init_filter
    shapes = {
        "w1": (f, nc, 4, 4),
        "w2": (2 * f, f, 4, 4),
        "w3": (4 * f, 2 * f, 4, 4),
        "w4": (8 * f, 4 * f, 4, 4),
        "w5": (1, 8 * f, 4, 4),
    }
    params = {}
    keys = jax.random.split(key, len(shapes))
    for k_, (name, shp) in zip(keys, shapes.items()):
        params[name] = 0.02 * jax.random.normal(k_, shp, jnp.float32)
    for idx, c in ((2, 2 * f), (3, 4 * f), (4, 8 * f)):
        params[f"gamma{idx}"] = jnp.ones((c,), jnp.float32)   # PyTorch BN default
        params[f"beta{idx}"] = jnp.zeros((c,), jnp.float32)
    return params


if __name__ == "__main__":
    key = jax.random.PRNGKey(0)
    k_param, k_input = jax.random.split(key)

    init_filter = 8
    batch = 2
    # DCGAN discriminator requires 64x64 input (final 4x4 valid conv -> 1x1).
    x = jax.random.normal(k_input, (batch, 3, 64, 64), jnp.float32)
    params = make_params(init_filter, k_param)

    fwd = jax.jit(discriminator_forward)
    out = jax.block_until_ready(fwd(x, params))

    assert out.shape == (batch, 1, 1, 1), out.shape
    assert out.dtype == jnp.float32
    assert bool(jnp.all((out > 0.0) & (out < 1.0)))

    # Verify against the pure-XLA f32 reference (bf16 activation tolerance).
    ref = jax.block_until_ready(jax.jit(reference_forward)(x, params))
    max_err = float(jnp.max(jnp.abs(out - ref)))
    assert max_err < 6e-2, f"mismatch vs f32 reference: max_err={max_err}"

    print("KERNEL_OK")
</pallas_src>

<mosaic_0001>
module attributes {stable_mosaic.version = 11 : i64} {
  func.func @_conv_act_kernel(%arg0: i32, %arg1: memref<8x48xbf16, #tpu.memory_space<vmem>>, %arg2: memref<48x2048xbf16, #tpu.memory_space<vmem>>, %arg3: memref<8x2048xbf16, #tpu.memory_space<vmem>>) attributes {dimension_semantics = [#tpu.dimension_semantics<parallel>], iteration_bounds = array<i64: 1>, scalar_prefetch = 0 : i64, scratch_operands = 0 : i64, tpu.core_type = #tpu.core_type<tc>, window_params = [{pipeline_mode = #tpu.pipeline_mode<synchronous>, transform_indices = @transform_0, window_bounds = array<i64: 8, 48>}, {transform_indices = @transform_1, window_bounds = array<i64: 48, 2048>}, {transform_indices = @transform_2, window_bounds = array<i64: 8, 2048>}]} {
    %c0 = arith.constant 0 : index
    %c0_0 = arith.constant 0 : index
    %0 = vector.load %arg1[%c0, %c0_0] : memref<8x48xbf16, #tpu.memory_space<vmem>>, vector<8x48xbf16>
    %c0_1 = arith.constant 0 : index
    %c0_2 = arith.constant 0 : index
    %1 = vector.load %arg2[%c0_1, %c0_2] : memref<48x2048xbf16, #tpu.memory_space<vmem>>, vector<48x2048xbf16>
    %cst = arith.constant dense<0.000000e+00> : vector<8x2048xf32>
    %2 = tpu.matmul %0, %1, %cst {dimension_numbers = #tpu.dot_dimension_numbers<[1], [0], [0], [1], [0, 0, 1, 1], [], []>} : vector<8x48xbf16>, vector<48x2048xbf16>, vector<8x2048xf32> -> vector<8x2048xf32>
    %cst_3 = arith.constant 0.000000e+00 : f32
    %3 = vector.broadcast %cst_3 : f32 to vector<8x2048xf32>
    %4 = arith.cmpf oge, %2, %3 : vector<8x2048xf32>
    %cst_4 = arith.constant 2.000000e-01 : f32
    %5 = vector.broadcast %cst_4 : f32 to vector<8x2048xf32>
    %6 = arith.mulf %5, %2 : vector<8x2048xf32>
    %7 = arith.select %4, %2, %6 : vector<8x2048xi1>, vector<8x2048xf32>
    %8 = arith.truncf %7 : vector<8x2048xf32> to vector<8x2048xbf16>
    %c0_5 = arith.constant 0 : index
    %c0_6 = arith.constant 0 : index
    %9 = vector.load %arg3[%c0_5, %c0_6] : memref<8x2048xbf16, #tpu.memory_space<vmem>>, vector<8x2048xbf16>
    tpu.vector_store %arg3[%c0_5, %c0_6], %8 {strides = array<i32>} : memref<8x2048xbf16, #tpu.memory_space<vmem>>, vector<8x2048xbf16>,
    return
  }
  func.func @transform_0(%arg0: i32) -> (i32, i32) {
    %c0_i32 = arith.constant 0 : i32
    %c0_i32_0 = arith.constant 0 : i32
    %c0_i32_1 = arith.constant 0 : i32
    return %c0_i32, %c0_i32_0 : i32, i32
  }
  func.func @transform_1(%arg0: i32) -> (i32, i32) {
    %c0_i32 = arith.constant 0 : i32
    %c0_i32_0 = arith.constant 0 : i32
    return %c0_i32, %arg0 : i32, i32
  }
  func.func @transform_2(%arg0: i32) -> (i32, i32) {
    %c0_i32 = arith.constant 0 : i32
    %c0_i32_0 = arith.constant 0 : i32
    return %c0_i32, %arg0 : i32, i32
  }
}

module attributes {stable_mosaic.version = 11 : i64} {
  func.func @_conv_stats_kernel(%arg0: i32, %arg1: memref<16x128xbf16, #tpu.memory_space<vmem>>, %arg2: memref<128x512xbf16, #tpu.memory_space<vmem>>, %arg3: memref<16x512xbf16, #tpu.memory_space<vmem>>, %arg4: memref<1x16x1xf32, #tpu.memory_space<vmem>>, %arg5: memref<1x16x1xf32, #tpu.memory_space<vmem>>) attributes {dimension_semantics = [#tpu.dimension_semantics<parallel>], iteration_bounds = array<i64: 1>, scalar_prefetch = 0 : i64, scratch_operands = 0 : i64, tpu.core_type = #tpu.core_type<tc>, window_params = [{pipeline_mode = #tpu.pipeline_mode<synchronous>, transform_indices = @transform_0, window_bounds = array<i64: 16, 128>}, {transform_indices = @transform_1, window_bounds = array<i64: 128, 512>}, {transform_indices = @transform_2, window_bounds = array<i64: 16, 512>}, {transform_indices = @transform_3, window_bounds = array<i64: 1, 16, 1>}, {transform_indices = @transform_4, window_bounds = array<i64: 1, 16, 1>}]} {
    %c0 = arith.constant 0 : index
    %c0_0 = arith.constant 0 : index
    %0 = vector.load %arg1[%c0, %c0_0] : memref<16x128xbf16, #tpu.memory_space<vmem>>, vector<16x128xbf16>
    %c0_1 = arith.constant 0 : index
    %c0_2 = arith.constant 0 : index
    %1 = vector.load %arg2[%c0_1, %c0_2] : memref<128x512xbf16, #tpu.memory_space<vmem>>, vector<128x512xbf16>
    %cst = arith.constant dense<0.000000e+00> : vector<16x512xf32>
    %2 = tpu.matmul %0, %1, %cst {dimension_numbers = #tpu.dot_dimension_numbers<[1], [0], [0], [1], [0, 0, 1, 1], [], []>} : vector<16x128xbf16>, vector<128x512xbf16>, vector<16x512xf32> -> vector<16x512xf32>
    %3 = arith.truncf %2 : vector<16x512xf32> to vector<16x512xbf16>
    %c0_3 = arith.constant 0 : index
    %c0_4 = arith.constant 0 : index
    %4 = vector.load %arg3[%c0_3, %c0_4] : memref<16x512xbf16, #tpu.memory_space<vmem>>, vector<16x512xbf16>
    tpu.vector_store %arg3[%c0_3, %c0_4], %3 {strides = array<i32>} : memref<16x512xbf16, #tpu.memory_space<vmem>>, vector<16x512xbf16>,
    %cst_5 = arith.constant dense<0.000000e+00> : vector<16xf32>
    %5 = vector.multi_reduction <add>, %2, %cst_5 [1] : vector<16x512xf32> to vector<16xf32>
    %6 = vector.shape_cast %5 : vector<16xf32> to vector<16x1xf32>
    %c0_6 = arith.constant 0 : index
    %c0_7 = arith.constant 0 : index
    %c0_8 = arith.constant 0 : index
    %7 = vector.load %arg4[%c0_6, %c0_7, %c0_8] : memref<1x16x1xf32, #tpu.memory_space<vmem>>, vector<1x16x1xf32>
    %8 = vector.shape_cast %7 : vector<1x16x1xf32> to vector<16x1xf32>
    %9 = vector.shape_cast %6 : vector<16x1xf32> to vector<1x16x1xf32>
    tpu.vector_store %arg4[%c0_6, %c0_7, %c0_8], %9 {strides = array<i32>} : memref<1x16x1xf32, #tpu.memory_space<vmem>>, vector<1x16x1xf32>,
    %10 = arith.mulf %2, %2 : vector<16x512xf32>
    %cst_9 = arith.constant dense<0.000000e+00> : vector<16xf32>
    %11 = vector.multi_reduction <add>, %10, %cst_9 [1] : vector<16x512xf32> to vector<16xf32>
    %12 = vector.shape_cast %11 : vector<16xf32> to vector<16x1xf32>
    %c0_10 = arith.constant 0 : index
    %c0_11 = arith.constant 0 : index
    %c0_12 = arith.constant 0 : index
    %13 = vector.load %arg5[%c0_10, %c0_11, %c0_12] : memref<1x16x1xf32, #tpu.memory_space<vmem>>, vector<1x16x1xf32>
    %14 = vector.shape_cast %13 : vector<1x16x1xf32> to vector<16x1xf32>
    %15 = vector.shape_cast %12 : vector<16x1xf32> to vector<1x16x1xf32>
    tpu.vector_store %arg5[%c0_10, %c0_11, %c0_12], %15 {strides = array<i32>} : memref<1x16x1xf32, #tpu.memory_space<vmem>>, vector<1x16x1xf32>,
    return
  }
  func.func @transform_0(%arg0: i32) -> (i32, i32) {
    %c0_i32 = arith.constant 0 : i32
    %c0_i32_0 = arith.constant 0 : i32
    %c0_i32_1 = arith.constant 0 : i32
    return %c0_i32, %c0_i32_0 : i32, i32
  }
  func.func @transform_1(%arg0: i32) -> (i32, i32) {
    %c0_i32 = arith.constant 0 : i32
    %c0_i32_0 = arith.constant 0 : i32
    return %c0_i32, %arg0 : i32, i32
  }
  func.func @transform_2(%arg0: i32) -> (i32, i32) {
    %c0_i32 = arith.constant 0 : i32
    %c0_i32_0 = arith.constant 0 : i32
    return %c0_i32, %arg0 : i32, i32
  }
  func.func @transform_3(%arg0: i32) -> (i32, i32, i32) {
    %c0_i32 = arith.constant 0 : i32
    %c0_i32_0 = arith.constant 0 : i32
    %c0_i32_1 = arith.constant 0 : i32
    return %arg0, %c0_i32, %c0_i32_0 : i32, i32, i32
  }
  func.func @transform_4(%arg0: i32) -> (i32, i32, i32) {
    %c0_i32 = arith.constant 0 : i32
    %c0_i32_0 = arith.constant 0 : i32
    %c0_i32_1 = arith.constant 0 : i32
    return %arg0, %c0_i32, %c0_i32_0 : i32, i32, i32
  }
}

module attributes {stable_mosaic.version = 11 : i64} {
  func.func @_affine_leaky_kernel(%arg0: i32, %arg1: memref<16x512xbf16, #tpu.memory_space<vmem>>, %arg2: memref<16x1xf32, #tpu.memory_space<vmem>>, %arg3: memref<16x1xf32, #tpu.memory_space<vmem>>, %arg4: memref<16x512xbf16, #tpu.memory_space<vmem>>) attributes {dimension_semantics = [#tpu.dimension_semantics<parallel>], iteration_bounds = array<i64: 1>, scalar_prefetch = 0 : i64, scratch_operands = 0 : i64, tpu.core_type = #tpu.core_type<tc>, window_params = [{transform_indices = @transform_0, window_bounds = array<i64: 16, 512>}, {pipeline_mode = #tpu.pipeline_mode<synchronous>, transform_indices = @transform_1, window_bounds = array<i64: 16, 1>}, {pipeline_mode = #tpu.pipeline_mode<synchronous>, transform_indices = @transform_2, window_bounds = array<i64: 16, 1>}, {transform_indices = @transform_3, window_bounds = array<i64: 16, 512>}]} {
    %c0 = arith.constant 0 : index
    %c0_0 = arith.constant 0 : index
    %0 = vector.load %arg1[%c0, %c0_0] : memref<16x512xbf16, #tpu.memory_space<vmem>>, vector<16x512xbf16>
    %1 = arith.extf %0 : vector<16x512xbf16> to vector<16x512xf32>
    %c0_1 = arith.constant 0 : index
    %c0_2 = arith.constant 0 : index
    %2 = vector.load %arg2[%c0_1, %c0_2] : memref<16x1xf32, #tpu.memory_space<vmem>>, vector<16x1xf32>
    %3 = vector.broadcast %2 : vector<16x1xf32> to vector<16x512xf32>
    %4 = arith.mulf %1, %3 : vector<16x512xf32>
    %c0_3 = arith.constant 0 : index
    %c0_4 = arith.constant 0 : index
    %5 = vector.load %arg3[%c0_3, %c0_4] : memref<16x1xf32, #tpu.memory_space<vmem>>, vector<16x1xf32>
    %6 = vector.broadcast %5 : vector<16x1xf32> to vector<16x512xf32>
    %7 = arith.addf %4, %6 : vector<16x512xf32>
    %cst = arith.constant 0.000000e+00 : f32
    %8 = vector.broadcast %cst : f32 to vector<16x512xf32>
    %9 = arith.cmpf oge, %7, %8 : vector<16x512xf32>
    %cst_5 = arith.constant 2.000000e-01 : f32
    %10 = vector.broadcast %cst_5 : f32 to vector<16x512xf32>
    %11 = arith.mulf %10, %7 : vector<16x512xf32>
    %12 = arith.select %9, %7, %11 : vector<16x512xi1>, vector<16x512xf32>
    %13 = arith.truncf %12 : vector<16x512xf32> to vector<16x512xbf16>
    %c0_6 = arith.constant 0 : index
    %c0_7 = arith.constant 0 : index
    %14 = vector.load %arg4[%c0_6, %c0_7] : memref<16x512xbf16, #tpu.memory_space<vmem>>, vector<16x512xbf16>
    tpu.vector_store %arg4[%c0_6, %c0_7], %13 {strides = array<i32>} : memref<16x512xbf16, #tpu.memory_space<vmem>>, vector<16x512xbf16>,
    return
  }
  func.func @transform_0(%arg0: i32) -> (i32, i32) {
    %c0_i32 = arith.constant 0 : i32
    %c0_i32_0 = arith.constant 0 : i32
    return %c0_i32, %arg0 : i32, i32
  }
  func.func @transform_1(%arg0: i32) -> (i32, i32) {
    %c0_i32 = arith.constant 0 : i32
    %c0_i32_0 = arith.constant 0 : i32
    %c0_i32_1 = arith.constant 0 : i32
    return %c0_i32, %c0_i32_0 : i32, i32
  }
  func.func @transform_2(%arg0: i32) -> (i32, i32) {
    %c0_i32 = arith.constant 0 : i32
    %c0_i32_0 = arith.constant 0 : i32
    %c0_i32_1 = arith.constant 0 : i32
    return %c0_i32, %c0_i32_0 : i32, i32
  }
  func.func @transform_3(%arg0: i32) -> (i32, i32) {
    %c0_i32 = arith.constant 0 : i32
    %c0_i32_0 = arith.constant 0 : i32
    return %c0_i32, %arg0 : i32, i32
  }
}

module attributes {stable_mosaic.version = 11 : i64} {
  func.func @_conv_stats_kernel(%arg0: i32, %arg1: memref<32x256xbf16, #tpu.memory_space<vmem>>, %arg2: memref<256x128xbf16, #tpu.memory_space<vmem>>, %arg3: memref<32x128xbf16, #tpu.memory_space<vmem>>, %arg4: memref<1x32x1xf32, #tpu.memory_space<vmem>>, %arg5: memref<1x32x1xf32, #tpu.memory_space<vmem>>) attributes {dimension_semantics = [#tpu.dimension_semantics<parallel>], iteration_bounds = array<i64: 1>, scalar_prefetch = 0 : i64, scratch_operands = 0 : i64, tpu.core_type = #tpu.core_type<tc>, window_params = [{pipeline_mode = #tpu.pipeline_mode<synchronous>, transform_indices = @transform_0, window_bounds = array<i64: 32, 256>}, {transform_indices = @transform_1, window_bounds = array<i64: 256, 128>}, {transform_indices = @transform_2, window_bounds = array<i64: 32, 128>}, {transform_indices = @transform_3, window_bounds = array<i64: 1, 32, 1>}, {transform_indices = @transform_4, window_bounds = array<i64: 1, 32, 1>}]} {
    %c0 = arith.constant 0 : index
    %c0_0 = arith.constant 0 : index
    %0 = vector.load %arg1[%c0, %c0_0] : memref<32x256xbf16, #tpu.memory_space<vmem>>, vector<32x256xbf16>
    %c0_1 = arith.constant 0 : index
    %c0_2 = arith.constant 0 : index
    %1 = vector.load %arg2[%c0_1, %c0_2] : memref<256x128xbf16, #tpu.memory_space<vmem>>, vector<256x128xbf16>
    %cst = arith.constant dense<0.000000e+00> : vector<32x128xf32>
    %2 = tpu.matmul %0, %1, %cst {dimension_numbers = #tpu.dot_dimension_numbers<[1], [0], [0], [1], [0, 0, 1, 1], [], []>} : vector<32x256xbf16>, vector<256x128xbf16>, vector<32x128xf32> -> vector<32x128xf32>
    %3 = arith.truncf %2 : vector<32x128xf32> to vector<32x128xbf16>
    %c0_3 = arith.constant 0 : index
    %c0_4 = arith.constant 0 : index
    %4 = vector.load %arg3[%c0_3, %c0_4] : memref<32x128xbf16, #tpu.memory_space<vmem>>, vector<32x128xbf16>
    tpu.vector_store %arg3[%c0_3, %c0_4], %3 {strides = array<i32>} : memref<32x128xbf16, #tpu.memory_space<vmem>>, vector<32x128xbf16>,
    %cst_5 = arith.constant dense<0.000000e+00> : vector<32xf32>
    %5 = vector.multi_reduction <add>, %2, %cst_5 [1] : vector<32x128xf32> to vector<32xf32>
    %6 = vector.shape_cast %5 : vector<32xf32> to vector<32x1xf32>
    %c0_6 = arith.constant 0 : index
    %c0_7 = arith.constant 0 : index
    %c0_8 = arith.constant 0 : index
    %7 = vector.load %arg4[%c0_6, %c0_7, %c0_8] : memref<1x32x1xf32, #tpu.memory_space<vmem>>, vector<1x32x1xf32>
    %8 = vector.shape_cast %7 : vector<1x32x1xf32> to vector<32x1xf32>
    %9 = vector.shape_cast %6 : vector<32x1xf32> to vector<1x32x1xf32>
    tpu.vector_store %arg4[%c0_6, %c0_7, %c0_8], %9 {strides = array<i32>} : memref<1x32x1xf32, #tpu.memory_space<vmem>>, vector<1x32x1xf32>,
    %10 = arith.mulf %2, %2 : vector<32x128xf32>
    %cst_9 = arith.constant dense<0.000000e+00> : vector<32xf32>
    %11 = vector.multi_reduction <add>, %10, %cst_9 [1] : vector<32x128xf32> to vector<32xf32>
    %12 = vector.shape_cast %11 : vector<32xf32> to vector<32x1xf32>
    %c0_10 = arith.constant 0 : index
    %c0_11 = arith.constant 0 : index
    %c0_12 = arith.constant 0 : index
    %13 = vector.load %arg5[%c0_10, %c0_11, %c0_12] : memref<1x32x1xf32, #tpu.memory_space<vmem>>, vector<1x32x1xf32>
    %14 = vector.shape_cast %13 : vector<1x32x1xf32> to vector<32x1xf32>
    %15 = vector.shape_cast %12 : vector<32x1xf32> to vector<1x32x1xf32>
    tpu.vector_store %arg5[%c0_10, %c0_11, %c0_12], %15 {strides = array<i32>} : memref<1x32x1xf32, #tpu.memory_space<vmem>>, vector<1x32x1xf32>,
    return
  }
  func.func @transform_0(%arg0: i32) -> (i32, i32) {
    %c0_i32 = arith.constant 0 : i32
    %c0_i32_0 = arith.constant 0 : i32
    %c0_i32_1 = arith.constant 0 : i32
    return %c0_i32, %c0_i32_0 : i32, i32
  }
  func.func @transform_1(%arg0: i32) -> (i32, i32) {
    %c0_i32 = arith.constant 0 : i32
    %c0_i32_0 = arith.constant 0 : i32
    return %c0_i32, %arg0 : i32, i32
  }
  func.func @transform_2(%arg0: i32) -> (i32, i32) {
    %c0_i32 = arith.constant 0 : i32
    %c0_i32_0 = arith.constant 0 : i32
    return %c0_i32, %arg0 : i32, i32
  }
  func.func @transform_3(%arg0: i32) -> (i32, i32, i32) {
    %c0_i32 = arith.constant 0 : i32
    %c0_i32_0 = arith.constant 0 : i32
    %c0_i32_1 = arith.constant 0 : i32
    return %arg0, %c0_i32, %c0_i32_0 : i32, i32, i32
  }
  func.func @transform_4(%arg0: i32) -> (i32, i32, i32) {
    %c0_i32 = arith.constant 0 : i32
    %c0_i32_0 = arith.constant 0 : i32
    %c0_i32_1 = arith.constant 0 : i32
    return %arg0, %c0_i32, %c0_i32_0 : i32, i32, i32
  }
}

module attributes {stable_mosaic.version = 11 : i64} {
  func.func @_affine_leaky_kernel(%arg0: i32, %arg1: memref<32x128xbf16, #tpu.memory_space<vmem>>, %arg2: memref<32x1xf32, #tpu.memory_space<vmem>>, %arg3: memref<32x1xf32, #tpu.memory_space<vmem>>, %arg4: memref<32x128xbf16, #tpu.memory_space<vmem>>) attributes {dimension_semantics = [#tpu.dimension_semantics<parallel>], iteration_bounds = array<i64: 1>, scalar_prefetch = 0 : i64, scratch_operands = 0 : i64, tpu.core_type = #tpu.core_type<tc>, window_params = [{transform_indices = @transform_0, window_bounds = array<i64: 32, 128>}, {pipeline_mode = #tpu.pipeline_mode<synchronous>, transform_indices = @transform_1, window_bounds = array<i64: 32, 1>}, {pipeline_mode = #tpu.pipeline_mode<synchronous>, transform_indices = @transform_2, window_bounds = array<i64: 32, 1>}, {transform_indices = @transform_3, window_bounds = array<i64: 32, 128>}]} {
    %c0 = arith.constant 0 : index
    %c0_0 = arith.constant 0 : index
    %0 = vector.load %arg1[%c0, %c0_0] : memref<32x128xbf16, #tpu.memory_space<vmem>>, vector<32x128xbf16>
    %1 = arith.extf %0 : vector<32x128xbf16> to vector<32x128xf32>
    %c0_1 = arith.constant 0 : index
    %c0_2 = arith.constant 0 : index
    %2 = vector.load %arg2[%c0_1, %c0_2] : memref<32x1xf32, #tpu.memory_space<vmem>>, vector<32x1xf32>
    %3 = vector.broadcast %2 : vector<32x1xf32> to vector<32x128xf32>
    %4 = arith.mulf %1, %3 : vector<32x128xf32>
    %c0_3 = arith.constant 0 : index
    %c0_4 = arith.constant 0 : index
    %5 = vector.load %arg3[%c0_3, %c0_4] : memref<32x1xf32, #tpu.memory_space<vmem>>, vector<32x1xf32>
    %6 = vector.broadcast %5 : vector<32x1xf32> to vector<32x128xf32>
    %7 = arith.addf %4, %6 : vector<32x128xf32>
    %cst = arith.constant 0.000000e+00 : f32
    %8 = vector.broadcast %cst : f32 to vector<32x128xf32>
    %9 = arith.cmpf oge, %7, %8 : vector<32x128xf32>
    %cst_5 = arith.constant 2.000000e-01 : f32
    %10 = vector.broadcast %cst_5 : f32 to vector<32x128xf32>
    %11 = arith.mulf %10, %7 : vector<32x128xf32>
    %12 = arith.select %9, %7, %11 : vector<32x128xi1>, vector<32x128xf32>
    %13 = arith.truncf %12 : vector<32x128xf32> to vector<32x128xbf16>
    %c0_6 = arith.constant 0 : index
    %c0_7 = arith.constant 0 : index
    %14 = vector.load %arg4[%c0_6, %c0_7] : memref<32x128xbf16, #tpu.memory_space<vmem>>, vector<32x128xbf16>
    tpu.vector_store %arg4[%c0_6, %c0_7], %13 {strides = array<i32>} : memref<32x128xbf16, #tpu.memory_space<vmem>>, vector<32x128xbf16>,
    return
  }
  func.func @transform_0(%arg0: i32) -> (i32, i32) {
    %c0_i32 = arith.constant 0 : i32
    %c0_i32_0 = arith.constant 0 : i32
    return %c0_i32, %arg0 : i32, i32
  }
  func.func @transform_1(%arg0: i32) -> (i32, i32) {
    %c0_i32 = arith.constant 0 : i32
    %c0_i32_0 = arith.constant 0 : i32
    %c0_i32_1 = arith.constant 0 : i32
    return %c0_i32, %c0_i32_0 : i32, i32
  }
  func.func @transform_2(%arg0: i32) -> (i32, i32) {
    %c0_i32 = arith.constant 0 : i32
    %c0_i32_0 = arith.constant 0 : i32
    %c0_i32_1 = arith.constant 0 : i32
    return %c0_i32, %c0_i32_0 : i32, i32
  }
  func.func @transform_3(%arg0: i32) -> (i32, i32) {
    %c0_i32 = arith.constant 0 : i32
    %c0_i32_0 = arith.constant 0 : i32
    return %c0_i32, %arg0 : i32, i32
  }
}

module attributes {stable_mosaic.version = 11 : i64} {
  func.func @_conv_stats_kernel(%arg0: i32, %arg1: memref<64x512xbf16, #tpu.memory_space<vmem>>, %arg2: memref<512x32xbf16, #tpu.memory_space<vmem>>, %arg3: memref<64x32xbf16, #tpu.memory_space<vmem>>, %arg4: memref<1x64x1xf32, #tpu.memory_space<vmem>>, %arg5: memref<1x64x1xf32, #tpu.memory_space<vmem>>) attributes {dimension_semantics = [#tpu.dimension_semantics<parallel>], iteration_bounds = array<i64: 1>, scalar_prefetch = 0 : i64, scratch_operands = 0 : i64, tpu.core_type = #tpu.core_type<tc>, window_params = [{pipeline_mode = #tpu.pipeline_mode<synchronous>, transform_indices = @transform_0, window_bounds = array<i64: 64, 512>}, {transform_indices = @transform_1, window_bounds = array<i64: 512, 32>}, {transform_indices = @transform_2, window_bounds = array<i64: 64, 32>}, {transform_indices = @transform_3, window_bounds = array<i64: 1, 64, 1>}, {transform_indices = @transform_4, window_bounds = array<i64: 1, 64, 1>}]} {
    %c0 = arith.constant 0 : index
    %c0_0 = arith.constant 0 : index
    %0 = vector.load %arg1[%c0, %c0_0] : memref<64x512xbf16, #tpu.memory_space<vmem>>, vector<64x512xbf16>
    %c0_1 = arith.constant 0 : index
    %c0_2 = arith.constant 0 : index
    %1 = vector.load %arg2[%c0_1, %c0_2] : memref<512x32xbf16, #tpu.memory_space<vmem>>, vector<512x32xbf16>
    %cst = arith.constant dense<0.000000e+00> : vector<64x32xf32>
    %2 = tpu.matmul %0, %1, %cst {dimension_numbers = #tpu.dot_dimension_numbers<[1], [0], [0], [1], [0, 0, 1, 1], [], []>} : vector<64x512xbf16>, vector<512x32xbf16>, vector<64x32xf32> -> vector<64x32xf32>
    %3 = arith.truncf %2 : vector<64x32xf32> to vector<64x32xbf16>
    %c0_3 = arith.constant 0 : index
    %c0_4 = arith.constant 0 : index
    %4 = vector.load %arg3[%c0_3, %c0_4] : memref<64x32xbf16, #tpu.memory_space<vmem>>, vector<64x32xbf16>
    tpu.vector_store %arg3[%c0_3, %c0_4], %3 {strides = array<i32>} : memref<64x32xbf16, #tpu.memory_space<vmem>>, vector<64x32xbf16>,
    %cst_5 = arith.constant dense<0.000000e+00> : vector<64xf32>
    %5 = vector.multi_reduction <add>, %2, %cst_5 [1] : vector<64x32xf32> to vector<64xf32>
    %6 = vector.shape_cast %5 : vector<64xf32> to vector<64x1xf32>
    %c0_6 = arith.constant 0 : index
    %c0_7 = arith.constant 0 : index
    %c0_8 = arith.constant 0 : index
    %7 = vector.load %arg4[%c0_6, %c0_7, %c0_8] : memref<1x64x1xf32, #tpu.memory_space<vmem>>, vector<1x64x1xf32>
    %8 = vector.shape_cast %7 : vector<1x64x1xf32> to vector<64x1xf32>
    %9 = vector.shape_cast %6 : vector<64x1xf32> to vector<1x64x1xf32>
    tpu.vector_store %arg4[%c0_6, %c0_7, %c0_8], %9 {strides = array<i32>} : memref<1x64x1xf32, #tpu.memory_space<vmem>>, vector<1x64x1xf32>,
    %10 = arith.mulf %2, %2 : vector<64x32xf32>
    %cst_9 = arith.constant dense<0.000000e+00> : vector<64xf32>
    %11 = vector.multi_reduction <add>, %10, %cst_9 [1] : vector<64x32xf32> to vector<64xf32>
    %12 = vector.shape_cast %11 : vector<64xf32> to vector<64x1xf32>
    %c0_10 = arith.constant 0 : index
    %c0_11 = arith.constant 0 : index
    %c0_12 = arith.constant 0 : index
    %13 = vector.load %arg5[%c0_10, %c0_11, %c0_12] : memref<1x64x1xf32, #tpu.memory_space<vmem>>, vector<1x64x1xf32>
    %14 = vector.shape_cast %13 : vector<1x64x1xf32> to vector<64x1xf32>
    %15 = vector.shape_cast %12 : vector<64x1xf32> to vector<1x64x1xf32>
    tpu.vector_store %arg5[%c0_10, %c0_11, %c0_12], %15 {strides = array<i32>} : memref<1x64x1xf32, #tpu.memory_space<vmem>>, vector<1x64x1xf32>,
    return
  }
  func.func @transform_0(%arg0: i32) -> (i32, i32) {
    %c0_i32 = arith.constant 0 : i32
    %c0_i32_0 = arith.constant 0 : i32
    %c0_i32_1 = arith.constant 0 : i32
    return %c0_i32, %c0_i32_0 : i32, i32
  }
  func.func @transform_1(%arg0: i32) -> (i32, i32) {
    %c0_i32 = arith.constant 0 : i32
    %c0_i32_0 = arith.constant 0 : i32
    return %c0_i32, %arg0 : i32, i32
  }
  func.func @transform_2(%arg0: i32) -> (i32, i32) {
    %c0_i32 = arith.constant 0 : i32
    %c0_i32_0 = arith.constant 0 : i32
    return %c0_i32, %arg0 : i32, i32
  }
  func.func @transform_3(%arg0: i32) -> (i32, i32, i32) {
    %c0_i32 = arith.constant 0 : i32
    %c0_i32_0 = arith.constant 0 : i32
    %c0_i32_1 = arith.constant 0 : i32
    return %arg0, %c0_i32, %c0_i32_0 : i32, i32, i32
  }
  func.func @transform_4(%arg0: i32) -> (i32, i32, i32) {
    %c0_i32 = arith.constant 0 : i32
    %c0_i32_0 = arith.constant 0 : i32
    %c0_i32_1 = arith.constant 0 : i32
    return %arg0, %c0_i32, %c0_i32_0 : i32, i32, i32
  }
}

module attributes {stable_mosaic.version = 11 : i64} {
  func.func @_affine_leaky_kernel(%arg0: i32, %arg1: memref<64x32xbf16, #tpu.memory_space<vmem>>, %arg2: memref<64x1xf32, #tpu.memory_space<vmem>>, %arg3: memref<64x1xf32, #tpu.memory_space<vmem>>, %arg4: memref<64x32xbf16, #tpu.memory_space<vmem>>) attributes {dimension_semantics = [#tpu.dimension_semantics<parallel>], iteration_bounds = array<i64: 1>, scalar_prefetch = 0 : i64, scratch_operands = 0 : i64, tpu.core_type = #tpu.core_type<tc>, window_params = [{transform_indices = @transform_0, window_bounds = array<i64: 64, 32>}, {pipeline_mode = #tpu.pipeline_mode<synchronous>, transform_indices = @transform_1, window_bounds = array<i64: 64, 1>}, {pipeline_mode = #tpu.pipeline_mode<synchronous>, transform_indices = @transform_2, window_bounds = array<i64: 64, 1>}, {transform_indices = @transform_3, window_bounds = array<i64: 64, 32>}]} {
    %c0 = arith.constant 0 : index
    %c0_0 = arith.constant 0 : index
    %0 = vector.load %arg1[%c0, %c0_0] : memref<64x32xbf16, #tpu.memory_space<vmem>>, vector<64x32xbf16>
    %1 = arith.extf %0 : vector<64x32xbf16> to vector<64x32xf32>
    %c0_1 = arith.constant 0 : index
    %c0_2 = arith.constant 0 : index
    %2 = vector.load %arg2[%c0_1, %c0_2] : memref<64x1xf32, #tpu.memory_space<vmem>>, vector<64x1xf32>
    %3 = vector.broadcast %2 : vector<64x1xf32> to vector<64x32xf32>
    %4 = arith.mulf %1, %3 : vector<64x32xf32>
    %c0_3 = arith.constant 0 : index
    %c0_4 = arith.constant 0 : index
    %5 = vector.load %arg3[%c0_3, %c0_4] : memref<64x1xf32, #tpu.memory_space<vmem>>, vector<64x1xf32>
    %6 = vector.broadcast %5 : vector<64x1xf32> to vector<64x32xf32>
    %7 = arith.addf %4, %6 : vector<64x32xf32>
    %cst = arith.constant 0.000000e+00 : f32
    %8 = vector.broadcast %cst : f32 to vector<64x32xf32>
    %9 = arith.cmpf oge, %7, %8 : vector<64x32xf32>
    %cst_5 = arith.constant 2.000000e-01 : f32
    %10 = vector.broadcast %cst_5 : f32 to vector<64x32xf32>
    %11 = arith.mulf %10, %7 : vector<64x32xf32>
    %12 = arith.select %9, %7, %11 : vector<64x32xi1>, vector<64x32xf32>
    %13 = arith.truncf %12 : vector<64x32xf32> to vector<64x32xbf16>
    %c0_6 = arith.constant 0 : index
    %c0_7 = arith.constant 0 : index
    %14 = vector.load %arg4[%c0_6, %c0_7] : memref<64x32xbf16, #tpu.memory_space<vmem>>, vector<64x32xbf16>
    tpu.vector_store %arg4[%c0_6, %c0_7], %13 {strides = array<i32>} : memref<64x32xbf16, #tpu.memory_space<vmem>>, vector<64x32xbf16>,
    return
  }
  func.func @transform_0(%arg0: i32) -> (i32, i32) {
    %c0_i32 = arith.constant 0 : i32
    %c0_i32_0 = arith.constant 0 : i32
    return %c0_i32, %arg0 : i32, i32
  }
  func.func @transform_1(%arg0: i32) -> (i32, i32) {
    %c0_i32 = arith.constant 0 : i32
    %c0_i32_0 = arith.constant 0 : i32
    %c0_i32_1 = arith.constant 0 : i32
    return %c0_i32, %c0_i32_0 : i32, i32
  }
  func.func @transform_2(%arg0: i32) -> (i32, i32) {
    %c0_i32 = arith.constant 0 : i32
    %c0_i32_0 = arith.constant 0 : i32
    %c0_i32_1 = arith.constant 0 : i32
    return %c0_i32, %c0_i32_0 : i32, i32
  }
  func.func @transform_3(%arg0: i32) -> (i32, i32) {
    %c0_i32 = arith.constant 0 : i32
    %c0_i32_0 = arith.constant 0 : i32
    return %c0_i32, %arg0 : i32, i32
  }
}

module attributes {stable_mosaic.version = 11 : i64} {
  func.func @_head_kernel(%arg0: i32, %arg1: memref<1024x1xbf16, #tpu.memory_space<vmem>>, %arg2: memref<1024x2xbf16, #tpu.memory_space<vmem>>, %arg3: memref<1x2xf32, #tpu.memory_space<vmem>>) attributes {dimension_semantics = [#tpu.dimension_semantics<parallel>], iteration_bounds = array<i64: 1>, scalar_prefetch = 0 : i64, scratch_operands = 0 : i64, tpu.core_type = #tpu.core_type<tc>, window_params = [{pipeline_mode = #tpu.pipeline_mode<synchronous>, transform_indices = @transform_0, window_bounds = array<i64: 1024, 1>}, {transform_indices = @transform_1, window_bounds = array<i64: 1024, 2>}, {transform_indices = @transform_2, window_bounds = array<i64: 1, 2>}]} {
    %c0 = arith.constant 0 : index
    %c0_0 = arith.constant 0 : index
    %0 = vector.load %arg1[%c0, %c0_0] : memref<1024x1xbf16, #tpu.memory_space<vmem>>, vector<1024x1xbf16>
    %c0_1 = arith.constant 0 : index
    %c0_2 = arith.constant 0 : index
    %1 = vector.load %arg2[%c0_1, %c0_2] : memref<1024x2xbf16, #tpu.memory_space<vmem>>, vector<1024x2xbf16>
    %cst = arith.constant dense<0.000000e+00> : vector<1x2xf32>
    %2 = tpu.matmul %0, %1, %cst {dimension_numbers = #tpu.dot_dimension_numbers<[0], [0], [1], [1], [0, 1, 1, 1], [], []>} : vector<1024x1xbf16>, vector<1024x2xbf16>, vector<1x2xf32> -> vector<1x2xf32>
    %cst_3 = arith.constant 5.000000e-01 : f32
    %3 = vector.broadcast %cst_3 : f32 to vector<1x2xf32>
    %4 = arith.mulf %3, %2 : vector<1x2xf32>
    %5 = math.tanh %4 : vector<1x2xf32>
    %cst_4 = arith.constant 1.000000e+00 : f32
    %6 = vector.broadcast %cst_4 : f32 to vector<1x2xf32>
    %7 = arith.addf %5, %6 : vector<1x2xf32>
    %cst_5 = arith.constant 5.000000e-01 : f32
    %8 = vector.broadcast %cst_5 : f32 to vector<1x2xf32>
    %9 = arith.mulf %8, %7 : vector<1x2xf32>
    %c0_6 = arith.constant 0 : index
    %c0_7 = arith.constant 0 : index
    %10 = vector.load %arg3[%c0_6, %c0_7] : memref<1x2xf32, #tpu.memory_space<vmem>>, vector<1x2xf32>
    tpu.vector_store %arg3[%c0_6, %c0_7], %9 {strides = array<i32>} : memref<1x2xf32, #tpu.memory_space<vmem>>, vector<1x2xf32>,
    return
  }
  func.func @transform_0(%arg0: i32) -> (i32, i32) {
    %c0_i32 = arith.constant 0 : i32
    %c0_i32_0 = arith.constant 0 : i32
    %c0_i32_1 = arith.constant 0 : i32
    return %c0_i32, %c0_i32_0 : i32, i32
  }
  func.func @transform_1(%arg0: i32) -> (i32, i32) {
    %c0_i32 = arith.constant 0 : i32
    %c0_i32_0 = arith.constant 0 : i32
    return %c0_i32, %arg0 : i32, i32
  }
  func.func @transform_2(%arg0: i32) -> (i32, i32) {
    %c0_i32 = arith.constant 0 : i32
    %c0_i32_0 = arith.constant 0 : i32
    return %c0_i32, %arg0 : i32, i32
  }
}

</mosaic_0001>

<llo_original>
// kernel: discriminator_forward.8
$region0: #{discriminator_forward.8}
  #allocation0 [shape = 'u32[]', space=smem, size = 0x4, offset = 0x4, fixed_abs, tag = 'smem constant byte address 0x4 - core index']
  #allocation1 [shape = 'u32[144,128]{1,0:T(1,128)}', space=vmem, size = 0x12000, scoped, tag = 'internal scratch']
  %s0 = inlined_call_operand.vmem [shape: bf16[8,48], index: 0, kind: input, shape index: {}]
  %s1 = inlined_call_operand.vmem [shape: bf16[48,2048], index: 1, kind: input, shape index: {}]
  %s2 = inlined_call_operand.vmem [shape: bf16[8,2048], index: 2, kind: output, shape index: {}]
  %s3 = sld [smem:[#allocation0]]
  $region18: #{discriminator_forward.8} parent=0
    _
  %s5 = ssub.s32 1, %s3
  %s6 = scalar_select 0, %s5, %s3
  // Predicated region
  $region2: #{discriminator_forward.8} parent=0 // pred_check
    _
  $region3: #{discriminator_forward.8} parent=0 // pred_check_branch
    %8 = sbr.rel (0) target = $region5
  $region4: #{discriminator_forward.8} parent=0 // pred_region
    _
  $region5: #{discriminator_forward.8} parent=0 // pred_fallthru
    _
  // Predicated region
  $region6: #{discriminator_forward.8} parent=0 // pred_check
    _
  $region7: #{discriminator_forward.8} parent=0 // pred_check_branch
    %10 = sbr.rel (0) target = $region9
  $region8: #{discriminator_forward.8} parent=0 // pred_region
    _
  $region9: #{discriminator_forward.8} parent=0 // pred_fallthru
    _
  %v12 = vld [vmem:[%s0] sm:$0xf]
  %v13 = vld [vmem:[%s1] sm:$0xff]
  %v14 = vld [vmem:[%s1 + $0x8] sm:$0xff]
  %v15 = vld [vmem:[%s1 + $0x10] sm:$0xff]
  %v16 = vld [vmem:[%s1 + $0x18] sm:$0xff]
  %v17 = vld [vmem:[%s1 + $0x20] sm:$0xff]
  %v18 = vld [vmem:[%s1 + $0x28] sm:$0xff]
  %v19 = vld [vmem:[%s1 + $0x30] sm:$0xff]
  %v20 = vld [vmem:[%s1 + $0x38] sm:$0xff]
  %v21 = vld [vmem:[%s1 + $0x40] sm:$0xff]
  %v22 = vld [vmem:[%s1 + $0x48] sm:$0xff]
  %v23 = vld [vmem:[%s1 + $0x50] sm:$0xff]
  %v24 = vld [vmem:[%s1 + $0x58] sm:$0xff]
  %v25 = vld [vmem:[%s1 + $0x60] sm:$0xff]
  %v26 = vld [vmem:[%s1 + $0x68] sm:$0xff]
  %v27 = vld [vmem:[%s1 + $0x70] sm:$0xff]
  %v28 = vld [vmem:[%s1 + $0x78] sm:$0xff]
  %v29 = vld [vmem:[%s1 + $0x80] sm:$0xff]
  %v30 = vld [vmem:[%s1 + $0x88] sm:$0xff]
  %v31 = vld [vmem:[%s1 + $0x90] sm:$0xff]
  %v32 = vld [vmem:[%s1 + $0x98] sm:$0xff]
  %v33 = vld [vmem:[%s1 + $0xa0] sm:$0xff]
  %v34 = vld [vmem:[%s1 + $0xa8] sm:$0xff]
  %v35 = vld [vmem:[%s1 + $0xb0] sm:$0xff]
  %v36 = vld [vmem:[%s1 + $0xb8] sm:$0xff]
  %v37 = vld [vmem:[%s1 + $0xc0] sm:$0xff]
  %v38 = vld [vmem:[%s1 + $0xc8] sm:$0xff]
  %v39 = vld [vmem:[%s1 + $0xd0] sm:$0xff]
  %v40 = vld [vmem:[%s1 + $0xd8] sm:$0xff]
  %v41 = vld [vmem:[%s1 + $0xe0] sm:$0xff]
  %v42 = vld [vmem:[%s1 + $0xe8] sm:$0xff]
  %v43 = vld [vmem:[%s1 + $0xf0] sm:$0xff]
  %v44 = vld [vmem:[%s1 + $0xf8] sm:$0xff]
  %v45 = vld [vmem:[%s1 + $0x100] sm:$0xff]
  %v46 = vld [vmem:[%s1 + $0x108] sm:$0xff]
  %v47 = vld [vmem:[%s1 + $0x110] sm:$0xff]
  %v48 = vld [vmem:[%s1 + $0x118] sm:$0xff]
  %v49 = vld [vmem:[%s1 + $0x120] sm:$0xff]
  %v50 = vld [vmem:[%s1 + $0x128] sm:$0xff]
  %v51 = vld [vmem:[%s1 + $0x130] sm:$0xff]
  %v52 = vld [vmem:[%s1 + $0x138] sm:$0xff]
  %v53 = vld [vmem:[%s1 + $0x140] sm:$0xff]
  %v54 = vld [vmem:[%s1 + $0x148] sm:$0xff]
  %v55 = vld [vmem:[%s1 + $0x150] sm:$0xff]
  %v56 = vld [vmem:[%s1 + $0x158] sm:$0xff]
  %v57 = vld [vmem:[%s1 + $0x160] sm:$0xff]
  %v58 = vld [vmem:[%s1 + $0x168] sm:$0xff]
  %v59 = vld [vmem:[%s1 + $0x170] sm:$0xff]
  %v60 = vld [vmem:[%s1 + $0x178] sm:$0xff]
  %v109 = vunpack.c.l.b16 %v13
  %v110 = vunpack.c.h.b16 %v13
  %v111 = vunpack.c.l.b16 %v14
  %v112 = vunpack.c.h.b16 %v14
  %v113 = vunpack.c.l.b16 %v15
  %v114 = vunpack.c.h.b16 %v15
  %v115 = vunpack.c.l.b16 %v16
  %v116 = vunpack.c.h.b16 %v16
  %v117 = vunpack.c.l.b16 %v17
  %v118 = vunpack.c.h.b16 %v17
  %v119 = vunpack.c.l.b16 %v18
  %v120 = vunpack.c.h.b16 %v18
  %v121 = vunpack.c.l.b16 %v19
  %v122 = vunpack.c.h.b16 %v19
  %v123 = vunpack.c.l.b16 %v20
  %v124 = vunpack.c.h.b16 %v20
  %v125 = vunpack.c.l.b16 %v21
  %v126 = vunpack.c.h.b16 %v21
  %v127 = vunpack.c.l.b16 %v22
  %v128 = vunpack.c.h.b16 %v22
  %v129 = vunpack.c.l.b16 %v23
  %v130 = vunpack.c.h.b16 %v23
  %v131 = vunpack.c.l.b16 %v24
  %v132 = vunpack.c.h.b16 %v24
  %v133 = vunpack.c.l.b16 %v25
  %v134 = vunpack.c.h.b16 %v25
  %v135 = vunpack.c.l.b16 %v26
  %v136 = vunpack.c.h.b16 %v26
  %v137 = vunpack.c.l.b16 %v27
  %v138 = vunpack.c.h.b16 %v27
  %v139 = vunpack.c.l.b16 %v28
  %v140 = vunpack.c.h.b16 %v28
  %v141 = vunpack.c.l.b16 %v29
  %v142 = vunpack.c.h.b16 %v29
  %v143 = vunpack.c.l.b16 %v30
  %v144 = vunpack.c.h.b16 %v30
  %v145 = vunpack.c.l.b16 %v31
  %v146 = vunpack.c.h.b16 %v31
  %v147 = vunpack.c.l.b16 %v32
  %v148 = vunpack.c.h.b16 %v32
  %v149 = vunpack.c.l.b16 %v33
  %v150 = vunpack.c.h.b16 %v33
  %v151 = vunpack.c.l.b16 %v34
  %v152 = vunpack.c.h.b16 %v34
  %v153 = vunpack.c.l.b16 %v35
  %v154 = vunpack.c.h.b16 %v35
  %v155 = vunpack.c.l.b16 %v36
  %v156 = vunpack.c.h.b16 %v36
  %v157 = vunpack.c.l.b16 %v37
  %v158 = vunpack.c.h.b16 %v37
  %v159 = vunpack.c.l.b16 %v38
  %v160 = vunpack.c.h.b16 %v38
  %v161 = vunpack.c.l.b16 %v39
  %v162 = vunpack.c.h.b16 %v39
  %v163 = vunpack.c.l.b16 %v40
  %v164 = vunpack.c.h.b16 %v40
  %v165 = vunpack.c.l.b16 %v41
  %v166 = vunpack.c.h.b16 %v41
  %v167 = vunpack.c.l.b16 %v42
  %v168 = vunpack.c.h.b16 %v42
  %v169 = vunpack.c.l.b16 %v43
  %v170 = vunpack.c.h.b16 %v43
  %v171 = vunpack.c.l.b16 %v44
  %v172 = vunpack.c.h.b16 %v44
  %v173 = vunpack.c.l.b16 %v45
  %v174 = vunpack.c.h.b16 %v45
  %v175 = vunpack.c.l.b16 %v46
  %v176 = vunpack.c.h.b16 %v46
  %v177 = vunpack.c.l.b16 %v47
  %v178 = vunpack.c.h.b16 %v47
  %v179 = vunpack.c.l.b16 %v48
  %v180 = vunpack.c.h.b16 %v48
  %v181 = vunpack.c.l.b16 %v49
  %v182 = vunpack.c.h.b16 %v49
  %v183 = vunpack.c.l.b16 %v50
  %v184 = vunpack.c.h.b16 %v50
  %v185 = vunpack.c.l.b16 %v51
  %v186 = vunpack.c.h.b16 %v51
  %v187 = vunpack.c.l.b16 %v52
  %v188 = vunpack.c.h.b16 %v52
  %v189 = vunpack.c.l.b16 %v53
  %v190 = vunpack.c.h.b16 %v53
  %v191 = vunpack.c.l.b16 %v54
  %v192 = vunpack.c.h.b16 %v54
  %v193 = vunpack.c.l.b16 %v55
  %v194 = vunpack.c.h.b16 %v55
  %v195 = vunpack.c.l.b16 %v56
  %v196 = vunpack.c.h.b16 %v56
  %v197 = vunpack.c.l.b16 %v57
  %v198 = vunpack.c.h.b16 %v57
  %v199 = vunpack.c.l.b16 %v58
  %v200 = vunpack.c.h.b16 %v58
  %v201 = vunpack.c.l.b16 %v59
  %v202 = vunpack.c.h.b16 %v59
  %v203 = vunpack.c.l.b16 %v60
  %v204 = vunpack.c.h.b16 %v60
  %v205 = vpack.c.b16 %v125, %v109
  %v206 = vpack.c.b16 %v126, %v110
  %v207 = vpack.c.b16 %v127, %v111
  %v208 = vpack.c.b16 %v128, %v112
  %v209 = vpack.c.b16 %v129, %v113
  %v210 = vpack.c.b16 %v130, %v114
  %v211 = vpack.c.b16 %v131, %v115
  %v212 = vpack.c.b16 %v132, %v116
  %v213 = vpack.c.b16 %v133, %v117
  %v214 = vpack.c.b16 %v134, %v118
  %v215 = vpack.c.b16 %v135, %v119
  %v216 = vpack.c.b16 %v136, %v120
  %v217 = vpack.c.b16 %v137, %v121
  %v218 = vpack.c.b16 %v138, %v122
  %v219 = vpack.c.b16 %v139, %v123
  %v220 = vpack.c.b16 %v140, %v124
  %v221 = vpack.c.b16 %v157, %v141
  %v222 = vpack.c.b16 %v158, %v142
  %v223 = vpack.c.b16 %v159, %v143
  %v224 = vpack.c.b16 %v160, %v144
  %v225 = vpack.c.b16 %v161, %v145
  %v226 = vpack.c.b16 %v162, %v146
  %v227 = vpack.c.b16 %v163, %v147
  %v228 = vpack.c.b16 %v164, %v148
  %v229 = vpack.c.b16 %v165, %v149
  %v230 = vpack.c.b16 %v166, %v150
  %v231 = vpack.c.b16 %v167, %v151
  %v232 = vpack.c.b16 %v168, %v152
  %v233 = vpack.c.b16 %v169, %v153
  %v234 = vpack.c.b16 %v170, %v154
  %v235 = vpack.c.b16 %v171, %v155
  %v236 = vpack.c.b16 %v172, %v156
  %v237 = vpack.c.b16 %v189, %v173
  %v238 = vpack.c.b16 %v190, %v174
  %v239 = vpack.c.b16 %v191, %v175
  %v240 = vpack.c.b16 %v192, %v176
  %v241 = vpack.c.b16 %v193, %v177
  %v242 = vpack.c.b16 %v194, %v178
  %v243 = vpack.c.b16 %v195, %v179
  %v244 = vpack.c.b16 %v196, %v180
  %v245 = vpack.c.b16 %v197, %v181
  %v246 = vpack.c.b16 %v198, %v182
  %v247 = vpack.c.b16 %v199, %v183
  %v248 = vpack.c.b16 %v200, %v184
  %v249 = vpack.c.b16 %v201, %v185
  %v250 = vpack.c.b16 %v202, %v186
  %v251 = vpack.c.b16 %v203, %v187
  %v252 = vpack.c.b16 %v204, %v188
  %vm301 = vcmask 392192
  %v303 = vsel %vm301, %v12, 0
  %305 = vmatprep.subr.bf16.mxu0 0
  %306 = vmatpush1.bf16.msra.mxu0 0
  %307 = vmatprep.subr.bf16.mxu0 0
  %308 = vmatpush1.bf16.msra.mxu0 0
  %309 = vmatprep.subr.bf16.mxu0 0
  %310 = vmatpush1.bf16.msra.mxu0 0
  %311 = vmatprep.subr.bf16.mxu0 0
  %312 = vmatpush1.bf16.msra.mxu0 0
  %313 = vmatprep.subr.bf16.mxu0 0
  %314 = vmatpush1.bf16.msra.mxu0 0
  %315 = vmatprep.subr.bf16.mxu0 %v238
  %316 = vmatpush1.bf16.msra.mxu0 %v237
  %317 = vmatprep.subr.bf16.mxu0 %v222
  %318 = vmatpush1.bf16.msra.mxu0 %v221
  %319 = vmatprep.subr.bf16.mxu0 %v206
  %320 = vmatpush1.bf16.msra.mxu0 %v205
  %321 = vmatprep.subr.bf16.mxu0 0
  %322 = vmatpush2.bf16.msra.mxu0 0
  %323 = vmatprep.subr.bf16.mxu0 0
  %324 = vmatpush2.bf16.msra.mxu0 0
  %325 = vmatprep.subr.bf16.mxu0 0
  %326 = vmatpush2.bf16.msra.mxu0 0
  %327 = vmatprep.subr.bf16.mxu0 0
  %328 = vmatpush2.bf16.msra.mxu0 0
  %329 = vmatprep.subr.bf16.mxu0 0
  %330 = vmatpush2.bf16.msra.mxu0 0
  %331 = vmatprep.subr.bf16.mxu0 0
  %332 = vmatpush2.bf16.msra.mxu0 0
  %333 = vmatprep.subr.bf16.mxu0 0
  %334 = vmatpush2.bf16.msra.mxu0 0
  %335 = vmatprep.subr.bf16.mxu0 0
  %336 = vmatpush2.bf16.msra.mxu0 0
  %337 = vmatprep.mubr.bf16.mxu0 0
  %338 = vmatmul.mubr.bf16.gmra.mxu0 %v303
  %v339 = vpop.f32.mrf.mxu0
  %v340 = vadd.f32 0.0, %v339
  %v341 = vpop.f32.mrf.mxu0
  %v342 = vadd.f32 0.0, %v341
  %v343 = vpop.f32.mrf.mxu0
  %v344 = vpop.f32.mrf.mxu0
  %345 = vdwg.mxu0
  %346 = vmatprep.subr.bf16.mxu0 0
  %347 = vmatpush1.bf16.msra.mxu0 0
  %348 = vmatprep.subr.bf16.mxu0 0
  %349 = vmatpush1.bf16.msra.mxu0 0
  %350 = vmatprep.subr.bf16.mxu0 0
  %351 = vmatpush1.bf16.msra.mxu0 0
  %352 = vmatprep.subr.bf16.mxu0 0
  %353 = vmatpush1.bf16.msra.mxu0 0
  %354 = vmatprep.subr.bf16.mxu0 0
  %355 = vmatpush1.bf16.msra.mxu0 0
  %356 = vmatprep.subr.bf16.mxu0 %v240
  %357 = vmatpush1.bf16.msra.mxu0 %v239
  %358 = vmatprep.subr.bf16.mxu0 %v224
  %359 = vmatpush1.bf16.msra.mxu0 %v223
  %360 = vmatprep.subr.bf16.mxu0 %v208
  %361 = vmatpush1.bf16.msra.mxu0 %v207
  %362 = vmatprep.subr.bf16.mxu0 0
  %363 = vmatpush2.bf16.msra.mxu0 0
  %364 = vmatprep.subr.bf16.mxu0 0
  %365 = vmatpush2.bf16.msra.mxu0 0
  %366 = vmatprep.subr.bf16.mxu0 0
  %367 = vmatpush2.bf16.msra.mxu0 0
  %368 = vmatprep.subr.bf16.mxu0 0
  %369 = vmatpush2.bf16.msra.mxu0 0
  %370 = vmatprep.subr.bf16.mxu0 0
  %371 = vmatpush2.bf16.msra.mxu0 0
  %372 = vmatprep.subr.bf16.mxu0 0
  %373 = vmatpush2.bf16.msra.mxu0 0
  %374 = vmatprep.subr.bf16.mxu0 0
  %375 = vmatpush2.bf16.msra.mxu0 0
  %376 = vmatprep.subr.bf16.mxu0 0
  %377 = vmatpush2.bf16.msra.mxu0 0
  %378 = vmatprep.mubr.bf16.mxu0 0
  %379 = vmatmul.mubr.bf16.gmra.mxu0 %v303
  %v380 = vpop.f32.mrf.mxu0
  %v381 = vadd.f32 0.0, %v380
  %v382 = vpop.f32.mrf.mxu0
  %v383 = vadd.f32 0.0, %v382
  %v384 = vpop.f32.mrf.mxu0
  %v385 = vpop.f32.mrf.mxu0
  %386 = vdwg.mxu0
  %387 = vmatprep.subr.bf16.mxu0 0
  %388 = vmatpush1.bf16.msra.mxu0 0
  %389 = vmatprep.subr.bf16.mxu0 0
  %390 = vmatpush1.bf16.msra.mxu0 0
  %391 = vmatprep.subr.bf16.mxu0 0
  %392 = vmatpush1.bf16.msra.mxu0 0
  %393 = vmatprep.subr.bf16.mxu0 0
  %394 = vmatpush1.bf16.msra.mxu0 0
  %395 = vmatprep.subr.bf16.mxu0 0
  %396 = vmatpush1.bf16.msra.mxu0 0
  %397 = vmatprep.subr.bf16.mxu0 %v242
  %398 = vmatpush1.bf16.msra.mxu0 %v241
  %399 = vmatprep.subr.bf16.mxu0 %v226
  %400 = vmatpush1.bf16.msra.mxu0 %v225
  %401 = vmatprep.subr.bf16.mxu0 %v210
  %402 = vmatpush1.bf16.msra.mxu0 %v209
  %403 = vmatprep.subr.bf16.mxu0 0
  %404 = vmatpush2.bf16.msra.mxu0 0
  %405 = vmatprep.subr.bf16.mxu0 0
  %406 = vmatpush2.bf16.msra.mxu0 0
  %407 = vmatprep.subr.bf16.mxu0 0
  %408 = vmatpush2.bf16.msra.mxu0 0
  %409 = vmatprep.subr.bf16.mxu0 0
  %410 = vmatpush2.bf16.msra.mxu0 0
  %411 = vmatprep.subr.bf16.mxu0 0
  %412 = vmatpush2.bf16.msra.mxu0 0
  %413 = vmatprep.subr.bf16.mxu0 0
  %414 = vmatpush2.bf16.msra.mxu0 0
  %415 = vmatprep.subr.bf16.mxu0 0
  %416 = vmatpush2.bf16.msra.mxu0 0
  %417 = vmatprep.subr.bf16.mxu0 0
  %418 = vmatpush2.bf16.msra.mxu0 0
  %419 = vmatprep.mubr.bf16.mxu0 0
  %420 = vmatmul.mubr.bf16.gmra.mxu0 %v303
  %v421 = vpop.f32.mrf.mxu0
  %v422 = vadd.f32 0.0, %v421
  %v423 = vpop.f32.mrf.mxu0
  %v424 = vadd.f32 0.0, %v423
  %v425 = vpop.f32.mrf.mxu0
  %v426 = vpop.f32.mrf.mxu0
  %427 = vdwg.mxu0
  %428 = vmatprep.subr.bf16.mxu0 0
  %429 = vmatpush1.bf16.msra.mxu0 0
  %430 = vmatprep.subr.bf16.mxu0 0
  %431 = vmatpush1.bf16.msra.mxu0 0
  %432 = vmatprep.subr.bf16.mxu0 0
  %433 = vmatpush1.bf16.msra.mxu0 0
  %434 = vmatprep.subr.bf16.mxu0 0
  %435 = vmatpush1.bf16.msra.mxu0 0
  %436 = vmatprep.subr.bf16.mxu0 0
  %437 = vmatpush1.bf16.msra.mxu0 0
  %438 = vmatprep.subr.bf16.mxu0 %v244
  %439 = vmatpush1.bf16.msra.mxu0 %v243
  %440 = vmatprep.subr.bf16.mxu0 %v228
  %441 = vmatpush1.bf16.msra.mxu0 %v227
  %442 = vmatprep.subr.bf16.mxu0 %v212
  %443 = vmatpush1.bf16.msra.mxu0 %v211
  %444 = vmatprep.subr.bf16.mxu0 0
  %445 = vmatpush2.bf16.msra.mxu0 0
  %446 = vmatprep.subr.bf16.mxu0 0
  %447 = vmatpush2.bf16.msra.mxu0 0
  %448 = vmatprep.subr.bf16.mxu0 0
  %449 = vmatpush2.bf16.msra.mxu0 0
  %450 = vmatprep.subr.bf16.mxu0 0
  %451 = vmatpush2.bf16.msra.mxu0 0
  %452 = vmatprep.subr.bf16.mxu0 0
  %453 = vmatpush2.bf16.msra.mxu0 0
  %454 = vmatprep.subr.bf16.mxu0 0
  %455 = vmatpush2.bf16.msra.mxu0 0
  %456 = vmatprep.subr.bf16.mxu0 0
  %457 = vmatpush2.bf16.msra.mxu0 0
  %458 = vmatprep.subr.bf16.mxu0 0
  %459 = vmatpush2.bf16.msra.mxu0 0
  %460 = vmatprep.mubr.bf16.mxu0 0
  %461 = vmatmul.mubr.bf16.gmra.mxu0 %v303
  %v462 = vpop.f32.mrf.mxu0
  %v463 = vadd.f32 0.0, %v462
  %v464 = vpop.f32.mrf.mxu0
  %v465 = vadd.f32 0.0, %v464
  %v466 = vpop.f32.mrf.mxu0
  %v467 = vpop.f32.mrf.mxu0
  %468 = vdwg.mxu0
  %469 = vmatprep.subr.bf16.mxu0 0
  %470 = vmatpush1.bf16.msra.mxu0 0
  %471 = vmatprep.subr.bf16.mxu0 0
  %472 = vmatpush1.bf16.msra.mxu0 0
  %473 = vmatprep.subr.bf16.mxu0 0
  %474 = vmatpush1.bf16.msra.mxu0 0
  %475 = vmatprep.subr.bf16.mxu0 0
  %476 = vmatpush1.bf16.msra.mxu0 0
  %477 = vmatprep.subr.bf16.mxu0 0
  %478 = vmatpush1.bf16.msra.mxu0 0
  %479 = vmatprep.subr.bf16.mxu0 %v246
  %480 = vmatpush1.bf16.msra.mxu0 %v245
  %481 = vmatprep.subr.bf16.mxu0 %v230
  %482 = vmatpush1.bf16.msra.mxu0 %v229
  %483 = vmatprep.subr.bf16.mxu0 %v214
  %484 = vmatpush1.bf16.msra.mxu0 %v213
  %485 = vmatprep.subr.bf16.mxu0 0
  %486 = vmatpush2.bf16.msra.mxu0 0
  %487 = vmatprep.subr.bf16.mxu0 0
  %488 = vmatpush2.bf16.msra.mxu0 0
  %489 = vmatprep.subr.bf16.mxu0 0
  %490 = vmatpush2.bf16.msra.mxu0 0
  %491 = vmatprep.subr.bf16.mxu0 0
  %492 = vmatpush2.bf16.msra.mxu0 0
  %493 = vmatprep.subr.bf16.mxu0 0
  %494 = vmatpush2.bf16.msra.mxu0 0
  %495 = vmatprep.subr.bf16.mxu0 0
  %496 = vmatpush2.bf16.msra.mxu0 0
  %497 = vmatprep.subr.bf16.mxu0 0
  %498 = vmatpush2.bf16.msra.mxu0 0
  %499 = vmatprep.subr.bf16.mxu0 0
  %500 = vmatpush2.bf16.msra.mxu0 0
  %501 = vmatprep.mubr.bf16.mxu0 0
  %502 = vmatmul.mubr.bf16.gmra.mxu0 %v303
  %v503 = vpop.f32.mrf.mxu0
  %v504 = vadd.f32 0.0, %v503
  %v505 = vpop.f32.mrf.mxu0
  %v506 = vadd.f32 0.0, %v505
  %v507 = vpop.f32.mrf.mxu0
  %v508 = vpop.f32.mrf.mxu0
  %509 = vdwg.mxu0
  %510 = vmatprep.subr.bf16.mxu0 0
  %511 = vmatpush1.bf16.msra.mxu0 0
  %512 = vmatprep.subr.bf16.mxu0 0
  %513 = vmatpush1.bf16.msra.mxu0 0
  %514 = vmatprep.subr.bf16.mxu0 0
  %515 = vmatpush1.bf16.msra.mxu0 0
  %516 = vmatprep.subr.bf16.mxu0 0
  %517 = vmatpush1.bf16.msra.mxu0 0
  %518 = vmatprep.subr.bf16.mxu0 0
  %519 = vmatpush1.bf16.msra.mxu0 0
  %520 = vmatprep.subr.bf16.mxu0 %v248
  %521 = vmatpush1.bf16.msra.mxu0 %v247
  %522 = vmatprep.subr.bf16.mxu0 %v232
  %523 = vmatpush1.bf16.msra.mxu0 %v231
  %524 = vmatprep.subr.bf16.mxu0 %v216
  %525 = vmatpush1.bf16.msra.mxu0 %v215
  %526 = vmatprep.subr.bf16.mxu0 0
  %527 = vmatpush2.bf16.msra.mxu0 0
  %528 = vmatprep.subr.bf16.mxu0 0
  %529 = vmatpush2.bf16.msra.mxu0 0
  %530 = vmatprep.subr.bf16.mxu0 0
  %531 = vmatpush2.bf16.msra.mxu0 0
  %532 = vmatprep.subr.bf16.mxu0 0
  %533 = vmatpush2.bf16.msra.mxu0 0
  %534 = vmatprep.subr.bf16.mxu0 0
  %535 = vmatpush2.bf16.msra.mxu0 0
  %536 = vmatprep.subr.bf16.mxu0 0
  %537 = vmatpush2.bf16.msra.mxu0 0
  %538 = vmatprep.subr.bf16.mxu0 0
  %539 = vmatpush2.bf16.msra.mxu0 0
  %540 = vmatprep.subr.bf16.mxu0 0
  %541 = vmatpush2.bf16.msra.mxu0 0
  %542 = vmatprep.mubr.bf16.mxu0 0
  %543 = vmatmul.mubr.bf16.gmra.mxu0 %v303
  %v544 = vpop.f32.mrf.mxu0
  %v545 = vadd.f32 0.0, %v544
  %v546 = vpop.f32.mrf.mxu0
  %v547 = vadd.f32 0.0, %v546
  %v548 = vpop.f32.mrf.mxu0
  %v549 = vpop.f32.mrf.mxu0
  %550 = vdwg.mxu0
  %551 = vmatprep.subr.bf16.mxu0 0
  %552 = vmatpush1.bf16.msra.mxu0 0
  %553 = vmatprep.subr.bf16.mxu0 0
  %554 = vmatpush1.bf16.msra.mxu0 0
  %555 = vmatprep.subr.bf16.mxu0 0
  %556 = vmatpush1.bf16.msra.mxu0 0
  %557 = vmatprep.subr.bf16.mxu0 0
  %558 = vmatpush1.bf16.msra.mxu0 0
  %559 = vmatprep.subr.bf16.mxu0 0
  %560 = vmatpush1.bf16.msra.mxu0 0
  %561 = vmatprep.subr.bf16.mxu0 %v250
  %562 = vmatpush1.bf16.msra.mxu0 %v249
  %563 = vmatprep.subr.bf16.mxu0 %v234
  %564 = vmatpush1.bf16.msra.mxu0 %v233
  %565 = vmatprep.subr.bf16.mxu0 %v218
  %566 = vmatpush1.bf16.msra.mxu0 %v217
  %567 = vmatprep.subr.bf16.mxu0 0
  %568 = vmatpush2.bf16.msra.mxu0 0
  %569 = vmatprep.subr.bf16.mxu0 0
  %570 = vmatpush2.bf16.msra.mxu0 0
  %571 = vmatprep.subr.bf16.mxu0 0
  %572 = vmatpush2.bf16.msra.mxu0 0
  %573 = vmatprep.subr.bf16.mxu0 0
  %574 = vmatpush2.bf16.msra.mxu0 0
  %575 = vmatprep.subr.bf16.mxu0 0
  %576 = vmatpush2.bf16.msra.mxu0 0
  %577 = vmatprep.subr.bf16.mxu0 0
  %578 = vmatpush2.bf16.msra.mxu0 0
  %579 = vmatprep.subr.bf16.mxu0 0
  %580 = vmatpush2.bf16.msra.mxu0 0
  %581 = vmatprep.subr.bf16.mxu0 0
  %582 = vmatpush2.bf16.msra.mxu0 0
  %583 = vmatprep.mubr.bf16.mxu0 0
  %584 = vmatmul.mubr.bf16.gmra.mxu0 %v303
  %v585 = vpop.f32.mrf.mxu0
  %v586 = vadd.f32 0.0, %v585
  %v587 = vpop.f32.mrf.mxu0
  %v588 = vadd.f32 0.0, %v587
  %v589 = vpop.f32.mrf.mxu0
  %v590 = vpop.f32.mrf.mxu0
  %591 = vdwg.mxu0
  %592 = vmatprep.subr.bf16.mxu0 0
  %593 = vmatpush1.bf16.msra.mxu0 0
  %594 = vmatprep.subr.bf16.mxu0 0
  %595 = vmatpush1.bf16.msra.mxu0 0
  %596 = vmatprep.subr.bf16.mxu0 0
  %597 = vmatpush1.bf16.msra.mxu0 0
  %598 = vmatprep.subr.bf16.mxu0 0
  %599 = vmatpush1.bf16.msra.mxu0 0
  %600 = vmatprep.subr.bf16.mxu0 0
  %601 = vmatpush1.bf16.msra.mxu0 0
  %602 = vmatprep.subr.bf16.mxu0 %v252
  %603 = vmatpush1.bf16.msra.mxu0 %v251
  %604 = vmatprep.subr.bf16.mxu0 %v236
  %605 = vmatpush1.bf16.msra.mxu0 %v235
  %606 = vmatprep.subr.bf16.mxu0 %v220
  %607 = vmatpush1.bf16.msra.mxu0 %v219
  %608 = vmatprep.subr.bf16.mxu0 0
  %609 = vmatpush2.bf16.msra.mxu0 0
  %610 = vmatprep.subr.bf16.mxu0 0
  %611 = vmatpush2.bf16.msra.mxu0 0
  %612 = vmatprep.subr.bf16.mxu0 0
  %613 = vmatpush2.bf16.msra.mxu0 0
  %614 = vmatprep.subr.bf16.mxu0 0
  %615 = vmatpush2.bf16.msra.mxu0 0
  %616 = vmatprep.subr.bf16.mxu0 0
  %617 = vmatpush2.bf16.msra.mxu0 0
  %618 = vmatprep.subr.bf16.mxu0 0
  %619 = vmatpush2.bf16.msra.mxu0 0
  %620 = vmatprep.subr.bf16.mxu0 0
  %621 = vmatpush2.bf16.msra.mxu0 0
  %622 = vmatprep.subr.bf16.mxu0 0
  %623 = vmatpush2.bf16.msra.mxu0 0
  %624 = vmatprep.mubr.bf16.mxu0 0
  %625 = vmatmul.mubr.bf16.gmra.mxu0 %v303
  %v626 = vpop.f32.mrf.mxu0
  %v627 = vadd.f32 0.0, %v626
  %v628 = vpop.f32.mrf.mxu0
  %v629 = vadd.f32 0.0, %v628
  %v630 = vpop.f32.mrf.mxu0
  %v631 = vpop.f32.mrf.mxu0
  %632 = vdwg.mxu0
  %vm633 = vcmp.ge.f32.partialorder %v340, 0.0
  %vm634 = vcmp.ge.f32.partialorder %v342, 0.0
  %vm635 = vcmp.ge.f32.partialorder %v381, 0.0
  %vm636 = vcmp.ge.f32.partialorder %v383, 0.0
  %vm637 = vcmp.ge.f32.partialorder %v422, 0.0
  %vm638 = vcmp.ge.f32.partialorder %v424, 0.0
  %vm639 = vcmp.ge.f32.partialorder %v463, 0.0
  %vm640 = vcmp.ge.f32.partialorder %v465, 0.0
  %vm641 = vcmp.ge.f32.partialorder %v504, 0.0
  %vm642 = vcmp.ge.f32.partialorder %v506, 0.0
  %vm643 = vcmp.ge.f32.partialorder %v545, 0.0
  %vm644 = vcmp.ge.f32.partialorder %v547, 0.0
  %vm645 = vcmp.ge.f32.partialorder %v586, 0.0
  %vm646 = vcmp.ge.f32.partialorder %v588, 0.0
  %vm647 = vcmp.ge.f32.partialorder %v627, 0.0
  %vm648 = vcmp.ge.f32.partialorder %v629, 0.0
  %v649 = vmul.f32 %v340, 0.2
  %v650 = vmul.f32 %v342, 0.2
  %v651 = vmul.f32 %v381, 0.2
  %v652 = vmul.f32 %v383, 0.2
  %v653 = vmul.f32 %v422, 0.2
  %v654 = vmul.f32 %v424, 0.2
  %v655 = vmul.f32 %v463, 0.2
  %v656 = vmul.f32 %v465, 0.2
  %v657 = vmul.f32 %v504, 0.2
  %v658 = vmul.f32 %v506, 0.2
  %v659 = vmul.f32 %v545, 0.2
  %v660 = vmul.f32 %v547, 0.2
  %v661 = vmul.f32 %v586, 0.2
  %v662 = vmul.f32 %v588, 0.2
  %v663 = vmul.f32 %v627, 0.2
  %v664 = vmul.f32 %v629, 0.2
  %v665 = vsel %vm633, %v340, %v649
  %v666 = vsel %vm634, %v342, %v650
  %v667 = vsel %vm635, %v381, %v651
  %v668 = vsel %vm636, %v383, %v652
  %v669 = vsel %vm637, %v422, %v653
  %v670 = vsel %vm638, %v424, %v654
  %v671 = vsel %vm639, %v463, %v655
  %v672 = vsel %vm640, %v465, %v656
  %v673 = vsel %vm641, %v504, %v657
  %v674 = vsel %vm642, %v506, %v658
  %v675 = vsel %vm643, %v545, %v659
  %v676 = vsel %vm644, %v547, %v660
  %v677 = vsel %vm645, %v586, %v661
  %v678 = vsel %vm646, %v588, %v662
  %v679 = vsel %vm647, %v627, %v663
  %v680 = vsel %vm648, %v629, %v664
  %v681 = vpack.c.bf16 %v665, %v665
  %v682 = vpack.c.bf16 %v666, %v666
  %v683 = vpack.c.bf16 %v667, %v667
  %v684 = vpack.c.bf16 %v668, %v668
  %v685 = vpack.c.bf16 %v669, %v669
  %v686 = vpack.c.bf16 %v670, %v670
  %v687 = vpack.c.bf16 %v671, %v671
  %v688 = vpack.c.bf16 %v672, %v672
  %v689 = vpack.c.bf16 %v673, %v673
  %v690 = vpack.c.bf16 %v674, %v674
  %v691 = vpack.c.bf16 %v675, %v675
  %v692 = vpack.c.bf16 %v676, %v676
  %v693 = vpack.c.bf16 %v677, %v677
  %v694 = vpack.c.bf16 %v678, %v678
  %v695 = vpack.c.bf16 %v679, %v679
  %v696 = vpack.c.bf16 %v680, %v680
  %v713 = vunpack.c.l.b16 %v681
  %v714 = vunpack.c.l.b16 %v682
  %v715 = vunpack.c.l.b16 %v683
  %v716 = vunpack.c.l.b16 %v684
  %v717 = vunpack.c.l.b16 %v685
  %v718 = vunpack.c.l.b16 %v686
  %v719 = vunpack.c.l.b16 %v687
  %v720 = vunpack.c.l.b16 %v688
  %v721 = vunpack.c.l.b16 %v689
  %v722 = vunpack.c.l.b16 %v690
  %v723 = vunpack.c.l.b16 %v691
  %v724 = vunpack.c.l.b16 %v692
  %v725 = vunpack.c.l.b16 %v693
  %v726 = vunpack.c.l.b16 %v694
  %v727 = vunpack.c.l.b16 %v695
  %v728 = vunpack.c.l.b16 %v696
  %v729 = vpack.c.b16 %v714, %v713
  %v730 = vpack.c.b16 %v716, %v715
  %v731 = vpack.c.b16 %v718, %v717
  %v732 = vpack.c.b16 %v720, %v719
  %v733 = vpack.c.b16 %v722, %v721
  %v734 = vpack.c.b16 %v724, %v723
  %v735 = vpack.c.b16 %v726, %v725
  %v736 = vpack.c.b16 %v728, %v727
  %745 = vst [vmem:[%s2] sm:$0xff] %v729
  %746 = vst [vmem:[%s2 + $0x8] sm:$0xff] %v730
  %747 = vst [vmem:[%s2 + $0x10] sm:$0xff] %v731
  %748 = vst [vmem:[%s2 + $0x18] sm:$0xff] %v732
  %749 = vst [vmem:[%s2 + $0x20] sm:$0xff] %v733
  %750 = vst [vmem:[%s2 + $0x28] sm:$0xff] %v734
  %751 = vst [vmem:[%s2 + $0x30] sm:$0xff] %v735
  %752 = vst [vmem:[%s2 + $0x38] sm:$0xff] %v736
  // Predicated region
  $region10: #{discriminator_forward.8} parent=0 // pred_check
    _
  $region11: #{discriminator_forward.8} parent=0 // pred_check_branch
    %754 = sbr.rel (0) target = $region13
  $region12: #{discriminator_forward.8} parent=0 // pred_region
    _
  $region13: #{discriminator_forward.8} parent=0 // pred_fallthru
    _
  // Predicated region
  $region14: #{discriminator_forward.8} parent=0 // pred_check
    _
  $region15: #{discriminator_forward.8} parent=0 // pred_check_branch
    %756 = sbr.rel (0) target = $region17
  $region16: #{discriminator_forward.8} parent=0 // pred_region
    _
  $region17: #{discriminator_forward.8} parent=0 // pred_fallthru
    _

// kernel: discriminator_forward.9
$region0: #{discriminator_forward.9}
  #allocation0 [shape = 'u32[]', space=smem, size = 0x4, offset = 0x4, fixed_abs, tag = 'smem constant byte address 0x4 - core index']
  #allocation1 [shape = 'u32[144,128]{1,0:T(1,128)}', space=vmem, size = 0x12000, scoped, tag = 'internal scratch']
  %s0 = inlined_call_operand.vmem [shape: bf16[16,128], index: 0, kind: input, shape index: {}]
  %s1 = inlined_call_operand.vmem [shape: bf16[128,512], index: 1, kind: input, shape index: {}]
  %s2 = inlined_call_operand.vmem [shape: bf16[16,512], index: 2, kind: output, shape index: {0}]
  %s3 = inlined_call_operand.vmem [shape: f32[1,16,1], index: 3, kind: output, shape index: {1}]
  %s4 = inlined_call_operand.vmem [shape: f32[1,16,1], index: 4, kind: output, shape index: {2}]
  %5 = xla_tuple %s2, %s3, %s4
  %s6 = sld [smem:[#allocation0]]
  $region34: #{discriminator_forward.9} parent=0
    _
  %s8 = ssub.s32 1, %s6
  %s9 = scalar_select 0, %s8, %s6
  // Predicated region
  $region2: #{discriminator_forward.9} parent=0 // pred_check
    _
  $region3: #{discriminator_forward.9} parent=0 // pred_check_branch
    %11 = sbr.rel (0) target = $region5
  $region4: #{discriminator_forward.9} parent=0 // pred_region
    _
  $region5: #{discriminator_forward.9} parent=0 // pred_fallthru
    _
  // Predicated region
  $region6: #{discriminator_forward.9} parent=0 // pred_check
    _
  $region7: #{discriminator_forward.9} parent=0 // pred_check_branch
    %13 = sbr.rel (0) target = $region9
  $region8: #{discriminator_forward.9} parent=0 // pred_region
    _
  $region9: #{discriminator_forward.9} parent=0 // pred_fallthru
    _
  %v15 = vld [vmem:[%s0] sm:$0xf]
  %v16 = vld [vmem:[%s0 + $0x4] sm:$0xf]
  %v17 = vld [vmem:[%s1] sm:$0xff]
  %v18 = vld [vmem:[%s1 + $0x8] sm:$0xff]
  %v19 = vld [vmem:[%s1 + $0x10] sm:$0xff]
  %v20 = vld [vmem:[%s1 + $0x18] sm:$0xff]
  %v21 = vld [vmem:[%s1 + $0x20] sm:$0xff]
  %v22 = vld [vmem:[%s1 + $0x28] sm:$0xff]
  %v23 = vld [vmem:[%s1 + $0x30] sm:$0xff]
  %v24 = vld [vmem:[%s1 + $0x38] sm:$0xff]
  %v25 = vld [vmem:[%s1 + $0x40] sm:$0xff]
  %v26 = vld [vmem:[%s1 + $0x48] sm:$0xff]
  %v27 = vld [vmem:[%s1 + $0x50] sm:$0xff]
  %v28 = vld [vmem:[%s1 + $0x58] sm:$0xff]
  %v29 = vld [vmem:[%s1 + $0x60] sm:$0xff]
  %v30 = vld [vmem:[%s1 + $0x68] sm:$0xff]
  %v31 = vld [vmem:[%s1 + $0x70] sm:$0xff]
  %v32 = vld [vmem:[%s1 + $0x78] sm:$0xff]
  %v33 = vld [vmem:[%s1 + $0x80] sm:$0xff]
  %v34 = vld [vmem:[%s1 + $0x88] sm:$0xff]
  %v35 = vld [vmem:[%s1 + $0x90] sm:$0xff]
  %v36 = vld [vmem:[%s1 + $0x98] sm:$0xff]
  %v37 = vld [vmem:[%s1 + $0xa0] sm:$0xff]
  %v38 = vld [vmem:[%s1 + $0xa8] sm:$0xff]
  %v39 = vld [vmem:[%s1 + $0xb0] sm:$0xff]
  %v40 = vld [vmem:[%s1 + $0xb8] sm:$0xff]
  %v41 = vld [vmem:[%s1 + $0xc0] sm:$0xff]
  %v42 = vld [vmem:[%s1 + $0xc8] sm:$0xff]
  %v43 = vld [vmem:[%s1 + $0xd0] sm:$0xff]
  %v44 = vld [vmem:[%s1 + $0xd8] sm:$0xff]
  %v45 = vld [vmem:[%s1 + $0xe0] sm:$0xff]
  %v46 = vld [vmem:[%s1 + $0xe8] sm:$0xff]
  %v47 = vld [vmem:[%s1 + $0xf0] sm:$0xff]
  %v48 = vld [vmem:[%s1 + $0xf8] sm:$0xff]
  %v51 = vunpack.c.l.b16 %v15
  %v52 = vunpack.c.l.b16 %v16
  %v53 = vpack.c.b16 %v52, %v51
  %v87 = vunpack.c.l.b16 %v17
  %v88 = vunpack.c.h.b16 %v17
  %v89 = vunpack.c.l.b16 %v18
  %v90 = vunpack.c.h.b16 %v18
  %v91 = vunpack.c.l.b16 %v19
  %v92 = vunpack.c.h.b16 %v19
  %v93 = vunpack.c.l.b16 %v20
  %v94 = vunpack.c.h.b16 %v20
  %v95 = vunpack.c.l.b16 %v21
  %v96 = vunpack.c.h.b16 %v21
  %v97 = vunpack.c.l.b16 %v22
  %v98 = vunpack.c.h.b16 %v22
  %v99 = vunpack.c.l.b16 %v23
  %v100 = vunpack.c.h.b16 %v23
  %v101 = vunpack.c.l.b16 %v24
  %v102 = vunpack.c.h.b16 %v24
  %v103 = vunpack.c.l.b16 %v25
  %v104 = vunpack.c.h.b16 %v25
  %v105 = vunpack.c.l.b16 %v26
  %v106 = vunpack.c.h.b16 %v26
  %v107 = vunpack.c.l.b16 %v27
  %v108 = vunpack.c.h.b16 %v27
  %v109 = vunpack.c.l.b16 %v28
  %v110 = vunpack.c.h.b16 %v28
  %v111 = vunpack.c.l.b16 %v29
  %v112 = vunpack.c.h.b16 %v29
  %v113 = vunpack.c.l.b16 %v30
  %v114 = vunpack.c.h.b16 %v30
  %v115 = vunpack.c.l.b16 %v31
  %v116 = vunpack.c.h.b16 %v31
  %v117 = vunpack.c.l.b16 %v32
  %v118 = vunpack.c.h.b16 %v32
  %v119 = vunpack.c.l.b16 %v33
  %v120 = vunpack.c.h.b16 %v33
  %v121 = vunpack.c.l.b16 %v34
  %v122 = vunpack.c.h.b16 %v34
  %v123 = vunpack.c.l.b16 %v35
  %v124 = vunpack.c.h.b16 %v35
  %v125 = vunpack.c.l.b16 %v36
  %v126 = vunpack.c.h.b16 %v36
  %v127 = vunpack.c.l.b16 %v37
  %v128 = vunpack.c.h.b16 %v37
  %v129 = vunpack.c.l.b16 %v38
  %v130 = vunpack.c.h.b16 %v38
  %v131 = vunpack.c.l.b16 %v39
  %v132 = vunpack.c.h.b16 %v39
  %v133 = vunpack.c.l.b16 %v40
  %v134 = vunpack.c.h.b16 %v40
  %v135 = vunpack.c.l.b16 %v41
  %v136 = vunpack.c.h.b16 %v41
  %v137 = vunpack.c.l.b16 %v42
  %v138 = vunpack.c.h.b16 %v42
  %v139 = vunpack.c.l.b16 %v43
  %v140 = vunpack.c.h.b16 %v43
  %v141 = vunpack.c.l.b16 %v44
  %v142 = vunpack.c.h.b16 %v44
  %v143 = vunpack.c.l.b16 %v45
  %v144 = vunpack.c.h.b16 %v45
  %v145 = vunpack.c.l.b16 %v46
  %v146 = vunpack.c.h.b16 %v46
  %v147 = vunpack.c.l.b16 %v47
  %v148 = vunpack.c.h.b16 %v47
  %v149 = vunpack.c.l.b16 %v48
  %v150 = vunpack.c.h.b16 %v48
  %v151 = vpack.c.b16 %v91, %v87
  %v152 = vpack.c.b16 %v92, %v88
  %v153 = vpack.c.b16 %v93, %v89
  %v154 = vpack.c.b16 %v94, %v90
  %v155 = vpack.c.b16 %v99, %v95
  %v156 = vpack.c.b16 %v100, %v96
  %v157 = vpack.c.b16 %v101, %v97
  %v158 = vpack.c.b16 %v102, %v98
  %v159 = vpack.c.b16 %v107, %v103
  %v160 = vpack.c.b16 %v108, %v104
  %v161 = vpack.c.b16 %v109, %v105
  %v162 = vpack.c.b16 %v110, %v106
  %v163 = vpack.c.b16 %v115, %v111
  %v164 = vpack.c.b16 %v116, %v112
  %v165 = vpack.c.b16 %v117, %v113
  %v166 = vpack.c.b16 %v118, %v114
  %v167 = vpack.c.b16 %v123, %v119
  %v168 = vpack.c.b16 %v124, %v120
  %v169 = vpack.c.b16 %v125, %v121
  %v170 = vpack.c.b16 %v126, %v122
  %v171 = vpack.c.b16 %v131, %v127
  %v172 = vpack.c.b16 %v132, %v128
  %v173 = vpack.c.b16 %v133, %v129
  %v174 = vpack.c.b16 %v134, %v130
  %v175 = vpack.c.b16 %v139, %v135
  %v176 = vpack.c.b16 %v140, %v136
  %v177 = vpack.c.b16 %v141, %v137
  %v178 = vpack.c.b16 %v142, %v138
  %v179 = vpack.c.b16 %v147, %v143
  %v180 = vpack.c.b16 %v148, %v144
  %v181 = vpack.c.b16 %v149, %v145
  %v182 = vpack.c.b16 %v150, %v146
  %215 = vmatprep.subr.bf16.mxu0 %v180
  %216 = vmatpush1.bf16.msra.mxu0 %v179
  %217 = vmatprep.subr.bf16.mxu0 %v176
  %218 = vmatpush1.bf16.msra.mxu0 %v175
  %219 = vmatprep.subr.bf16.mxu0 %v172
  %220 = vmatpush1.bf16.msra.mxu0 %v171
  %221 = vmatprep.subr.bf16.mxu0 %v168
  %222 = vmatpush1.bf16.msra.mxu0 %v167
  %223 = vmatprep.subr.bf16.mxu0 %v164
  %224 = vmatpush1.bf16.msra.mxu0 %v163
  %225 = vmatprep.subr.bf16.mxu0 %v160
  %226 = vmatpush1.bf16.msra.mxu0 %v159
  %227 = vmatprep.subr.bf16.mxu0 %v156
  %228 = vmatpush1.bf16.msra.mxu0 %v155
  %229 = vmatprep.subr.bf16.mxu0 %v152
  %230 = vmatpush1.bf16.msra.mxu0 %v151
  %231 = vmatprep.subr.bf16.mxu0 0
  %232 = vmatpush2.bf16.msra.mxu0 0
  %233 = vmatprep.subr.bf16.mxu0 0
  %234 = vmatpush2.bf16.msra.mxu0 0
  %235 = vmatprep.subr.bf16.mxu0 0
  %236 = vmatpush2.bf16.msra.mxu0 0
  %237 = vmatprep.subr.bf16.mxu0 0
  %238 = vmatpush2.bf16.msra.mxu0 0
  %239 = vmatprep.subr.bf16.mxu0 0
  %240 = vmatpush2.bf16.msra.mxu0 0
  %241 = vmatprep.subr.bf16.mxu0 0
  %242 = vmatpush2.bf16.msra.mxu0 0
  %243 = vmatprep.subr.bf16.mxu0 0
  %244 = vmatpush2.bf16.msra.mxu0 0
  %245 = vmatprep.subr.bf16.mxu0 0
  %246 = vmatpush2.bf16.msra.mxu0 0
  %247 = vmatprep.mubr.bf16.mxu0 0
  %248 = vmatmul.mubr.bf16.gmra.mxu0 %v53
  %v249 = vpop.f32.mrf.mxu0
  %v250 = vadd.f32 0.0, %v249
  %v251 = vpop.f32.mrf.mxu0
  %v252 = vadd.f32 0.0, %v251
  %v253 = vpop.f32.mrf.mxu0
  %v254 = vadd.f32 0.0, %v253
  %v255 = vpop.f32.mrf.mxu0
  %v256 = vadd.f32 0.0, %v255
  %257 = vdwg.mxu0
  %258 = vmatprep.subr.bf16.mxu0 %v182
  %259 = vmatpush1.bf16.msra.mxu0 %v181
  %260 = vmatprep.subr.bf16.mxu0 %v178
  %261 = vmatpush1.bf16.msra.mxu0 %v177
  %262 = vmatprep.subr.bf16.mxu0 %v174
  %263 = vmatpush1.bf16.msra.mxu0 %v173
  %264 = vmatprep.subr.bf16.mxu0 %v170
  %265 = vmatpush1.bf16.msra.mxu0 %v169
  %266 = vmatprep.subr.bf16.mxu0 %v166
  %267 = vmatpush1.bf16.msra.mxu0 %v165
  %268 = vmatprep.subr.bf16.mxu0 %v162
  %269 = vmatpush1.bf16.msra.mxu0 %v161
  %270 = vmatprep.subr.bf16.mxu0 %v158
  %271 = vmatpush1.bf16.msra.mxu0 %v157
  %272 = vmatprep.subr.bf16.mxu0 %v154
  %273 = vmatpush1.bf16.msra.mxu0 %v153
  %274 = vmatprep.subr.bf16.mxu0 0
  %275 = vmatpush2.bf16.msra.mxu0 0
  %276 = vmatprep.subr.bf16.mxu0 0
  %277 = vmatpush2.bf16.msra.mxu0 0
  %278 = vmatprep.subr.bf16.mxu0 0
  %279 = vmatpush2.bf16.msra.mxu0 0
  %280 = vmatprep.subr.bf16.mxu0 0
  %281 = vmatpush2.bf16.msra.mxu0 0
  %282 = vmatprep.subr.bf16.mxu0 0
  %283 = vmatpush2.bf16.msra.mxu0 0
  %284 = vmatprep.subr.bf16.mxu0 0
  %285 = vmatpush2.bf16.msra.mxu0 0
  %286 = vmatprep.subr.bf16.mxu0 0
  %287 = vmatpush2.bf16.msra.mxu0 0
  %288 = vmatprep.subr.bf16.mxu0 0
  %289 = vmatpush2.bf16.msra.mxu0 0
  %290 = vmatprep.mubr.bf16.mxu0 0
  %291 = vmatmul.mubr.bf16.gmra.mxu0 %v53
  %v292 = vpop.f32.mrf.mxu0
  %v293 = vadd.f32 0.0, %v292
  %v294 = vpop.f32.mrf.mxu0
  %v295 = vadd.f32 0.0, %v294
  %v296 = vpop.f32.mrf.mxu0
  %v297 = vadd.f32 0.0, %v296
  %v298 = vpop.f32.mrf.mxu0
  %v299 = vadd.f32 0.0, %v298
  %300 = vdwg.mxu0
  %v301 = vpack.c.bf16 %v254, %v250
  %v302 = vpack.c.bf16 %v256, %v252
  %v303 = vpack.c.bf16 %v297, %v293
  %v304 = vpack.c.bf16 %v299, %v295
  %v309 = vunpack.c.l.b16 %v301
  %v310 = vunpack.c.l.b16 %v302
  %v311 = vunpack.c.l.b16 %v303
  %v312 = vunpack.c.l.b16 %v304
  %v313 = vunpack.c.h.b16 %v301
  %v314 = vunpack.c.h.b16 %v302
  %v315 = vunpack.c.h.b16 %v303
  %v316 = vunpack.c.h.b16 %v304
  %v317 = vpack.c.b16 %v310, %v309
  %v318 = vpack.c.b16 %v312, %v311
  %v319 = vpack.c.b16 %v314, %v313
  %v320 = vpack.c.b16 %v316, %v315
  %325 = vst [vmem:[%s2] sm:$0xff] %v317
  %326 = vst [vmem:[%s2 + $0x8] sm:$0xff] %v318
  %327 = vst [vmem:[%s2 + $0x10] sm:$0xff] %v319
  %328 = vst [vmem:[%s2 + $0x18] sm:$0xff] %v320
  %v329 = vadd.f32 %v250, %v252
  %v330 = vadd.f32 %v329, %v293
  %v331 = vadd.f32 %v330, %v295
  %332 = vadd.xlane.f32.xlu0 %v331
  %v333 = vpop.xlane.xlu0 %332
  %v334 = vadd.f32 %v254, %v256
  %v335 = vadd.f32 %v334, %v297
  %v336 = vadd.f32 %v335, %v299
  %337 = vadd.xlane.f32.xlu0 %v336
  %v338 = vpop.xlane.xlu0 %337
  %vm339 = vcmask 7168
  %340 = vst.msk [vmem:[%s3] sm:$0xff] %vm339, %v333
  %341 = vst.msk [vmem:[%s3 + $0x8] sm:$0xff] %vm339, %v338
  %v342 = vmul.f32 %v250, %v250
  %v343 = vmul.f32 %v252, %v252
  %v344 = vmul.f32 %v293, %v293
  %v345 = vmul.f32 %v295, %v295
  %v346 = vmul.f32 %v254, %v254
  %v347 = vmul.f32 %v256, %v256
  %v348 = vmul.f32 %v297, %v297
  %v349 = vmul.f32 %v299, %v299
  %v350 = vadd.f32 %v342, %v343
  %v351 = vadd.f32 %v350, %v344
  %v352 = vadd.f32 %v351, %v345
  %353 = vadd.xlane.f32.xlu0 %v352
  %v354 = vpop.xlane.xlu0 %353
  %v355 = vadd.f32 %v346, %v347
  %v356 = vadd.f32 %v355, %v348
  %v357 = vadd.f32 %v356, %v349
  %358 = vadd.xlane.f32.xlu0 %v357
  %v359 = vpop.xlane.xlu0 %358
  %360 = vst.msk [vmem:[%s4] sm:$0xff] %vm339, %v354
  %361 = vst.msk [vmem:[%s4 + $0x8] sm:$0xff] %vm339, %v359
  // Predicated region
  $region10: #{discriminator_forward.9} parent=0 // pred_check
    _
  $region11: #{discriminator_forward.9} parent=0 // pred_check_branch
    %363 = sbr.rel (0) target = $region13
  $region12: #{discriminator_forward.9} parent=0 // pred_region
    _
  $region13: #{discriminator_forward.9} parent=0 // pred_fallthru
    _
  // Predicated region
  $region14: #{discriminator_forward.9} parent=0 // pred_check
    _
  $region15: #{discriminator_forward.9} parent=0 // pred_check_branch
    %365 = sbr.rel (0) target = $region17
  $region16: #{discriminator_forward.9} parent=0 // pred_region
    _
  $region17: #{discriminator_forward.9} parent=0 // pred_fallthru
    _
  // Predicated region
  $region18: #{discriminator_forward.9} parent=0 // pred_check
    _
  $region19: #{discriminator_forward.9} parent=0 // pred_check_branch
    %367 = sbr.rel (0) target = $region21
  $region20: #{discriminator_forward.9} parent=0 // pred_region
    _
  $region21: #{discriminator_forward.9} parent=0 // pred_fallthru
    _
  // Predicated region
  $region22: #{discriminator_forward.9} parent=0 // pred_check
    _
  $region23: #{discriminator_forward.9} parent=0 // pred_check_branch
    %369 = sbr.rel (0) target = $region25
  $region24: #{discriminator_forward.9} parent=0 // pred_region
    _
  $region25: #{discriminator_forward.9} parent=0 // pred_fallthru
    _
  // Predicated region
  $region26: #{discriminator_forward.9} parent=0 // pred_check
    _
  $region27: #{discriminator_forward.9} parent=0 // pred_check_branch
    %371 = sbr.rel (0) target = $region29
  $region28: #{discriminator_forward.9} parent=0 // pred_region
    _
  $region29: #{discriminator_forward.9} parent=0 // pred_fallthru
    _
  // Predicated region
  $region30: #{discriminator_forward.9} parent=0 // pred_check
    _
  $region31: #{discriminator_forward.9} parent=0 // pred_check_branch
    %373 = sbr.rel (0) target = $region33
  $region32: #{discriminator_forward.9} parent=0 // pred_region
    _
  $region33: #{discriminator_forward.9} parent=0 // pred_fallthru
    _

// kernel: discriminator_forward.10
$region0: #{discriminator_forward.10}
  #allocation0 [shape = 'u32[]', space=smem, size = 0x4, offset = 0x4, fixed_abs, tag = 'smem constant byte address 0x4 - core index']
  #allocation1 [shape = 'u32[144,128]{1,0:T(1,128)}', space=vmem, size = 0x12000, scoped, tag = 'internal scratch']
  %s0 = inlined_call_operand.vmem [shape: bf16[16,512], index: 0, kind: input, shape index: {}]
  %s1 = inlined_call_operand.vmem [shape: f32[16,1], index: 1, kind: input, shape index: {}]
  %s2 = inlined_call_operand.vmem [shape: f32[16,1], index: 2, kind: input, shape index: {}]
  %s3 = inlined_call_operand.vmem [shape: bf16[16,512], index: 3, kind: output, shape index: {}]
  %s4 = sld [smem:[#allocation0]]
  $region22: #{discriminator_forward.10} parent=0
    _
  %s6 = ssub.s32 1, %s4
  %s7 = scalar_select 0, %s6, %s4
  // Predicated region
  $region2: #{discriminator_forward.10} parent=0 // pred_check
    _
  $region3: #{discriminator_forward.10} parent=0 // pred_check_branch
    %9 = sbr.rel (0) target = $region5
  $region4: #{discriminator_forward.10} parent=0 // pred_region
    _
  $region5: #{discriminator_forward.10} parent=0 // pred_fallthru
    _
  // Predicated region
  $region6: #{discriminator_forward.10} parent=0 // pred_check
    _
  $region7: #{discriminator_forward.10} parent=0 // pred_check_branch
    %11 = sbr.rel (0) target = $region9
  $region8: #{discriminator_forward.10} parent=0 // pred_region
    _
  $region9: #{discriminator_forward.10} parent=0 // pred_fallthru
    _
  // Predicated region
  $region10: #{discriminator_forward.10} parent=0 // pred_check
    _
  $region11: #{discriminator_forward.10} parent=0 // pred_check_branch
    %13 = sbr.rel (0) target = $region13
  $region12: #{discriminator_forward.10} parent=0 // pred_region
    _
  $region13: #{discriminator_forward.10} parent=0 // pred_fallthru
    _
  %v14 = vld [vmem:[%s0] sm:$0xff]
  %v15 = vld [vmem:[%s0 + $0x8] sm:$0xff]
  %v16 = vld [vmem:[%s0 + $0x10] sm:$0xff]
  %v17 = vld [vmem:[%s0 + $0x18] sm:$0xff]
  %v18 = vunpack.c.l.bf16 %v14
  %v19 = vunpack.c.h.bf16 %v14
  %v20 = vunpack.c.l.bf16 %v15
  %v21 = vunpack.c.h.bf16 %v15
  %v22 = vunpack.c.l.bf16 %v16
  %v23 = vunpack.c.h.bf16 %v16
  %v24 = vunpack.c.l.bf16 %v17
  %v25 = vunpack.c.h.bf16 %v17
  %v26 = vld [vmem:[%s1] sm:$0xff]
  %v27 = vld [vmem:[%s1 + $0x8] sm:$0xff]
  %29 = vset.pattern.permute.xlu0 0
  %30 = vperm.xlu0 %29, %v26
  %v31 = vpop.permute.xlu0 %30
  %34 = vset.pattern.permute.xlu0 0
  %35 = vperm.xlu0 %34, %v27
  %v36 = vpop.permute.xlu0 %35
  %v38 = vmul.f32 %v18, %v31
  %v39 = vmul.f32 %v19, %v31
  %v40 = vmul.f32 %v20, %v31
  %v41 = vmul.f32 %v21, %v31
  %v42 = vmul.f32 %v22, %v36
  %v43 = vmul.f32 %v23, %v36
  %v44 = vmul.f32 %v24, %v36
  %v45 = vmul.f32 %v25, %v36
  %v46 = vld [vmem:[%s2] sm:$0xff]
  %v47 = vld [vmem:[%s2 + $0x8] sm:$0xff]
  %49 = vset.pattern.permute.xlu0 0
  %50 = vperm.xlu0 %49, %v46
  %v51 = vpop.permute.xlu0 %50
  %54 = vset.pattern.permute.xlu0 0
  %55 = vperm.xlu0 %54, %v47
  %v56 = vpop.permute.xlu0 %55
  %v58 = vadd.f32 %v38, %v51
  %v59 = vadd.f32 %v39, %v51
  %v60 = vadd.f32 %v40, %v51
  %v61 = vadd.f32 %v41, %v51
  %v62 = vadd.f32 %v42, %v56
  %v63 = vadd.f32 %v43, %v56
  %v64 = vadd.f32 %v44, %v56
  %v65 = vadd.f32 %v45, %v56
  %vm66 = vcmp.ge.f32.partialorder %v58, 0.0
  %vm67 = vcmp.ge.f32.partialorder %v59, 0.0
  %vm68 = vcmp.ge.f32.partialorder %v60, 0.0
  %vm69 = vcmp.ge.f32.partialorder %v61, 0.0
  %vm70 = vcmp.ge.f32.partialorder %v62, 0.0
  %vm71 = vcmp.ge.f32.partialorder %v63, 0.0
  %vm72 = vcmp.ge.f32.partialorder %v64, 0.0
  %vm73 = vcmp.ge.f32.partialorder %v65, 0.0
  %v74 = vmul.f32 %v58, 0.2
  %v75 = vmul.f32 %v59, 0.2
  %v76 = vmul.f32 %v60, 0.2
  %v77 = vmul.f32 %v61, 0.2
  %v78 = vmul.f32 %v62, 0.2
  %v79 = vmul.f32 %v63, 0.2
  %v80 = vmul.f32 %v64, 0.2
  %v81 = vmul.f32 %v65, 0.2
  %v82 = vsel %vm66, %v58, %v74
  %v83 = vsel %vm67, %v59, %v75
  %v84 = vsel %vm68, %v60, %v76
  %v85 = vsel %vm69, %v61, %v77
  %v86 = vsel %vm70, %v62, %v78
  %v87 = vsel %vm71, %v63, %v79
  %v88 = vsel %vm72, %v64, %v80
  %v89 = vsel %vm73, %v65, %v81
  %v90 = vpack.c.bf16 %v86, %v82
  %v91 = vpack.c.bf16 %v87, %v83
  %v92 = vpack.c.bf16 %v88, %v84
  %v93 = vpack.c.bf16 %v89, %v85
  %v98 = vunpack.c.l.b16 %v90
  %v99 = vunpack.c.l.b16 %v91
  %v100 = vunpack.c.l.b16 %v92
  %v101 = vunpack.c.l.b16 %v93
  %v102 = vunpack.c.h.b16 %v90
  %v103 = vunpack.c.h.b16 %v91
  %v104 = vunpack.c.h.b16 %v92
  %v105 = vunpack.c.h.b16 %v93
  %v106 = vpack.c.b16 %v99, %v98
  %v107 = vpack.c.b16 %v101, %v100
  %v108 = vpack.c.b16 %v103, %v102
  %v109 = vpack.c.b16 %v105, %v104
  %114 = vst [vmem:[%s3] sm:$0xff] %v106
  %115 = vst [vmem:[%s3 + $0x8] sm:$0xff] %v107
  %116 = vst [vmem:[%s3 + $0x10] sm:$0xff] %v108
  %117 = vst [vmem:[%s3 + $0x18] sm:$0xff] %v109
  // Predicated region
  $region14: #{discriminator_forward.10} parent=0 // pred_check
    _
  $region15: #{discriminator_forward.10} parent=0 // pred_check_branch
    %119 = sbr.rel (0) target = $region17
  $region16: #{discriminator_forward.10} parent=0 // pred_region
    _
  $region17: #{discriminator_forward.10} parent=0 // pred_fallthru
    _
  // Predicated region
  $region18: #{discriminator_forward.10} parent=0 // pred_check
    _
  $region19: #{discriminator_forward.10} parent=0 // pred_check_branch
    %121 = sbr.rel (0) target = $region21
  $region20: #{discriminator_forward.10} parent=0 // pred_region
    _
  $region21: #{discriminator_forward.10} parent=0 // pred_fallthru
    _

// kernel: discriminator_forward.11
$region0: #{discriminator_forward.11}
  #allocation0 [shape = 'u32[]', space=smem, size = 0x4, offset = 0x4, fixed_abs, tag = 'smem constant byte address 0x4 - core index']
  #allocation1 [shape = 'u32[144,128]{1,0:T(1,128)}', space=vmem, size = 0x12000, scoped, tag = 'internal scratch']
  %s0 = inlined_call_operand.vmem [shape: bf16[32,256], index: 0, kind: input, shape index: {}]
  %s1 = inlined_call_operand.vmem [shape: bf16[256,128], index: 1, kind: input, shape index: {}]
  %s2 = inlined_call_operand.vmem [shape: bf16[32,128], index: 2, kind: output, shape index: {0}]
  %s3 = inlined_call_operand.vmem [shape: f32[1,32,1], index: 3, kind: output, shape index: {1}]
  %s4 = inlined_call_operand.vmem [shape: f32[1,32,1], index: 4, kind: output, shape index: {2}]
  %5 = xla_tuple %s2, %s3, %s4
  %s6 = sld [smem:[#allocation0]]
  $region34: #{discriminator_forward.11} parent=0
    _
  %s8 = ssub.s32 1, %s6
  %s9 = scalar_select 0, %s8, %s6
  // Predicated region
  $region2: #{discriminator_forward.11} parent=0 // pred_check
    _
  $region3: #{discriminator_forward.11} parent=0 // pred_check_branch
    %11 = sbr.rel (0) target = $region5
  $region4: #{discriminator_forward.11} parent=0 // pred_region
    _
  $region5: #{discriminator_forward.11} parent=0 // pred_fallthru
    _
  // Predicated region
  $region6: #{discriminator_forward.11} parent=0 // pred_check
    _
  $region7: #{discriminator_forward.11} parent=0 // pred_check_branch
    %13 = sbr.rel (0) target = $region9
  $region8: #{discriminator_forward.11} parent=0 // pred_region
    _
  $region9: #{discriminator_forward.11} parent=0 // pred_fallthru
    _
  %v15 = vld [vmem:[%s0] sm:$0xff]
  %v16 = vld [vmem:[%s0 + $0x8] sm:$0xff]
  %v17 = vld [vmem:[%s0 + $0x10] sm:$0xff]
  %v18 = vld [vmem:[%s0 + $0x18] sm:$0xff]
  %v19 = vld [vmem:[%s1] sm:$0xf]
  %v20 = vld [vmem:[%s1 + $0x4] sm:$0xf]
  %v21 = vld [vmem:[%s1 + $0x8] sm:$0xf]
  %v22 = vld [vmem:[%s1 + $0xc] sm:$0xf]
  %v23 = vld [vmem:[%s1 + $0x10] sm:$0xf]
  %v24 = vld [vmem:[%s1 + $0x14] sm:$0xf]
  %v25 = vld [vmem:[%s1 + $0x18] sm:$0xf]
  %v26 = vld [vmem:[%s1 + $0x1c] sm:$0xf]
  %v27 = vld [vmem:[%s1 + $0x20] sm:$0xf]
  %v28 = vld [vmem:[%s1 + $0x24] sm:$0xf]
  %v29 = vld [vmem:[%s1 + $0x28] sm:$0xf]
  %v30 = vld [vmem:[%s1 + $0x2c] sm:$0xf]
  %v31 = vld [vmem:[%s1 + $0x30] sm:$0xf]
  %v32 = vld [vmem:[%s1 + $0x34] sm:$0xf]
  %v33 = vld [vmem:[%s1 + $0x38] sm:$0xf]
  %v34 = vld [vmem:[%s1 + $0x3c] sm:$0xf]
  %v35 = vld [vmem:[%s1 + $0x40] sm:$0xf]
  %v36 = vld [vmem:[%s1 + $0x44] sm:$0xf]
  %v37 = vld [vmem:[%s1 + $0x48] sm:$0xf]
  %v38 = vld [vmem:[%s1 + $0x4c] sm:$0xf]
  %v39 = vld [vmem:[%s1 + $0x50] sm:$0xf]
  %v40 = vld [vmem:[%s1 + $0x54] sm:$0xf]
  %v41 = vld [vmem:[%s1 + $0x58] sm:$0xf]
  %v42 = vld [vmem:[%s1 + $0x5c] sm:$0xf]
  %v43 = vld [vmem:[%s1 + $0x60] sm:$0xf]
  %v44 = vld [vmem:[%s1 + $0x64] sm:$0xf]
  %v45 = vld [vmem:[%s1 + $0x68] sm:$0xf]
  %v46 = vld [vmem:[%s1 + $0x6c] sm:$0xf]
  %v47 = vld [vmem:[%s1 + $0x70] sm:$0xf]
  %v48 = vld [vmem:[%s1 + $0x74] sm:$0xf]
  %v49 = vld [vmem:[%s1 + $0x78] sm:$0xf]
  %v50 = vld [vmem:[%s1 + $0x7c] sm:$0xf]
  %v55 = vunpack.c.l.b16 %v15
  %v56 = vunpack.c.h.b16 %v15
  %v57 = vunpack.c.l.b16 %v16
  %v58 = vunpack.c.h.b16 %v16
  %v59 = vunpack.c.l.b16 %v17
  %v60 = vunpack.c.h.b16 %v17
  %v61 = vunpack.c.l.b16 %v18
  %v62 = vunpack.c.h.b16 %v18
  %v63 = vpack.c.b16 %v57, %v55
  %v64 = vpack.c.b16 %v58, %v56
  %v65 = vpack.c.b16 %v61, %v59
  %v66 = vpack.c.b16 %v62, %v60
  %v103 = vunpack.c.l.b16 %v19
  %v104 = vunpack.c.l.b16 %v20
  %v105 = vunpack.c.l.b16 %v21
  %v106 = vunpack.c.l.b16 %v22
  %v107 = vunpack.c.l.b16 %v23
  %v108 = vunpack.c.l.b16 %v24
  %v109 = vunpack.c.l.b16 %v25
  %v110 = vunpack.c.l.b16 %v26
  %v111 = vunpack.c.l.b16 %v27
  %v112 = vunpack.c.l.b16 %v28
  %v113 = vunpack.c.l.b16 %v29
  %v114 = vunpack.c.l.b16 %v30
  %v115 = vunpack.c.l.b16 %v31
  %v116 = vunpack.c.l.b16 %v32
  %v117 = vunpack.c.l.b16 %v33
  %v118 = vunpack.c.l.b16 %v34
  %v119 = vunpack.c.l.b16 %v35
  %v120 = vunpack.c.l.b16 %v36
  %v121 = vunpack.c.l.b16 %v37
  %v122 = vunpack.c.l.b16 %v38
  %v123 = vunpack.c.l.b16 %v39
  %v124 = vunpack.c.l.b16 %v40
  %v125 = vunpack.c.l.b16 %v41
  %v126 = vunpack.c.l.b16 %v42
  %v127 = vunpack.c.l.b16 %v43
  %v128 = vunpack.c.l.b16 %v44
  %v129 = vunpack.c.l.b16 %v45
  %v130 = vunpack.c.l.b16 %v46
  %v131 = vunpack.c.l.b16 %v47
  %v132 = vunpack.c.l.b16 %v48
  %v133 = vunpack.c.l.b16 %v49
  %v134 = vunpack.c.l.b16 %v50
  %v135 = vpack.c.b16 %v104, %v103
  %v136 = vpack.c.b16 %v106, %v105
  %v137 = vpack.c.b16 %v108, %v107
  %v138 = vpack.c.b16 %v110, %v109
  %v139 = vpack.c.b16 %v112, %v111
  %v140 = vpack.c.b16 %v114, %v113
  %v141 = vpack.c.b16 %v116, %v115
  %v142 = vpack.c.b16 %v118, %v117
  %v143 = vpack.c.b16 %v120, %v119
  %v144 = vpack.c.b16 %v122, %v121
  %v145 = vpack.c.b16 %v124, %v123
  %v146 = vpack.c.b16 %v126, %v125
  %v147 = vpack.c.b16 %v128, %v127
  %v148 = vpack.c.b16 %v130, %v129
  %v149 = vpack.c.b16 %v132, %v131
  %v150 = vpack.c.b16 %v134, %v133
  %167 = vmatprep.subr.bf16.mxu0 0
  %168 = vmatpush1.bf16.msra.mxu0 %v142
  %169 = vmatprep.subr.bf16.mxu0 0
  %170 = vmatpush1.bf16.msra.mxu0 %v141
  %171 = vmatprep.subr.bf16.mxu0 0
  %172 = vmatpush1.bf16.msra.mxu0 %v140
  %173 = vmatprep.subr.bf16.mxu0 0
  %174 = vmatpush1.bf16.msra.mxu0 %v139
  %175 = vmatprep.subr.bf16.mxu0 0
  %176 = vmatpush1.bf16.msra.mxu0 %v138
  %177 = vmatprep.subr.bf16.mxu0 0
  %178 = vmatpush1.bf16.msra.mxu0 %v137
  %179 = vmatprep.subr.bf16.mxu0 0
  %180 = vmatpush1.bf16.msra.mxu0 %v136
  %181 = vmatprep.subr.bf16.mxu0 0
  %182 = vmatpush1.bf16.msra.mxu0 %v135
  %183 = vmatprep.subr.bf16.mxu0 0
  %184 = vmatpush2.bf16.msra.mxu0 %v150
  %185 = vmatprep.subr.bf16.mxu0 0
  %186 = vmatpush2.bf16.msra.mxu0 %v149
  %187 = vmatprep.subr.bf16.mxu0 0
  %188 = vmatpush2.bf16.msra.mxu0 %v148
  %189 = vmatprep.subr.bf16.mxu0 0
  %190 = vmatpush2.bf16.msra.mxu0 %v147
  %191 = vmatprep.subr.bf16.mxu0 0
  %192 = vmatpush2.bf16.msra.mxu0 %v146
  %193 = vmatprep.subr.bf16.mxu0 0
  %194 = vmatpush2.bf16.msra.mxu0 %v145
  %195 = vmatprep.subr.bf16.mxu0 0
  %196 = vmatpush2.bf16.msra.mxu0 %v144
  %197 = vmatprep.subr.bf16.mxu0 0
  %198 = vmatpush2.bf16.msra.mxu0 %v143
  %199 = vmatprep.mubr.bf16.mxu0 %v64
  %200 = vmatmul.mubr.bf16.gmra.mxu0 %v63
  %v201 = vpop.f32.mrf.mxu0
  %v202 = vadd.f32 0.0, %v201
  %v203 = vpop.f32.mrf.mxu0
  %v204 = vpop.f32.mrf.mxu0
  %v205 = vadd.f32 0.0, %v204
  %v206 = vpop.f32.mrf.mxu0
  %207 = vmatprep.mubr.bf16.mxu0 %v66
  %208 = vmatmul.mubr.bf16.gmra.mxu0 %v65
  %v209 = vpop.f32.mrf.mxu0
  %v210 = vadd.f32 0.0, %v209
  %v211 = vpop.f32.mrf.mxu0
  %v212 = vpop.f32.mrf.mxu0
  %v213 = vadd.f32 0.0, %v212
  %v214 = vpop.f32.mrf.mxu0
  %215 = vdwg.mxu0
  %v216 = vpack.c.bf16 %v205, %v202
  %v217 = vpack.c.bf16 %v213, %v210
  %v220 = vunpack.c.l.b16 %v216
  %v221 = vunpack.c.h.b16 %v216
  %v222 = vunpack.c.l.b16 %v217
  %v223 = vunpack.c.h.b16 %v217
  %v224 = vpack.c.b16 %v220, %v220
  %v225 = vpack.c.b16 %v221, %v221
  %v226 = vpack.c.b16 %v222, %v222
  %v227 = vpack.c.b16 %v223, %v223
  %232 = vst [vmem:[%s2] sm:$0xf] %v224
  %233 = vst [vmem:[%s2 + $0x4] sm:$0xf] %v225
  %234 = vst [vmem:[%s2 + $0x8] sm:$0xf] %v226
  %235 = vst [vmem:[%s2 + $0xc] sm:$0xf] %v227
  %236 = vadd.xlane.f32.xlu0 %v202
  %v237 = vpop.xlane.xlu0 %236
  %238 = vadd.xlane.f32.xlu0 %v205
  %v239 = vpop.xlane.xlu0 %238
  %240 = vadd.xlane.f32.xlu0 %v210
  %v241 = vpop.xlane.xlu0 %240
  %242 = vadd.xlane.f32.xlu0 %v213
  %v243 = vpop.xlane.xlu0 %242
  %vm244 = vcmask 7168
  %245 = vst.msk [vmem:[%s3] sm:$0xff] %vm244, %v237
  %246 = vst.msk [vmem:[%s3 + $0x8] sm:$0xff] %vm244, %v239
  %247 = vst.msk [vmem:[%s3 + $0x10] sm:$0xff] %vm244, %v241
  %248 = vst.msk [vmem:[%s3 + $0x18] sm:$0xff] %vm244, %v243
  %v249 = vmul.f32 %v202, %v202
  %v250 = vmul.f32 %v205, %v205
  %v251 = vmul.f32 %v210, %v210
  %v252 = vmul.f32 %v213, %v213
  %253 = vadd.xlane.f32.xlu0 %v249
  %v254 = vpop.xlane.xlu0 %253
  %255 = vadd.xlane.f32.xlu0 %v250
  %v256 = vpop.xlane.xlu0 %255
  %257 = vadd.xlane.f32.xlu0 %v251
  %v258 = vpop.xlane.xlu0 %257
  %259 = vadd.xlane.f32.xlu0 %v252
  %v260 = vpop.xlane.xlu0 %259
  %261 = vst.msk [vmem:[%s4] sm:$0xff] %vm244, %v254
  %262 = vst.msk [vmem:[%s4 + $0x8] sm:$0xff] %vm244, %v256
  %263 = vst.msk [vmem:[%s4 + $0x10] sm:$0xff] %vm244, %v258
  %264 = vst.msk [vmem:[%s4 + $0x18] sm:$0xff] %vm244, %v260
  // Predicated region
  $region10: #{discriminator_forward.11} parent=0 // pred_check
    _
  $region11: #{discriminator_forward.11} parent=0 // pred_check_branch
    %266 = sbr.rel (0) target = $region13
  $region12: #{discriminator_forward.11} parent=0 // pred_region
    _
  $region13: #{discriminator_forward.11} parent=0 // pred_fallthru
    _
  // Predicated region
  $region14: #{discriminator_forward.11} parent=0 // pred_check
    _
  $region15: #{discriminator_forward.11} parent=0 // pred_check_branch
    %268 = sbr.rel (0) target = $region17
  $region16: #{discriminator_forward.11} parent=0 // pred_region
    _
  $region17: #{discriminator_forward.11} parent=0 // pred_fallthru
    _
  // Predicated region
  $region18: #{discriminator_forward.11} parent=0 // pred_check
    _
  $region19: #{discriminator_forward.11} parent=0 // pred_check_branch
    %270 = sbr.rel (0) target = $region21
  $region20: #{discriminator_forward.11} parent=0 // pred_region
    _
  $region21: #{discriminator_forward.11} parent=0 // pred_fallthru
    _
  // Predicated region
  $region22: #{discriminator_forward.11} parent=0 // pred_check
    _
  $region23: #{discriminator_forward.11} parent=0 // pred_check_branch
    %272 = sbr.rel (0) target = $region25
  $region24: #{discriminator_forward.11} parent=0 // pred_region
    _
  $region25: #{discriminator_forward.11} parent=0 // pred_fallthru
    _
  // Predicated region
  $region26: #{discriminator_forward.11} parent=0 // pred_check
    _
  $region27: #{discriminator_forward.11} parent=0 // pred_check_branch
    %274 = sbr.rel (0) target = $region29
  $region28: #{discriminator_forward.11} parent=0 // pred_region
    _
  $region29: #{discriminator_forward.11} parent=0 // pred_fallthru
    _
  // Predicated region
  $region30: #{discriminator_forward.11} parent=0 // pred_check
    _
  $region31: #{discriminator_forward.11} parent=0 // pred_check_branch
    %276 = sbr.rel (0) target = $region33
  $region32: #{discriminator_forward.11} parent=0 // pred_region
    _
  $region33: #{discriminator_forward.11} parent=0 // pred_fallthru
    _

// kernel: discriminator_forward.12
$region0: #{discriminator_forward.12}
  #allocation0 [shape = 'u32[]', space=smem, size = 0x4, offset = 0x4, fixed_abs, tag = 'smem constant byte address 0x4 - core index']
  #allocation1 [shape = 'u32[144,128]{1,0:T(1,128)}', space=vmem, size = 0x12000, scoped, tag = 'internal scratch']
  %s0 = inlined_call_operand.vmem [shape: bf16[32,128], index: 0, kind: input, shape index: {}]
  %s1 = inlined_call_operand.vmem [shape: f32[32,1], index: 1, kind: input, shape index: {}]
  %s2 = inlined_call_operand.vmem [shape: f32[32,1], index: 2, kind: input, shape index: {}]
  %s3 = inlined_call_operand.vmem [shape: bf16[32,128], index: 3, kind: output, shape index: {}]
  %s4 = sld [smem:[#allocation0]]
  $region22: #{discriminator_forward.12} parent=0
    _
  %s6 = ssub.s32 1, %s4
  %s7 = scalar_select 0, %s6, %s4
  // Predicated region
  $region2: #{discriminator_forward.12} parent=0 // pred_check
    _
  $region3: #{discriminator_forward.12} parent=0 // pred_check_branch
    %9 = sbr.rel (0) target = $region5
  $region4: #{discriminator_forward.12} parent=0 // pred_region
    _
  $region5: #{discriminator_forward.12} parent=0 // pred_fallthru
    _
  // Predicated region
  $region6: #{discriminator_forward.12} parent=0 // pred_check
    _
  $region7: #{discriminator_forward.12} parent=0 // pred_check_branch
    %11 = sbr.rel (0) target = $region9
  $region8: #{discriminator_forward.12} parent=0 // pred_region
    _
  $region9: #{discriminator_forward.12} parent=0 // pred_fallthru
    _
  // Predicated region
  $region10: #{discriminator_forward.12} parent=0 // pred_check
    _
  $region11: #{discriminator_forward.12} parent=0 // pred_check_branch
    %13 = sbr.rel (0) target = $region13
  $region12: #{discriminator_forward.12} parent=0 // pred_region
    _
  $region13: #{discriminator_forward.12} parent=0 // pred_fallthru
    _
  %v14 = vld [vmem:[%s0] sm:$0xf]
  %v15 = vld [vmem:[%s0 + $0x4] sm:$0xf]
  %v16 = vld [vmem:[%s0 + $0x8] sm:$0xf]
  %v17 = vld [vmem:[%s0 + $0xc] sm:$0xf]
  %v18 = vunpack.c.l.bf16 %v14
  %v19 = vunpack.c.l.bf16 %v15
  %v20 = vunpack.c.l.bf16 %v16
  %v21 = vunpack.c.l.bf16 %v17
  %v22 = vld [vmem:[%s1] sm:$0xff]
  %v23 = vld [vmem:[%s1 + $0x8] sm:$0xff]
  %v24 = vld [vmem:[%s1 + $0x10] sm:$0xff]
  %v25 = vld [vmem:[%s1 + $0x18] sm:$0xff]
  %27 = vset.pattern.permute.xlu0 0
  %28 = vperm.xlu0 %27, %v22
  %v29 = vpop.permute.xlu0 %28
  %32 = vset.pattern.permute.xlu0 0
  %33 = vperm.xlu0 %32, %v23
  %v34 = vpop.permute.xlu0 %33
  %37 = vset.pattern.permute.xlu0 0
  %38 = vperm.xlu0 %37, %v24
  %v39 = vpop.permute.xlu0 %38
  %42 = vset.pattern.permute.xlu0 0
  %43 = vperm.xlu0 %42, %v25
  %v44 = vpop.permute.xlu0 %43
  %v46 = vmul.f32 %v18, %v29
  %v47 = vmul.f32 %v19, %v34
  %v48 = vmul.f32 %v20, %v39
  %v49 = vmul.f32 %v21, %v44
  %v50 = vld [vmem:[%s2] sm:$0xff]
  %v51 = vld [vmem:[%s2 + $0x8] sm:$0xff]
  %v52 = vld [vmem:[%s2 + $0x10] sm:$0xff]
  %v53 = vld [vmem:[%s2 + $0x18] sm:$0xff]
  %55 = vset.pattern.permute.xlu0 0
  %56 = vperm.xlu0 %55, %v50
  %v57 = vpop.permute.xlu0 %56
  %60 = vset.pattern.permute.xlu0 0
  %61 = vperm.xlu0 %60, %v51
  %v62 = vpop.permute.xlu0 %61
  %65 = vset.pattern.permute.xlu0 0
  %66 = vperm.xlu0 %65, %v52
  %v67 = vpop.permute.xlu0 %66
  %70 = vset.pattern.permute.xlu0 0
  %71 = vperm.xlu0 %70, %v53
  %v72 = vpop.permute.xlu0 %71
  %v74 = vadd.f32 %v46, %v57
  %v75 = vadd.f32 %v47, %v62
  %v76 = vadd.f32 %v48, %v67
  %v77 = vadd.f32 %v49, %v72
  %vm78 = vcmp.ge.f32.partialorder %v74, 0.0
  %vm79 = vcmp.ge.f32.partialorder %v75, 0.0
  %vm80 = vcmp.ge.f32.partialorder %v76, 0.0
  %vm81 = vcmp.ge.f32.partialorder %v77, 0.0
  %v82 = vmul.f32 %v74, 0.2
  %v83 = vmul.f32 %v75, 0.2
  %v84 = vmul.f32 %v76, 0.2
  %v85 = vmul.f32 %v77, 0.2
  %v86 = vsel %vm78, %v74, %v82
  %v87 = vsel %vm79, %v75, %v83
  %v88 = vsel %vm80, %v76, %v84
  %v89 = vsel %vm81, %v77, %v85
  %v90 = vpack.c.bf16 %v87, %v86
  %v91 = vpack.c.bf16 %v89, %v88
  %v94 = vunpack.c.l.b16 %v90
  %v95 = vunpack.c.h.b16 %v90
  %v96 = vunpack.c.l.b16 %v91
  %v97 = vunpack.c.h.b16 %v91
  %v98 = vpack.c.b16 %v94, %v94
  %v99 = vpack.c.b16 %v95, %v95
  %v100 = vpack.c.b16 %v96, %v96
  %v101 = vpack.c.b16 %v97, %v97
  %106 = vst [vmem:[%s3] sm:$0xf] %v98
  %107 = vst [vmem:[%s3 + $0x4] sm:$0xf] %v99
  %108 = vst [vmem:[%s3 + $0x8] sm:$0xf] %v100
  %109 = vst [vmem:[%s3 + $0xc] sm:$0xf] %v101
  // Predicated region
  $region14: #{discriminator_forward.12} parent=0 // pred_check
    _
  $region15: #{discriminator_forward.12} parent=0 // pred_check_branch
    %111 = sbr.rel (0) target = $region17
  $region16: #{discriminator_forward.12} parent=0 // pred_region
    _
  $region17: #{discriminator_forward.12} parent=0 // pred_fallthru
    _
  // Predicated region
  $region18: #{discriminator_forward.12} parent=0 // pred_check
    _
  $region19: #{discriminator_forward.12} parent=0 // pred_check_branch
    %113 = sbr.rel (0) target = $region21
  $region20: #{discriminator_forward.12} parent=0 // pred_region
    _
  $region21: #{discriminator_forward.12} parent=0 // pred_fallthru
    _

// kernel: discriminator_forward.14
$region0: #{discriminator_forward.14}
  #allocation0 [shape = 'u32[]', space=smem, size = 0x4, offset = 0x4, fixed_abs, tag = 'smem constant byte address 0x4 - core index']
  #allocation1 [shape = 'u32[144,128]{1,0:T(1,128)}', space=vmem, size = 0x12000, scoped, tag = 'internal scratch']
  %s0 = inlined_call_operand.vmem [shape: bf16[64,32], index: 0, kind: input, shape index: {}]
  %s1 = inlined_call_operand.vmem [shape: f32[64,1], index: 1, kind: input, shape index: {}]
  %s2 = inlined_call_operand.vmem [shape: f32[64,1], index: 2, kind: input, shape index: {}]
  %s3 = inlined_call_operand.vmem [shape: bf16[64,32], index: 3, kind: output, shape index: {}]
  %s4 = sld [smem:[#allocation0]]
  $region22: #{discriminator_forward.14} parent=0
    _
  %s6 = ssub.s32 1, %s4
  %s7 = scalar_select 0, %s6, %s4
  // Predicated region
  $region2: #{discriminator_forward.14} parent=0 // pred_check
    _
  $region3: #{discriminator_forward.14} parent=0 // pred_check_branch
    %9 = sbr.rel (0) target = $region5
  $region4: #{discriminator_forward.14} parent=0 // pred_region
    _
  $region5: #{discriminator_forward.14} parent=0 // pred_fallthru
    _
  // Predicated region
  $region6: #{discriminator_forward.14} parent=0 // pred_check
    _
  $region7: #{discriminator_forward.14} parent=0 // pred_check_branch
    %11 = sbr.rel (0) target = $region9
  $region8: #{discriminator_forward.14} parent=0 // pred_region
    _
  $region9: #{discriminator_forward.14} parent=0 // pred_fallthru
    _
  // Predicated region
  $region10: #{discriminator_forward.14} parent=0 // pred_check
    _
  $region11: #{discriminator_forward.14} parent=0 // pred_check_branch
    %13 = sbr.rel (0) target = $region13
  $region12: #{discriminator_forward.14} parent=0 // pred_region
    _
  $region13: #{discriminator_forward.14} parent=0 // pred_fallthru
    _
  %v14 = vld [vmem:[%s0] sm:$0xf]
  %v15 = vld [vmem:[%s0 + $0x4] sm:$0xf]
  %v16 = vld [vmem:[%s0 + $0x8] sm:$0xf]
  %v17 = vld [vmem:[%s0 + $0xc] sm:$0xf]
  %v18 = vld [vmem:[%s0 + $0x10] sm:$0xf]
  %v19 = vld [vmem:[%s0 + $0x14] sm:$0xf]
  %v20 = vld [vmem:[%s0 + $0x18] sm:$0xf]
  %v21 = vld [vmem:[%s0 + $0x1c] sm:$0xf]
  %v22 = vunpack.c.l.bf16 %v14
  %v23 = vunpack.c.l.bf16 %v15
  %v24 = vunpack.c.l.bf16 %v16
  %v25 = vunpack.c.l.bf16 %v17
  %v26 = vunpack.c.l.bf16 %v18
  %v27 = vunpack.c.l.bf16 %v19
  %v28 = vunpack.c.l.bf16 %v20
  %v29 = vunpack.c.l.bf16 %v21
  %v30 = vld [vmem:[%s1] sm:$0xff]
  %v31 = vld [vmem:[%s1 + $0x8] sm:$0xff]
  %v32 = vld [vmem:[%s1 + $0x10] sm:$0xff]
  %v33 = vld [vmem:[%s1 + $0x18] sm:$0xff]
  %v34 = vld [vmem:[%s1 + $0x20] sm:$0xff]
  %v35 = vld [vmem:[%s1 + $0x28] sm:$0xff]
  %v36 = vld [vmem:[%s1 + $0x30] sm:$0xff]
  %v37 = vld [vmem:[%s1 + $0x38] sm:$0xff]
  %39 = vset.pattern.permute.xlu0 0
  %40 = vperm.xlu0 %39, %v30
  %v41 = vpop.permute.xlu0 %40
  %44 = vset.pattern.permute.xlu0 0
  %45 = vperm.xlu0 %44, %v31
  %v46 = vpop.permute.xlu0 %45
  %49 = vset.pattern.permute.xlu0 0
  %50 = vperm.xlu0 %49, %v32
  %v51 = vpop.permute.xlu0 %50
  %54 = vset.pattern.permute.xlu0 0
  %55 = vperm.xlu0 %54, %v33
  %v56 = vpop.permute.xlu0 %55
  %59 = vset.pattern.permute.xlu0 0
  %60 = vperm.xlu0 %59, %v34
  %v61 = vpop.permute.xlu0 %60
  %64 = vset.pattern.permute.xlu0 0
  %65 = vperm.xlu0 %64, %v35
  %v66 = vpop.permute.xlu0 %65
  %69 = vset.pattern.permute.xlu0 0
  %70 = vperm.xlu0 %69, %v36
  %v71 = vpop.permute.xlu0 %70
  %74 = vset.pattern.permute.xlu0 0
  %75 = vperm.xlu0 %74, %v37
  %v76 = vpop.permute.xlu0 %75
  %v78 = vmul.f32 %v22, %v41
  %v79 = vmul.f32 %v23, %v46
  %v80 = vmul.f32 %v24, %v51
  %v81 = vmul.f32 %v25, %v56
  %v82 = vmul.f32 %v26, %v61
  %v83 = vmul.f32 %v27, %v66
  %v84 = vmul.f32 %v28, %v71
  %v85 = vmul.f32 %v29, %v76
  %v86 = vld [vmem:[%s2] sm:$0xff]
  %v87 = vld [vmem:[%s2 + $0x8] sm:$0xff]
  %v88 = vld [vmem:[%s2 + $0x10] sm:$0xff]
  %v89 = vld [vmem:[%s2 + $0x18] sm:$0xff]
  %v90 = vld [vmem:[%s2 + $0x20] sm:$0xff]
  %v91 = vld [vmem:[%s2 + $0x28] sm:$0xff]
  %v92 = vld [vmem:[%s2 + $0x30] sm:$0xff]
  %v93 = vld [vmem:[%s2 + $0x38] sm:$0xff]
  %95 = vset.pattern.permute.xlu0 0
  %96 = vperm.xlu0 %95, %v86
  %v97 = vpop.permute.xlu0 %96
  %100 = vset.pattern.permute.xlu0 0
  %101 = vperm.xlu0 %100, %v87
  %v102 = vpop.permute.xlu0 %101
  %105 = vset.pattern.permute.xlu0 0
  %106 = vperm.xlu0 %105, %v88
  %v107 = vpop.permute.xlu0 %106
  %110 = vset.pattern.permute.xlu0 0
  %111 = vperm.xlu0 %110, %v89
  %v112 = vpop.permute.xlu0 %111
  %115 = vset.pattern.permute.xlu0 0
  %116 = vperm.xlu0 %115, %v90
  %v117 = vpop.permute.xlu0 %116
  %120 = vset.pattern.permute.xlu0 0
  %121 = vperm.xlu0 %120, %v91
  %v122 = vpop.permute.xlu0 %121
  %125 = vset.pattern.permute.xlu0 0
  %126 = vperm.xlu0 %125, %v92
  %v127 = vpop.permute.xlu0 %126
  %130 = vset.pattern.permute.xlu0 0
  %131 = vperm.xlu0 %130, %v93
  %v132 = vpop.permute.xlu0 %131
  %v134 = vadd.f32 %v78, %v97
  %v135 = vadd.f32 %v79, %v102
  %v136 = vadd.f32 %v80, %v107
  %v137 = vadd.f32 %v81, %v112
  %v138 = vadd.f32 %v82, %v117
  %v139 = vadd.f32 %v83, %v122
  %v140 = vadd.f32 %v84, %v127
  %v141 = vadd.f32 %v85, %v132
  %vm142 = vcmp.ge.f32.partialorder %v134, 0.0
  %vm143 = vcmp.ge.f32.partialorder %v135, 0.0
  %vm144 = vcmp.ge.f32.partialorder %v136, 0.0
  %vm145 = vcmp.ge.f32.partialorder %v137, 0.0
  %vm146 = vcmp.ge.f32.partialorder %v138, 0.0
  %vm147 = vcmp.ge.f32.partialorder %v139, 0.0
  %vm148 = vcmp.ge.f32.partialorder %v140, 0.0
  %vm149 = vcmp.ge.f32.partialorder %v141, 0.0
  %v150 = vmul.f32 %v134, 0.2
  %v151 = vmul.f32 %v135, 0.2
  %v152 = vmul.f32 %v136, 0.2
  %v153 = vmul.f32 %v137, 0.2
  %v154 = vmul.f32 %v138, 0.2
  %v155 = vmul.f32 %v139, 0.2
  %v156 = vmul.f32 %v140, 0.2
  %v157 = vmul.f32 %v141, 0.2
  %v158 = vsel %vm142, %v134, %v150
  %v159 = vsel %vm143, %v135, %v151
  %v160 = vsel %vm144, %v136, %v152
  %v161 = vsel %vm145, %v137, %v153
  %v162 = vsel %vm146, %v138, %v154
  %v163 = vsel %vm147, %v139, %v155
  %v164 = vsel %vm148, %v140, %v156
  %v165 = vsel %vm149, %v141, %v157
  %v166 = vpack.c.bf16 %v159, %v158
  %v167 = vpack.c.bf16 %v161, %v160
  %v168 = vpack.c.bf16 %v163, %v162
  %v169 = vpack.c.bf16 %v165, %v164
  %v174 = vunpack.c.l.b16 %v166
  %v175 = vunpack.c.h.b16 %v166
  %v176 = vunpack.c.l.b16 %v167
  %v177 = vunpack.c.h.b16 %v167
  %v178 = vunpack.c.l.b16 %v168
  %v179 = vunpack.c.h.b16 %v168
  %v180 = vunpack.c.l.b16 %v169
  %v181 = vunpack.c.h.b16 %v169
  %v182 = vpack.c.b16 %v174, %v174
  %v183 = vpack.c.b16 %v175, %v175
  %v184 = vpack.c.b16 %v176, %v176
  %v185 = vpack.c.b16 %v177, %v177
  %v186 = vpack.c.b16 %v178, %v178
  %v187 = vpack.c.b16 %v179, %v179
  %v188 = vpack.c.b16 %v180, %v180
  %v189 = vpack.c.b16 %v181, %v181
  %vm198 = vcmask 257024
  %199 = vst.msk [vmem:[%s3] sm:$0xf] %vm198, %v182
  %200 = vst.msk [vmem:[%s3 + $0x4] sm:$0xf] %vm198, %v183
  %201 = vst.msk [vmem:[%s3 + $0x8] sm:$0xf] %vm198, %v184
  %202 = vst.msk [vmem:[%s3 + $0xc] sm:$0xf] %vm198, %v185
  %203 = vst.msk [vmem:[%s3 + $0x10] sm:$0xf] %vm198, %v186
  %204 = vst.msk [vmem:[%s3 + $0x14] sm:$0xf] %vm198, %v187
  %205 = vst.msk [vmem:[%s3 + $0x18] sm:$0xf] %vm198, %v188
  %206 = vst.msk [vmem:[%s3 + $0x1c] sm:$0xf] %vm198, %v189
  // Predicated region
  $region14: #{discriminator_forward.14} parent=0 // pred_check
    _
  $region15: #{discriminator_forward.14} parent=0 // pred_check_branch
    %208 = sbr.rel (0) target = $region17
  $region16: #{discriminator_forward.14} parent=0 // pred_region
    _
  $region17: #{discriminator_forward.14} parent=0 // pred_fallthru
    _
  // Predicated region
  $region18: #{discriminator_forward.14} parent=0 // pred_check
    _
  $region19: #{discriminator_forward.14} parent=0 // pred_check_branch
    %210 = sbr.rel (0) target = $region21
  $region20: #{discriminator_forward.14} parent=0 // pred_region
    _
  $region21: #{discriminator_forward.14} parent=0 // pred_fallthru
    _

// kernel: discriminator_forward.13
$region0: #{discriminator_forward.13}
  #allocation0 [shape = 'u32[]', space=smem, size = 0x4, offset = 0x4, fixed_abs, tag = 'smem constant byte address 0x4 - core index']
  #allocation1 [shape = 'u32[144,128]{1,0:T(1,128)}', space=vmem, size = 0x12000, scoped, tag = 'internal scratch']
  %s0 = inlined_call_operand.vmem [shape: bf16[64,512], index: 0, kind: input, shape index: {}]
  %s1 = inlined_call_operand.vmem [shape: bf16[512,32], index: 1, kind: input, shape index: {}]
  %s2 = inlined_call_operand.vmem [shape: bf16[64,32], index: 2, kind: output, shape index: {0}]
  %s3 = inlined_call_operand.vmem [shape: f32[1,64,1], index: 3, kind: output, shape index: {1}]
  %s4 = inlined_call_operand.vmem [shape: f32[1,64,1], index: 4, kind: output, shape index: {2}]
  %5 = xla_tuple %s2, %s3, %s4
  %s6 = sld [smem:[#allocation0]]
  $region34: #{discriminator_forward.13} parent=0
    _
  %s8 = ssub.s32 1, %s6
  %s9 = scalar_select 0, %s8, %s6
  // Predicated region
  $region2: #{discriminator_forward.13} parent=0 // pred_check
    _
  $region3: #{discriminator_forward.13} parent=0 // pred_check_branch
    %11 = sbr.rel (0) target = $region5
  $region4: #{discriminator_forward.13} parent=0 // pred_region
    _
  $region5: #{discriminator_forward.13} parent=0 // pred_fallthru
    _
  // Predicated region
  $region6: #{discriminator_forward.13} parent=0 // pred_check
    _
  $region7: #{discriminator_forward.13} parent=0 // pred_check_branch
    %13 = sbr.rel (0) target = $region9
  $region8: #{discriminator_forward.13} parent=0 // pred_region
    _
  $region9: #{discriminator_forward.13} parent=0 // pred_fallthru
    _
  %v15 = vld [vmem:[%s0] sm:$0xff]
  %v16 = vld [vmem:[%s0 + $0x8] sm:$0xff]
  %v17 = vld [vmem:[%s0 + $0x10] sm:$0xff]
  %v18 = vld [vmem:[%s0 + $0x18] sm:$0xff]
  %v19 = vld [vmem:[%s0 + $0x20] sm:$0xff]
  %v20 = vld [vmem:[%s0 + $0x28] sm:$0xff]
  %v21 = vld [vmem:[%s0 + $0x30] sm:$0xff]
  %v22 = vld [vmem:[%s0 + $0x38] sm:$0xff]
  %v23 = vld [vmem:[%s0 + $0x40] sm:$0xff]
  %v24 = vld [vmem:[%s0 + $0x48] sm:$0xff]
  %v25 = vld [vmem:[%s0 + $0x50] sm:$0xff]
  %v26 = vld [vmem:[%s0 + $0x58] sm:$0xff]
  %v27 = vld [vmem:[%s0 + $0x60] sm:$0xff]
  %v28 = vld [vmem:[%s0 + $0x68] sm:$0xff]
  %v29 = vld [vmem:[%s0 + $0x70] sm:$0xff]
  %v30 = vld [vmem:[%s0 + $0x78] sm:$0xff]
  %v31 = vld [vmem:[%s1] sm:$0xf]
  %v32 = vld [vmem:[%s1 + $0x4] sm:$0xf]
  %v33 = vld [vmem:[%s1 + $0x8] sm:$0xf]
  %v34 = vld [vmem:[%s1 + $0xc] sm:$0xf]
  %v35 = vld [vmem:[%s1 + $0x10] sm:$0xf]
  %v36 = vld [vmem:[%s1 + $0x14] sm:$0xf]
  %v37 = vld [vmem:[%s1 + $0x18] sm:$0xf]
  %v38 = vld [vmem:[%s1 + $0x1c] sm:$0xf]
  %v39 = vld [vmem:[%s1 + $0x20] sm:$0xf]
  %v40 = vld [vmem:[%s1 + $0x24] sm:$0xf]
  %v41 = vld [vmem:[%s1 + $0x28] sm:$0xf]
  %v42 = vld [vmem:[%s1 + $0x2c] sm:$0xf]
  %v43 = vld [vmem:[%s1 + $0x30] sm:$0xf]
  %v44 = vld [vmem:[%s1 + $0x34] sm:$0xf]
  %v45 = vld [vmem:[%s1 + $0x38] sm:$0xf]
  %v46 = vld [vmem:[%s1 + $0x3c] sm:$0xf]
  %v47 = vld [vmem:[%s1 + $0x40] sm:$0xf]
  %v48 = vld [vmem:[%s1 + $0x44] sm:$0xf]
  %v49 = vld [vmem:[%s1 + $0x48] sm:$0xf]
  %v50 = vld [vmem:[%s1 + $0x4c] sm:$0xf]
  %v51 = vld [vmem:[%s1 + $0x50] sm:$0xf]
  %v52 = vld [vmem:[%s1 + $0x54] sm:$0xf]
  %v53 = vld [vmem:[%s1 + $0x58] sm:$0xf]
  %v54 = vld [vmem:[%s1 + $0x5c] sm:$0xf]
  %v55 = vld [vmem:[%s1 + $0x60] sm:$0xf]
  %v56 = vld [vmem:[%s1 + $0x64] sm:$0xf]
  %v57 = vld [vmem:[%s1 + $0x68] sm:$0xf]
  %v58 = vld [vmem:[%s1 + $0x6c] sm:$0xf]
  %v59 = vld [vmem:[%s1 + $0x70] sm:$0xf]
  %v60 = vld [vmem:[%s1 + $0x74] sm:$0xf]
  %v61 = vld [vmem:[%s1 + $0x78] sm:$0xf]
  %v62 = vld [vmem:[%s1 + $0x7c] sm:$0xf]
  %v63 = vld [vmem:[%s1 + $0x80] sm:$0xf]
  %v64 = vld [vmem:[%s1 + $0x84] sm:$0xf]
  %v65 = vld [vmem:[%s1 + $0x88] sm:$0xf]
  %v66 = vld [vmem:[%s1 + $0x8c] sm:$0xf]
  %v67 = vld [vmem:[%s1 + $0x90] sm:$0xf]
  %v68 = vld [vmem:[%s1 + $0x94] sm:$0xf]
  %v69 = vld [vmem:[%s1 + $0x98] sm:$0xf]
  %v70 = vld [vmem:[%s1 + $0x9c] sm:$0xf]
  %v71 = vld [vmem:[%s1 + $0xa0] sm:$0xf]
  %v72 = vld [vmem:[%s1 + $0xa4] sm:$0xf]
  %v73 = vld [vmem:[%s1 + $0xa8] sm:$0xf]
  %v74 = vld [vmem:[%s1 + $0xac] sm:$0xf]
  %v75 = vld [vmem:[%s1 + $0xb0] sm:$0xf]
  %v76 = vld [vmem:[%s1 + $0xb4] sm:$0xf]
  %v77 = vld [vmem:[%s1 + $0xb8] sm:$0xf]
  %v78 = vld [vmem:[%s1 + $0xbc] sm:$0xf]
  %v79 = vld [vmem:[%s1 + $0xc0] sm:$0xf]
  %v80 = vld [vmem:[%s1 + $0xc4] sm:$0xf]
  %v81 = vld [vmem:[%s1 + $0xc8] sm:$0xf]
  %v82 = vld [vmem:[%s1 + $0xcc] sm:$0xf]
  %v83 = vld [vmem:[%s1 + $0xd0] sm:$0xf]
  %v84 = vld [vmem:[%s1 + $0xd4] sm:$0xf]
  %v85 = vld [vmem:[%s1 + $0xd8] sm:$0xf]
  %v86 = vld [vmem:[%s1 + $0xdc] sm:$0xf]
  %v87 = vld [vmem:[%s1 + $0xe0] sm:$0xf]
  %v88 = vld [vmem:[%s1 + $0xe4] sm:$0xf]
  %v89 = vld [vmem:[%s1 + $0xe8] sm:$0xf]
  %v90 = vld [vmem:[%s1 + $0xec] sm:$0xf]
  %v91 = vld [vmem:[%s1 + $0xf0] sm:$0xf]
  %v92 = vld [vmem:[%s1 + $0xf4] sm:$0xf]
  %v93 = vld [vmem:[%s1 + $0xf8] sm:$0xf]
  %v94 = vld [vmem:[%s1 + $0xfc] sm:$0xf]
  %v111 = vunpack.c.l.b16 %v15
  %v112 = vunpack.c.h.b16 %v15
  %v113 = vunpack.c.l.b16 %v16
  %v114 = vunpack.c.h.b16 %v16
  %v115 = vunpack.c.l.b16 %v17
  %v116 = vunpack.c.h.b16 %v17
  %v117 = vunpack.c.l.b16 %v18
  %v118 = vunpack.c.h.b16 %v18
  %v119 = vunpack.c.l.b16 %v19
  %v120 = vunpack.c.h.b16 %v19
  %v121 = vunpack.c.l.b16 %v20
  %v122 = vunpack.c.h.b16 %v20
  %v123 = vunpack.c.l.b16 %v21
  %v124 = vunpack.c.h.b16 %v21
  %v125 = vunpack.c.l.b16 %v22
  %v126 = vunpack.c.h.b16 %v22
  %v127 = vunpack.c.l.b16 %v23
  %v128 = vunpack.c.h.b16 %v23
  %v129 = vunpack.c.l.b16 %v24
  %v130 = vunpack.c.h.b16 %v24
  %v131 = vunpack.c.l.b16 %v25
  %v132 = vunpack.c.h.b16 %v25
  %v133 = vunpack.c.l.b16 %v26
  %v134 = vunpack.c.h.b16 %v26
  %v135 = vunpack.c.l.b16 %v27
  %v136 = vunpack.c.h.b16 %v27
  %v137 = vunpack.c.l.b16 %v28
  %v138 = vunpack.c.h.b16 %v28
  %v139 = vunpack.c.l.b16 %v29
  %v140 = vunpack.c.h.b16 %v29
  %v141 = vunpack.c.l.b16 %v30
  %v142 = vunpack.c.h.b16 %v30
  %v143 = vpack.c.b16 %v115, %v111
  %v144 = vpack.c.b16 %v116, %v112
  %v145 = vpack.c.b16 %v117, %v113
  %v146 = vpack.c.b16 %v118, %v114
  %v147 = vpack.c.b16 %v123, %v119
  %v148 = vpack.c.b16 %v124, %v120
  %v149 = vpack.c.b16 %v125, %v121
  %v150 = vpack.c.b16 %v126, %v122
  %v151 = vpack.c.b16 %v131, %v127
  %v152 = vpack.c.b16 %v132, %v128
  %v153 = vpack.c.b16 %v133, %v129
  %v154 = vpack.c.b16 %v134, %v130
  %v155 = vpack.c.b16 %v139, %v135
  %v156 = vpack.c.b16 %v140, %v136
  %v157 = vpack.c.b16 %v141, %v137
  %v158 = vpack.c.b16 %v142, %v138
  %v239 = vunpack.c.l.b16 %v31
  %v240 = vunpack.c.l.b16 %v32
  %v241 = vunpack.c.l.b16 %v33
  %v242 = vunpack.c.l.b16 %v34
  %v243 = vunpack.c.l.b16 %v35
  %v244 = vunpack.c.l.b16 %v36
  %v245 = vunpack.c.l.b16 %v37
  %v246 = vunpack.c.l.b16 %v38
  %v247 = vunpack.c.l.b16 %v39
  %v248 = vunpack.c.l.b16 %v40
  %v249 = vunpack.c.l.b16 %v41
  %v250 = vunpack.c.l.b16 %v42
  %v251 = vunpack.c.l.b16 %v43
  %v252 = vunpack.c.l.b16 %v44
  %v253 = vunpack.c.l.b16 %v45
  %v254 = vunpack.c.l.b16 %v46
  %v255 = vunpack.c.l.b16 %v47
  %v256 = vunpack.c.l.b16 %v48
  %v257 = vunpack.c.l.b16 %v49
  %v258 = vunpack.c.l.b16 %v50
  %v259 = vunpack.c.l.b16 %v51
  %v260 = vunpack.c.l.b16 %v52
  %v261 = vunpack.c.l.b16 %v53
  %v262 = vunpack.c.l.b16 %v54
  %v263 = vunpack.c.l.b16 %v55
  %v264 = vunpack.c.l.b16 %v56
  %v265 = vunpack.c.l.b16 %v57
  %v266 = vunpack.c.l.b16 %v58
  %v267 = vunpack.c.l.b16 %v59
  %v268 = vunpack.c.l.b16 %v60
  %v269 = vunpack.c.l.b16 %v61
  %v270 = vunpack.c.l.b16 %v62
  %v271 = vunpack.c.l.b16 %v63
  %v272 = vunpack.c.l.b16 %v64
  %v273 = vunpack.c.l.b16 %v65
  %v274 = vunpack.c.l.b16 %v66
  %v275 = vunpack.c.l.b16 %v67
  %v276 = vunpack.c.l.b16 %v68
  %v277 = vunpack.c.l.b16 %v69
  %v278 = vunpack.c.l.b16 %v70
  %v279 = vunpack.c.l.b16 %v71
  %v280 = vunpack.c.l.b16 %v72
  %v281 = vunpack.c.l.b16 %v73
  %v282 = vunpack.c.l.b16 %v74
  %v283 = vunpack.c.l.b16 %v75
  %v284 = vunpack.c.l.b16 %v76
  %v285 = vunpack.c.l.b16 %v77
  %v286 = vunpack.c.l.b16 %v78
  %v287 = vunpack.c.l.b16 %v79
  %v288 = vunpack.c.l.b16 %v80
  %v289 = vunpack.c.l.b16 %v81
  %v290 = vunpack.c.l.b16 %v82
  %v291 = vunpack.c.l.b16 %v83
  %v292 = vunpack.c.l.b16 %v84
  %v293 = vunpack.c.l.b16 %v85
  %v294 = vunpack.c.l.b16 %v86
  %v295 = vunpack.c.l.b16 %v87
  %v296 = vunpack.c.l.b16 %v88
  %v297 = vunpack.c.l.b16 %v89
  %v298 = vunpack.c.l.b16 %v90
  %v299 = vunpack.c.l.b16 %v91
  %v300 = vunpack.c.l.b16 %v92
  %v301 = vunpack.c.l.b16 %v93
  %v302 = vunpack.c.l.b16 %v94
  %v303 = vpack.c.b16 %v240, %v239
  %v304 = vpack.c.b16 %v242, %v241
  %v305 = vpack.c.b16 %v244, %v243
  %v306 = vpack.c.b16 %v246, %v245
  %v307 = vpack.c.b16 %v248, %v247
  %v308 = vpack.c.b16 %v250, %v249
  %v309 = vpack.c.b16 %v252, %v251
  %v310 = vpack.c.b16 %v254, %v253
  %v311 = vpack.c.b16 %v256, %v255
  %v312 = vpack.c.b16 %v258, %v257
  %v313 = vpack.c.b16 %v260, %v259
  %v314 = vpack.c.b16 %v262, %v261
  %v315 = vpack.c.b16 %v264, %v263
  %v316 = vpack.c.b16 %v266, %v265
  %v317 = vpack.c.b16 %v268, %v267
  %v318 = vpack.c.b16 %v270, %v269
  %v319 = vpack.c.b16 %v272, %v271
  %v320 = vpack.c.b16 %v274, %v273
  %v321 = vpack.c.b16 %v276, %v275
  %v322 = vpack.c.b16 %v278, %v277
  %v323 = vpack.c.b16 %v280, %v279
  %v324 = vpack.c.b16 %v282, %v281
  %v325 = vpack.c.b16 %v284, %v283
  %v326 = vpack.c.b16 %v286, %v285
  %v327 = vpack.c.b16 %v288, %v287
  %v328 = vpack.c.b16 %v290, %v289
  %v329 = vpack.c.b16 %v292, %v291
  %v330 = vpack.c.b16 %v294, %v293
  %v331 = vpack.c.b16 %v296, %v295
  %v332 = vpack.c.b16 %v298, %v297
  %v333 = vpack.c.b16 %v300, %v299
  %v334 = vpack.c.b16 %v302, %v301
  %367 = vmatprep.subr.bf16.mxu0 0
  %368 = vmatpush1.bf16.msra.mxu0 %v310
  %369 = vmatprep.subr.bf16.mxu0 0
  %370 = vmatpush1.bf16.msra.mxu0 %v309
  %371 = vmatprep.subr.bf16.mxu0 0
  %372 = vmatpush1.bf16.msra.mxu0 %v308
  %373 = vmatprep.subr.bf16.mxu0 0
  %374 = vmatpush1.bf16.msra.mxu0 %v307
  %375 = vmatprep.subr.bf16.mxu0 0
  %376 = vmatpush1.bf16.msra.mxu0 %v306
  %377 = vmatprep.subr.bf16.mxu0 0
  %378 = vmatpush1.bf16.msra.mxu0 %v305
  %379 = vmatprep.subr.bf16.mxu0 0
  %380 = vmatpush1.bf16.msra.mxu0 %v304
  %381 = vmatprep.subr.bf16.mxu0 0
  %382 = vmatpush1.bf16.msra.mxu0 %v303
  %383 = vmatprep.subr.bf16.mxu0 0
  %384 = vmatpush2.bf16.msra.mxu0 %v318
  %385 = vmatprep.subr.bf16.mxu0 0
  %386 = vmatpush2.bf16.msra.mxu0 %v317
  %387 = vmatprep.subr.bf16.mxu0 0
  %388 = vmatpush2.bf16.msra.mxu0 %v316
  %389 = vmatprep.subr.bf16.mxu0 0
  %390 = vmatpush2.bf16.msra.mxu0 %v315
  %391 = vmatprep.subr.bf16.mxu0 0
  %392 = vmatpush2.bf16.msra.mxu0 %v314
  %393 = vmatprep.subr.bf16.mxu0 0
  %394 = vmatpush2.bf16.msra.mxu0 %v313
  %395 = vmatprep.subr.bf16.mxu0 0
  %396 = vmatpush2.bf16.msra.mxu0 %v312
  %397 = vmatprep.subr.bf16.mxu0 0
  %398 = vmatpush2.bf16.msra.mxu0 %v311
  %399 = vmatprep.mubr.bf16.mxu0 %v144
  %400 = vmatmul.mubr.bf16.gmra.mxu0 %v143
  %v401 = vpop.f32.mrf.mxu0
  %v402 = vadd.f32 0.0, %v401
  %v403 = vpop.f32.mrf.mxu0
  %v404 = vpop.f32.mrf.mxu0
  %v405 = vadd.f32 0.0, %v404
  %v406 = vpop.f32.mrf.mxu0
  %407 = vmatprep.mubr.bf16.mxu0 %v148
  %408 = vmatmul.mubr.bf16.gmra.mxu0 %v147
  %v409 = vpop.f32.mrf.mxu0
  %v410 = vadd.f32 0.0, %v409
  %v411 = vpop.f32.mrf.mxu0
  %v412 = vpop.f32.mrf.mxu0
  %v413 = vadd.f32 0.0, %v412
  %v414 = vpop.f32.mrf.mxu0
  %415 = vmatprep.mubr.bf16.mxu0 %v152
  %416 = vmatmul.mubr.bf16.gmra.mxu0 %v151
  %v417 = vpop.f32.mrf.mxu0
  %v418 = vadd.f32 0.0, %v417
  %v419 = vpop.f32.mrf.mxu0
  %v420 = vpop.f32.mrf.mxu0
  %v421 = vadd.f32 0.0, %v420
  %v422 = vpop.f32.mrf.mxu0
  %423 = vmatprep.mubr.bf16.mxu0 %v156
  %424 = vmatmul.mubr.bf16.gmra.mxu0 %v155
  %v425 = vpop.f32.mrf.mxu0
  %v426 = vadd.f32 0.0, %v425
  %v427 = vpop.f32.mrf.mxu0
  %v428 = vpop.f32.mrf.mxu0
  %v429 = vadd.f32 0.0, %v428
  %v430 = vpop.f32.mrf.mxu0
  %431 = vdwg.mxu0
  %432 = vmatprep.subr.bf16.mxu0 0
  %433 = vmatpush1.bf16.msra.mxu0 %v326
  %434 = vmatprep.subr.bf16.mxu0 0
  %435 = vmatpush1.bf16.msra.mxu0 %v325
  %436 = vmatprep.subr.bf16.mxu0 0
  %437 = vmatpush1.bf16.msra.mxu0 %v324
  %438 = vmatprep.subr.bf16.mxu0 0
  %439 = vmatpush1.bf16.msra.mxu0 %v323
  %440 = vmatprep.subr.bf16.mxu0 0
  %441 = vmatpush1.bf16.msra.mxu0 %v322
  %442 = vmatprep.subr.bf16.mxu0 0
  %443 = vmatpush1.bf16.msra.mxu0 %v321
  %444 = vmatprep.subr.bf16.mxu0 0
  %445 = vmatpush1.bf16.msra.mxu0 %v320
  %446 = vmatprep.subr.bf16.mxu0 0
  %447 = vmatpush1.bf16.msra.mxu0 %v319
  %448 = vmatprep.subr.bf16.mxu0 0
  %449 = vmatpush2.bf16.msra.mxu0 %v334
  %450 = vmatprep.subr.bf16.mxu0 0
  %451 = vmatpush2.bf16.msra.mxu0 %v333
  %452 = vmatprep.subr.bf16.mxu0 0
  %453 = vmatpush2.bf16.msra.mxu0 %v332
  %454 = vmatprep.subr.bf16.mxu0 0
  %455 = vmatpush2.bf16.msra.mxu0 %v331
  %456 = vmatprep.subr.bf16.mxu0 0
  %457 = vmatpush2.bf16.msra.mxu0 %v330
  %458 = vmatprep.subr.bf16.mxu0 0
  %459 = vmatpush2.bf16.msra.mxu0 %v329
  %460 = vmatprep.subr.bf16.mxu0 0
  %461 = vmatpush2.bf16.msra.mxu0 %v328
  %462 = vmatprep.subr.bf16.mxu0 0
  %463 = vmatpush2.bf16.msra.mxu0 %v327
  %464 = vmatprep.mubr.bf16.mxu0 %v146
  %465 = vmatmul.mubr.bf16.gmra.mxu0 %v145
  %v466 = vpop.f32.mrf.mxu0
  %v467 = vadd.f32 %v402, %v466
  %v468 = vpop.f32.mrf.mxu0
  %v469 = vpop.f32.mrf.mxu0
  %v470 = vadd.f32 %v405, %v469
  %v471 = vpop.f32.mrf.mxu0
  %472 = vmatprep.mubr.bf16.mxu0 %v150
  %473 = vmatmul.mubr.bf16.gmra.mxu0 %v149
  %v474 = vpop.f32.mrf.mxu0
  %v475 = vadd.f32 %v410, %v474
  %v476 = vpop.f32.mrf.mxu0
  %v477 = vpop.f32.mrf.mxu0
  %v478 = vadd.f32 %v413, %v477
  %v479 = vpop.f32.mrf.mxu0
  %480 = vmatprep.mubr.bf16.mxu0 %v154
  %481 = vmatmul.mubr.bf16.gmra.mxu0 %v153
  %v482 = vpop.f32.mrf.mxu0
  %v483 = vadd.f32 %v418, %v482
  %v484 = vpop.f32.mrf.mxu0
  %v485 = vpop.f32.mrf.mxu0
  %v486 = vadd.f32 %v421, %v485
  %v487 = vpop.f32.mrf.mxu0
  %488 = vmatprep.mubr.bf16.mxu0 %v158
  %489 = vmatmul.mubr.bf16.gmra.mxu0 %v157
  %v490 = vpop.f32.mrf.mxu0
  %v491 = vadd.f32 %v426, %v490
  %v492 = vpop.f32.mrf.mxu0
  %v493 = vpop.f32.mrf.mxu0
  %v494 = vadd.f32 %v429, %v493
  %v495 = vpop.f32.mrf.mxu0
  %496 = vdwg.mxu0
  %v497 = vpack.c.bf16 %v470, %v467
  %v498 = vpack.c.bf16 %v478, %v475
  %v499 = vpack.c.bf16 %v486, %v483
  %v500 = vpack.c.bf16 %v494, %v491
  %v505 = vunpack.c.l.b16 %v497
  %v506 = vunpack.c.h.b16 %v497
  %v507 = vunpack.c.l.b16 %v498
  %v508 = vunpack.c.h.b16 %v498
  %v509 = vunpack.c.l.b16 %v499
  %v510 = vunpack.c.h.b16 %v499
  %v511 = vunpack.c.l.b16 %v500
  %v512 = vunpack.c.h.b16 %v500
  %v513 = vpack.c.b16 %v505, %v505
  %v514 = vpack.c.b16 %v506, %v506
  %v515 = vpack.c.b16 %v507, %v507
  %v516 = vpack.c.b16 %v508, %v508
  %v517 = vpack.c.b16 %v509, %v509
  %v518 = vpack.c.b16 %v510, %v510
  %v519 = vpack.c.b16 %v511, %v511
  %v520 = vpack.c.b16 %v512, %v512
  %vm529 = vcmask 257024
  %530 = vst.msk [vmem:[%s2] sm:$0xf] %vm529, %v513
  %531 = vst.msk [vmem:[%s2 + $0x4] sm:$0xf] %vm529, %v514
  %532 = vst.msk [vmem:[%s2 + $0x8] sm:$0xf] %vm529, %v515
  %533 = vst.msk [vmem:[%s2 + $0xc] sm:$0xf] %vm529, %v516
  %534 = vst.msk [vmem:[%s2 + $0x10] sm:$0xf] %vm529, %v517
  %535 = vst.msk [vmem:[%s2 + $0x14] sm:$0xf] %vm529, %v518
  %536 = vst.msk [vmem:[%s2 + $0x18] sm:$0xf] %vm529, %v519
  %537 = vst.msk [vmem:[%s2 + $0x1c] sm:$0xf] %vm529, %v520
  %vm538 = vcmask 261120
  %v539 = vsel %vm538, %v467, 0.0
  %540 = vadd.xlane.f32.xlu0 %v539
  %v541 = vpop.xlane.xlu0 %540
  %v542 = vsel %vm538, %v470, 0.0
  %543 = vadd.xlane.f32.xlu0 %v542
  %v544 = vpop.xlane.xlu0 %543
  %v545 = vsel %vm538, %v475, 0.0
  %546 = vadd.xlane.f32.xlu0 %v545
  %v547 = vpop.xlane.xlu0 %546
  %v548 = vsel %vm538, %v478, 0.0
  %549 = vadd.xlane.f32.xlu0 %v548
  %v550 = vpop.xlane.xlu0 %549
  %v551 = vsel %vm538, %v483, 0.0
  %552 = vadd.xlane.f32.xlu0 %v551
  %v553 = vpop.xlane.xlu0 %552
  %v554 = vsel %vm538, %v486, 0.0
  %555 = vadd.xlane.f32.xlu0 %v554
  %v556 = vpop.xlane.xlu0 %555
  %v557 = vsel %vm538, %v491, 0.0
  %558 = vadd.xlane.f32.xlu0 %v557
  %v559 = vpop.xlane.xlu0 %558
  %v560 = vsel %vm538, %v494, 0.0
  %561 = vadd.xlane.f32.xlu0 %v560
  %v562 = vpop.xlane.xlu0 %561
  %vm563 = vcmask 7168
  %564 = vst.msk [vmem:[%s3] sm:$0xff] %vm563, %v541
  %565 = vst.msk [vmem:[%s3 + $0x8] sm:$0xff] %vm563, %v544
  %566 = vst.msk [vmem:[%s3 + $0x10] sm:$0xff] %vm563, %v547
  %567 = vst.msk [vmem:[%s3 + $0x18] sm:$0xff] %vm563, %v550
  %568 = vst.msk [vmem:[%s3 + $0x20] sm:$0xff] %vm563, %v553
  %569 = vst.msk [vmem:[%s3 + $0x28] sm:$0xff] %vm563, %v556
  %570 = vst.msk [vmem:[%s3 + $0x30] sm:$0xff] %vm563, %v559
  %571 = vst.msk [vmem:[%s3 + $0x38] sm:$0xff] %vm563, %v562
  %v572 = vmul.f32 %v467, %v467
  %v573 = vmul.f32 %v470, %v470
  %v574 = vmul.f32 %v475, %v475
  %v575 = vmul.f32 %v478, %v478
  %v576 = vmul.f32 %v483, %v483
  %v577 = vmul.f32 %v486, %v486
  %v578 = vmul.f32 %v491, %v491
  %v579 = vmul.f32 %v494, %v494
  %v580 = vsel %vm538, %v572, 0.0
  %581 = vadd.xlane.f32.xlu0 %v580
  %v582 = vpop.xlane.xlu0 %581
  %v583 = vsel %vm538, %v573, 0.0
  %584 = vadd.xlane.f32.xlu0 %v583
  %v585 = vpop.xlane.xlu0 %584
  %v586 = vsel %vm538, %v574, 0.0
  %587 = vadd.xlane.f32.xlu0 %v586
  %v588 = vpop.xlane.xlu0 %587
  %v589 = vsel %vm538, %v575, 0.0
  %590 = vadd.xlane.f32.xlu0 %v589
  %v591 = vpop.xlane.xlu0 %590
  %v592 = vsel %vm538, %v576, 0.0
  %593 = vadd.xlane.f32.xlu0 %v592
  %v594 = vpop.xlane.xlu0 %593
  %v595 = vsel %vm538, %v577, 0.0
  %596 = vadd.xlane.f32.xlu0 %v595
  %v597 = vpop.xlane.xlu0 %596
  %v598 = vsel %vm538, %v578, 0.0
  %599 = vadd.xlane.f32.xlu0 %v598
  %v600 = vpop.xlane.xlu0 %599
  %v601 = vsel %vm538, %v579, 0.0
  %602 = vadd.xlane.f32.xlu0 %v601
  %v603 = vpop.xlane.xlu0 %602
  %604 = vst.msk [vmem:[%s4] sm:$0xff] %vm563, %v582
  %605 = vst.msk [vmem:[%s4 + $0x8] sm:$0xff] %vm563, %v585
  %606 = vst.msk [vmem:[%s4 + $0x10] sm:$0xff] %vm563, %v588
  %607 = vst.msk [vmem:[%s4 + $0x18] sm:$0xff] %vm563, %v591
  %608 = vst.msk [vmem:[%s4 + $0x20] sm:$0xff] %vm563, %v594
  %609 = vst.msk [vmem:[%s4 + $0x28] sm:$0xff] %vm563, %v597
  %610 = vst.msk [vmem:[%s4 + $0x30] sm:$0xff] %vm563, %v600
  %611 = vst.msk [vmem:[%s4 + $0x38] sm:$0xff] %vm563, %v603
  // Predicated region
  $region10: #{discriminator_forward.13} parent=0 // pred_check
    _
  $region11: #{discriminator_forward.13} parent=0 // pred_check_branch
    %613 = sbr.rel (0) target = $region13
  $region12: #{discriminator_forward.13} parent=0 // pred_region
    _
  $region13: #{discriminator_forward.13} parent=0 // pred_fallthru
    _
  // Predicated region
  $region14: #{discriminator_forward.13} parent=0 // pred_check
    _
  $region15: #{discriminator_forward.13} parent=0 // pred_check_branch
    %615 = sbr.rel (0) target = $region17
  $region16: #{discriminator_forward.13} parent=0 // pred_region
    _
  $region17: #{discriminator_forward.13} parent=0 // pred_fallthru
    _
  // Predicated region
  $region18: #{discriminator_forward.13} parent=0 // pred_check
    _
  $region19: #{discriminator_forward.13} parent=0 // pred_check_branch
    %617 = sbr.rel (0) target = $region21
  $region20: #{discriminator_forward.13} parent=0 // pred_region
    _
  $region21: #{discriminator_forward.13} parent=0 // pred_fallthru
    _
  // Predicated region
  $region22: #{discriminator_forward.13} parent=0 // pred_check
    _
  $region23: #{discriminator_forward.13} parent=0 // pred_check_branch
    %619 = sbr.rel (0) target = $region25
  $region24: #{discriminator_forward.13} parent=0 // pred_region
    _
  $region25: #{discriminator_forward.13} parent=0 // pred_fallthru
    _
  // Predicated region
  $region26: #{discriminator_forward.13} parent=0 // pred_check
    _
  $region27: #{discriminator_forward.13} parent=0 // pred_check_branch
    %621 = sbr.rel (0) target = $region29
  $region28: #{discriminator_forward.13} parent=0 // pred_region
    _
  $region29: #{discriminator_forward.13} parent=0 // pred_fallthru
    _
  // Predicated region
  $region30: #{discriminator_forward.13} parent=0 // pred_check
    _
  $region31: #{discriminator_forward.13} parent=0 // pred_check_branch
    %623 = sbr.rel (0) target = $region33
  $region32: #{discriminator_forward.13} parent=0 // pred_region
    _
  $region33: #{discriminator_forward.13} parent=0 // pred_fallthru
    _

// kernel: discriminator_forward.15
$region0: #{discriminator_forward.15}
  #allocation0 [shape = 'u32[]', space=smem, size = 0x4, offset = 0x4, fixed_abs, tag = 'smem constant byte address 0x4 - core index']
  #allocation1 [shape = 'u32[144,128]{1,0:T(1,128)}', space=vmem, size = 0x12000, scoped, tag = 'internal scratch']
  %s0 = inlined_call_operand.vmem [shape: bf16[1024,1], index: 0, kind: input, shape index: {}]
  %s1 = inlined_call_operand.vmem [shape: bf16[1024,2], index: 1, kind: input, shape index: {}]
  %s2 = inlined_call_operand.hbm [shape: f32[1,2], index: 2, kind: output, shape index: {}]
  %s3 = sld [smem:[#allocation0]]
  $region18: #{discriminator_forward.15} parent=0
    _
  %s5 = ssub.s32 1, %s3
  %s6 = scalar_select 0, %s5, %s3
  $region1: #{discriminator_forward.15} parent=0
    #allocation2 [shape = 'u8[512]{0}', space=vmem, size = 0x400, scoped, tag = 'output window, operand 0, single buffered']
    #allocation3 [shape = 's32[1]{0}', space=sflag, size = 0x4, scoped, tag = 'scoped memory for discriminator_forward.15']
    %7 = vsyncpa [#allocation3], 0
    // Predicated region
    $region2: #{discriminator_forward.15} parent=1 // pred_check
      _
    $region3: #{discriminator_forward.15} parent=1 // pred_check_branch
      %9 = sbr.rel (0) target = $region5
    $region4: #{discriminator_forward.15} parent=1 // pred_region
      _
    $region5: #{discriminator_forward.15} parent=1 // pred_fallthru
      _
    // Predicated region
    $region6: #{discriminator_forward.15} parent=1 // pred_check
      _
    $region7: #{discriminator_forward.15} parent=1 // pred_check_branch
      %11 = sbr.rel (0) target = $region9
    $region8: #{discriminator_forward.15} parent=1 // pred_region
      _
    $region9: #{discriminator_forward.15} parent=1 // pred_fallthru
      _
    %v13 = vld [vmem:[%s0] sm:$0xf]
    %v14 = vld [vmem:[%s0 + $0x4] sm:$0xf]
    %v15 = vld [vmem:[%s0 + $0x8] sm:$0xf]
    %v16 = vld [vmem:[%s0 + $0xc] sm:$0xf]
    %v17 = vld [vmem:[%s0 + $0x10] sm:$0xf]
    %v18 = vld [vmem:[%s0 + $0x14] sm:$0xf]
    %v19 = vld [vmem:[%s0 + $0x18] sm:$0xf]
    %v20 = vld [vmem:[%s0 + $0x1c] sm:$0xf]
    %v21 = vld [vmem:[%s0 + $0x20] sm:$0xf]
    %v22 = vld [vmem:[%s0 + $0x24] sm:$0xf]
    %v23 = vld [vmem:[%s0 + $0x28] sm:$0xf]
    %v24 = vld [vmem:[%s0 + $0x2c] sm:$0xf]
    %v25 = vld [vmem:[%s0 + $0x30] sm:$0xf]
    %v26 = vld [vmem:[%s0 + $0x34] sm:$0xf]
    %v27 = vld [vmem:[%s0 + $0x38] sm:$0xf]
    %v28 = vld [vmem:[%s0 + $0x3c] sm:$0xf]
    %v29 = vld [vmem:[%s0 + $0x40] sm:$0xf]
    %v30 = vld [vmem:[%s0 + $0x44] sm:$0xf]
    %v31 = vld [vmem:[%s0 + $0x48] sm:$0xf]
    %v32 = vld [vmem:[%s0 + $0x4c] sm:$0xf]
    %v33 = vld [vmem:[%s0 + $0x50] sm:$0xf]
    %v34 = vld [vmem:[%s0 + $0x54] sm:$0xf]
    %v35 = vld [vmem:[%s0 + $0x58] sm:$0xf]
    %v36 = vld [vmem:[%s0 + $0x5c] sm:$0xf]
    %v37 = vld [vmem:[%s0 + $0x60] sm:$0xf]
    %v38 = vld [vmem:[%s0 + $0x64] sm:$0xf]
    %v39 = vld [vmem:[%s0 + $0x68] sm:$0xf]
    %v40 = vld [vmem:[%s0 + $0x6c] sm:$0xf]
    %v41 = vld [vmem:[%s0 + $0x70] sm:$0xf]
    %v42 = vld [vmem:[%s0 + $0x74] sm:$0xf]
    %v43 = vld [vmem:[%s0 + $0x78] sm:$0xf]
    %v44 = vld [vmem:[%s0 + $0x7c] sm:$0xf]
    %v45 = vld [vmem:[%s0 + $0x80] sm:$0xf]
    %v46 = vld [vmem:[%s0 + $0x84] sm:$0xf]
    %v47 = vld [vmem:[%s0 + $0x88] sm:$0xf]
    %v48 = vld [vmem:[%s0 + $0x8c] sm:$0xf]
    %v49 = vld [vmem:[%s0 + $0x90] sm:$0xf]
    %v50 = vld [vmem:[%s0 + $0x94] sm:$0xf]
    %v51 = vld [vmem:[%s0 + $0x98] sm:$0xf]
    %v52 = vld [vmem:[%s0 + $0x9c] sm:$0xf]
    %v53 = vld [vmem:[%s0 + $0xa0] sm:$0xf]
    %v54 = vld [vmem:[%s0 + $0xa4] sm:$0xf]
    %v55 = vld [vmem:[%s0 + $0xa8] sm:$0xf]
    %v56 = vld [vmem:[%s0 + $0xac] sm:$0xf]
    %v57 = vld [vmem:[%s0 + $0xb0] sm:$0xf]
    %v58 = vld [vmem:[%s0 + $0xb4] sm:$0xf]
    %v59 = vld [vmem:[%s0 + $0xb8] sm:$0xf]
    %v60 = vld [vmem:[%s0 + $0xbc] sm:$0xf]
    %v61 = vld [vmem:[%s0 + $0xc0] sm:$0xf]
    %v62 = vld [vmem:[%s0 + $0xc4] sm:$0xf]
    %v63 = vld [vmem:[%s0 + $0xc8] sm:$0xf]
    %v64 = vld [vmem:[%s0 + $0xcc] sm:$0xf]
    %v65 = vld [vmem:[%s0 + $0xd0] sm:$0xf]
    %v66 = vld [vmem:[%s0 + $0xd4] sm:$0xf]
    %v67 = vld [vmem:[%s0 + $0xd8] sm:$0xf]
    %v68 = vld [vmem:[%s0 + $0xdc] sm:$0xf]
    %v69 = vld [vmem:[%s0 + $0xe0] sm:$0xf]
    %v70 = vld [vmem:[%s0 + $0xe4] sm:$0xf]
    %v71 = vld [vmem:[%s0 + $0xe8] sm:$0xf]
    %v72 = vld [vmem:[%s0 + $0xec] sm:$0xf]
    %v73 = vld [vmem:[%s0 + $0xf0] sm:$0xf]
    %v74 = vld [vmem:[%s0 + $0xf4] sm:$0xf]
    %v75 = vld [vmem:[%s0 + $0xf8] sm:$0xf]
    %v76 = vld [vmem:[%s0 + $0xfc] sm:$0xf]
    %v77 = vld [vmem:[%s0 + $0x100] sm:$0xf]
    %v78 = vld [vmem:[%s0 + $0x104] sm:$0xf]
    %v79 = vld [vmem:[%s0 + $0x108] sm:$0xf]
    %v80 = vld [vmem:[%s0 + $0x10c] sm:$0xf]
    %v81 = vld [vmem:[%s0 + $0x110] sm:$0xf]
    %v82 = vld [vmem:[%s0 + $0x114] sm:$0xf]
    %v83 = vld [vmem:[%s0 + $0x118] sm:$0xf]
    %v84 = vld [vmem:[%s0 + $0x11c] sm:$0xf]
    %v85 = vld [vmem:[%s0 + $0x120] sm:$0xf]
    %v86 = vld [vmem:[%s0 + $0x124] sm:$0xf]
    %v87 = vld [vmem:[%s0 + $0x128] sm:$0xf]
    %v88 = vld [vmem:[%s0 + $0x12c] sm:$0xf]
    %v89 = vld [vmem:[%s0 + $0x130] sm:$0xf]
    %v90 = vld [vmem:[%s0 + $0x134] sm:$0xf]
    %v91 = vld [vmem:[%s0 + $0x138] sm:$0xf]
    %v92 = vld [vmem:[%s0 + $0x13c] sm:$0xf]
    %v93 = vld [vmem:[%s0 + $0x140] sm:$0xf]
    %v94 = vld [vmem:[%s0 + $0x144] sm:$0xf]
    %v95 = vld [vmem:[%s0 + $0x148] sm:$0xf]
    %v96 = vld [vmem:[%s0 + $0x14c] sm:$0xf]
    %v97 = vld [vmem:[%s0 + $0x150] sm:$0xf]
    %v98 = vld [vmem:[%s0 + $0x154] sm:$0xf]
    %v99 = vld [vmem:[%s0 + $0x158] sm:$0xf]
    %v100 = vld [vmem:[%s0 + $0x15c] sm:$0xf]
    %v101 = vld [vmem:[%s0 + $0x160] sm:$0xf]
    %v102 = vld [vmem:[%s0 + $0x164] sm:$0xf]
    %v103 = vld [vmem:[%s0 + $0x168] sm:$0xf]
    %v104 = vld [vmem:[%s0 + $0x16c] sm:$0xf]
    %v105 = vld [vmem:[%s0 + $0x170] sm:$0xf]
    %v106 = vld [vmem:[%s0 + $0x174] sm:$0xf]
    %v107 = vld [vmem:[%s0 + $0x178] sm:$0xf]
    %v108 = vld [vmem:[%s0 + $0x17c] sm:$0xf]
    %v109 = vld [vmem:[%s0 + $0x180] sm:$0xf]
    %v110 = vld [vmem:[%s0 + $0x184] sm:$0xf]
    %v111 = vld [vmem:[%s0 + $0x188] sm:$0xf]
    %v112 = vld [vmem:[%s0 + $0x18c] sm:$0xf]
    %v113 = vld [vmem:[%s0 + $0x190] sm:$0xf]
    %v114 = vld [vmem:[%s0 + $0x194] sm:$0xf]
    %v115 = vld [vmem:[%s0 + $0x198] sm:$0xf]
    %v116 = vld [vmem:[%s0 + $0x19c] sm:$0xf]
    %v117 = vld [vmem:[%s0 + $0x1a0] sm:$0xf]
    %v118 = vld [vmem:[%s0 + $0x1a4] sm:$0xf]
    %v119 = vld [vmem:[%s0 + $0x1a8] sm:$0xf]
    %v120 = vld [vmem:[%s0 + $0x1ac] sm:$0xf]
    %v121 = vld [vmem:[%s0 + $0x1b0] sm:$0xf]
    %v122 = vld [vmem:[%s0 + $0x1b4] sm:$0xf]
    %v123 = vld [vmem:[%s0 + $0x1b8] sm:$0xf]
    %v124 = vld [vmem:[%s0 + $0x1bc] sm:$0xf]
    %v125 = vld [vmem:[%s0 + $0x1c0] sm:$0xf]
    %v126 = vld [vmem:[%s0 + $0x1c4] sm:$0xf]
    %v127 = vld [vmem:[%s0 + $0x1c8] sm:$0xf]
    %v128 = vld [vmem:[%s0 + $0x1cc] sm:$0xf]
    %v129 = vld [vmem:[%s0 + $0x1d0] sm:$0xf]
    %v130 = vld [vmem:[%s0 + $0x1d4] sm:$0xf]
    %v131 = vld [vmem:[%s0 + $0x1d8] sm:$0xf]
    %v132 = vld [vmem:[%s0 + $0x1dc] sm:$0xf]
    %v133 = vld [vmem:[%s0 + $0x1e0] sm:$0xf]
    %v134 = vld [vmem:[%s0 + $0x1e4] sm:$0xf]
    %v135 = vld [vmem:[%s0 + $0x1e8] sm:$0xf]
    %v136 = vld [vmem:[%s0 + $0x1ec] sm:$0xf]
    %v137 = vld [vmem:[%s0 + $0x1f0] sm:$0xf]
    %v138 = vld [vmem:[%s0 + $0x1f4] sm:$0xf]
    %v139 = vld [vmem:[%s0 + $0x1f8] sm:$0xf]
    %v140 = vld [vmem:[%s0 + $0x1fc] sm:$0xf]
    %v141 = vld [vmem:[%s1] sm:$0xf]
    %v142 = vld [vmem:[%s1 + $0x4] sm:$0xf]
    %v143 = vld [vmem:[%s1 + $0x8] sm:$0xf]
    %v144 = vld [vmem:[%s1 + $0xc] sm:$0xf]
    %v145 = vld [vmem:[%s1 + $0x10] sm:$0xf]
    %v146 = vld [vmem:[%s1 + $0x14] sm:$0xf]
    %v147 = vld [vmem:[%s1 + $0x18] sm:$0xf]
    %v148 = vld [vmem:[%s1 + $0x1c] sm:$0xf]
    %v149 = vld [vmem:[%s1 + $0x20] sm:$0xf]
    %v150 = vld [vmem:[%s1 + $0x24] sm:$0xf]
    %v151 = vld [vmem:[%s1 + $0x28] sm:$0xf]
    %v152 = vld [vmem:[%s1 + $0x2c] sm:$0xf]
    %v153 = vld [vmem:[%s1 + $0x30] sm:$0xf]
    %v154 = vld [vmem:[%s1 + $0x34] sm:$0xf]
    %v155 = vld [vmem:[%s1 + $0x38] sm:$0xf]
    %v156 = vld [vmem:[%s1 + $0x3c] sm:$0xf]
    %v157 = vld [vmem:[%s1 + $0x40] sm:$0xf]
    %v158 = vld [vmem:[%s1 + $0x44] sm:$0xf]
    %v159 = vld [vmem:[%s1 + $0x48] sm:$0xf]
    %v160 = vld [vmem:[%s1 + $0x4c] sm:$0xf]
    %v161 = vld [vmem:[%s1 + $0x50] sm:$0xf]
    %v162 = vld [vmem:[%s1 + $0x54] sm:$0xf]
    %v163 = vld [vmem:[%s1 + $0x58] sm:$0xf]
    %v164 = vld [vmem:[%s1 + $0x5c] sm:$0xf]
    %v165 = vld [vmem:[%s1 + $0x60] sm:$0xf]
    %v166 = vld [vmem:[%s1 + $0x64] sm:$0xf]
    %v167 = vld [vmem:[%s1 + $0x68] sm:$0xf]
    %v168 = vld [vmem:[%s1 + $0x6c] sm:$0xf]
    %v169 = vld [vmem:[%s1 + $0x70] sm:$0xf]
    %v170 = vld [vmem:[%s1 + $0x74] sm:$0xf]
    %v171 = vld [vmem:[%s1 + $0x78] sm:$0xf]
    %v172 = vld [vmem:[%s1 + $0x7c] sm:$0xf]
    %v173 = vld [vmem:[%s1 + $0x80] sm:$0xf]
    %v174 = vld [vmem:[%s1 + $0x84] sm:$0xf]
    %v175 = vld [vmem:[%s1 + $0x88] sm:$0xf]
    %v176 = vld [vmem:[%s1 + $0x8c] sm:$0xf]
    %v177 = vld [vmem:[%s1 + $0x90] sm:$0xf]
    %v178 = vld [vmem:[%s1 + $0x94] sm:$0xf]
    %v179 = vld [vmem:[%s1 + $0x98] sm:$0xf]
    %v180 = vld [vmem:[%s1 + $0x9c] sm:$0xf]
    %v181 = vld [vmem:[%s1 + $0xa0] sm:$0xf]
    %v182 = vld [vmem:[%s1 + $0xa4] sm:$0xf]
    %v183 = vld [vmem:[%s1 + $0xa8] sm:$0xf]
    %v184 = vld [vmem:[%s1 + $0xac] sm:$0xf]
    %v185 = vld [vmem:[%s1 + $0xb0] sm:$0xf]
    %v186 = vld [vmem:[%s1 + $0xb4] sm:$0xf]
    %v187 = vld [vmem:[%s1 + $0xb8] sm:$0xf]
    %v188 = vld [vmem:[%s1 + $0xbc] sm:$0xf]
    %v189 = vld [vmem:[%s1 + $0xc0] sm:$0xf]
    %v190 = vld [vmem:[%s1 + $0xc4] sm:$0xf]
    %v191 = vld [vmem:[%s1 + $0xc8] sm:$0xf]
    %v192 = vld [vmem:[%s1 + $0xcc] sm:$0xf]
    %v193 = vld [vmem:[%s1 + $0xd0] sm:$0xf]
    %v194 = vld [vmem:[%s1 + $0xd4] sm:$0xf]
    %v195 = vld [vmem:[%s1 + $0xd8] sm:$0xf]
    %v196 = vld [vmem:[%s1 + $0xdc] sm:$0xf]
    %v197 = vld [vmem:[%s1 + $0xe0] sm:$0xf]
    %v198 = vld [vmem:[%s1 + $0xe4] sm:$0xf]
    %v199 = vld [vmem:[%s1 + $0xe8] sm:$0xf]
    %v200 = vld [vmem:[%s1 + $0xec] sm:$0xf]
    %v201 = vld [vmem:[%s1 + $0xf0] sm:$0xf]
    %v202 = vld [vmem:[%s1 + $0xf4] sm:$0xf]
    %v203 = vld [vmem:[%s1 + $0xf8] sm:$0xf]
    %v204 = vld [vmem:[%s1 + $0xfc] sm:$0xf]
    %v205 = vld [vmem:[%s1 + $0x100] sm:$0xf]
    %v206 = vld [vmem:[%s1 + $0x104] sm:$0xf]
    %v207 = vld [vmem:[%s1 + $0x108] sm:$0xf]
    %v208 = vld [vmem:[%s1 + $0x10c] sm:$0xf]
    %v209 = vld [vmem:[%s1 + $0x110] sm:$0xf]
    %v210 = vld [vmem:[%s1 + $0x114] sm:$0xf]
    %v211 = vld [vmem:[%s1 + $0x118] sm:$0xf]
    %v212 = vld [vmem:[%s1 + $0x11c] sm:$0xf]
    %v213 = vld [vmem:[%s1 + $0x120] sm:$0xf]
    %v214 = vld [vmem:[%s1 + $0x124] sm:$0xf]
    %v215 = vld [vmem:[%s1 + $0x128] sm:$0xf]
    %v216 = vld [vmem:[%s1 + $0x12c] sm:$0xf]
    %v217 = vld [vmem:[%s1 + $0x130] sm:$0xf]
    %v218 = vld [vmem:[%s1 + $0x134] sm:$0xf]
    %v219 = vld [vmem:[%s1 + $0x138] sm:$0xf]
    %v220 = vld [vmem:[%s1 + $0x13c] sm:$0xf]
    %v221 = vld [vmem:[%s1 + $0x140] sm:$0xf]
    %v222 = vld [vmem:[%s1 + $0x144] sm:$0xf]
    %v223 = vld [vmem:[%s1 + $0x148] sm:$0xf]
    %v224 = vld [vmem:[%s1 + $0x14c] sm:$0xf]
    %v225 = vld [vmem:[%s1 + $0x150] sm:$0xf]
    %v226 = vld [vmem:[%s1 + $0x154] sm:$0xf]
    %v227 = vld [vmem:[%s1 + $0x158] sm:$0xf]
    %v228 = vld [vmem:[%s1 + $0x15c] sm:$0xf]
    %v229 = vld [vmem:[%s1 + $0x160] sm:$0xf]
    %v230 = vld [vmem:[%s1 + $0x164] sm:$0xf]
    %v231 = vld [vmem:[%s1 + $0x168] sm:$0xf]
    %v232 = vld [vmem:[%s1 + $0x16c] sm:$0xf]
    %v233 = vld [vmem:[%s1 + $0x170] sm:$0xf]
    %v234 = vld [vmem:[%s1 + $0x174] sm:$0xf]
    %v235 = vld [vmem:[%s1 + $0x178] sm:$0xf]
    %v236 = vld [vmem:[%s1 + $0x17c] sm:$0xf]
    %v237 = vld [vmem:[%s1 + $0x180] sm:$0xf]
    %v238 = vld [vmem:[%s1 + $0x184] sm:$0xf]
    %v239 = vld [vmem:[%s1 + $0x188] sm:$0xf]
    %v240 = vld [vmem:[%s1 + $0x18c] sm:$0xf]
    %v241 = vld [vmem:[%s1 + $0x190] sm:$0xf]
    %v242 = vld [vmem:[%s1 + $0x194] sm:$0xf]
    %v243 = vld [vmem:[%s1 + $0x198] sm:$0xf]
    %v244 = vld [vmem:[%s1 + $0x19c] sm:$0xf]
    %v245 = vld [vmem:[%s1 + $0x1a0] sm:$0xf]
    %v246 = vld [vmem:[%s1 + $0x1a4] sm:$0xf]
    %v247 = vld [vmem:[%s1 + $0x1a8] sm:$0xf]
    %v248 = vld [vmem:[%s1 + $0x1ac] sm:$0xf]
    %v249 = vld [vmem:[%s1 + $0x1b0] sm:$0xf]
    %v250 = vld [vmem:[%s1 + $0x1b4] sm:$0xf]
    %v251 = vld [vmem:[%s1 + $0x1b8] sm:$0xf]
    %v252 = vld [vmem:[%s1 + $0x1bc] sm:$0xf]
    %v253 = vld [vmem:[%s1 + $0x1c0] sm:$0xf]
    %v254 = vld [vmem:[%s1 + $0x1c4] sm:$0xf]
    %v255 = vld [vmem:[%s1 + $0x1c8] sm:$0xf]
    %v256 = vld [vmem:[%s1 + $0x1cc] sm:$0xf]
    %v257 = vld [vmem:[%s1 + $0x1d0] sm:$0xf]
    %v258 = vld [vmem:[%s1 + $0x1d4] sm:$0xf]
    %v259 = vld [vmem:[%s1 + $0x1d8] sm:$0xf]
    %v260 = vld [vmem:[%s1 + $0x1dc] sm:$0xf]
    %v261 = vld [vmem:[%s1 + $0x1e0] sm:$0xf]
    %v262 = vld [vmem:[%s1 + $0x1e4] sm:$0xf]
    %v263 = vld [vmem:[%s1 + $0x1e8] sm:$0xf]
    %v264 = vld [vmem:[%s1 + $0x1ec] sm:$0xf]
    %v265 = vld [vmem:[%s1 + $0x1f0] sm:$0xf]
    %v266 = vld [vmem:[%s1 + $0x1f4] sm:$0xf]
    %v267 = vld [vmem:[%s1 + $0x1f8] sm:$0xf]
    %v268 = vld [vmem:[%s1 + $0x1fc] sm:$0xf]
    %v397 = vunpack.c.l.b16 %v13
    %v398 = vunpack.c.l.b16 %v14
    %v399 = vunpack.c.l.b16 %v15
    %v400 = vunpack.c.l.b16 %v16
    %v401 = vunpack.c.l.b16 %v17
    %v402 = vunpack.c.l.b16 %v18
    %v403 = vunpack.c.l.b16 %v19
    %v404 = vunpack.c.l.b16 %v20
    %v405 = vunpack.c.l.b16 %v21
    %v406 = vunpack.c.l.b16 %v22
    %v407 = vunpack.c.l.b16 %v23
    %v408 = vunpack.c.l.b16 %v24
    %v409 = vunpack.c.l.b16 %v25
    %v410 = vunpack.c.l.b16 %v26
    %v411 = vunpack.c.l.b16 %v27
    %v412 = vunpack.c.l.b16 %v28
    %v413 = vunpack.c.l.b16 %v29
    %v414 = vunpack.c.l.b16 %v30
    %v415 = vunpack.c.l.b16 %v31
    %v416 = vunpack.c.l.b16 %v32
    %v417 = vunpack.c.l.b16 %v33
    %v418 = vunpack.c.l.b16 %v34
    %v419 = vunpack.c.l.b16 %v35
    %v420 = vunpack.c.l.b16 %v36
    %v421 = vunpack.c.l.b16 %v37
    %v422 = vunpack.c.l.b16 %v38
    %v423 = vunpack.c.l.b16 %v39
    %v424 = vunpack.c.l.b16 %v40
    %v425 = vunpack.c.l.b16 %v41
    %v426 = vunpack.c.l.b16 %v42
    %v427 = vunpack.c.l.b16 %v43
    %v428 = vunpack.c.l.b16 %v44
    %v429 = vunpack.c.l.b16 %v45
    %v430 = vunpack.c.l.b16 %v46
    %v431 = vunpack.c.l.b16 %v47
    %v432 = vunpack.c.l.b16 %v48
    %v433 = vunpack.c.l.b16 %v49
    %v434 = vunpack.c.l.b16 %v50
    %v435 = vunpack.c.l.b16 %v51
    %v436 = vunpack.c.l.b16 %v52
    %v437 = vunpack.c.l.b16 %v53
    %v438 = vunpack.c.l.b16 %v54
    %v439 = vunpack.c.l.b16 %v55
    %v440 = vunpack.c.l.b16 %v56
    %v441 = vunpack.c.l.b16 %v57
    %v442 = vunpack.c.l.b16 %v58
    %v443 = vunpack.c.l.b16 %v59
    %v444 = vunpack.c.l.b16 %v60
    %v445 = vunpack.c.l.b16 %v61
    %v446 = vunpack.c.l.b16 %v62
    %v447 = vunpack.c.l.b16 %v63
    %v448 = vunpack.c.l.b16 %v64
    %v449 = vunpack.c.l.b16 %v65
    %v450 = vunpack.c.l.b16 %v66
    %v451 = vunpack.c.l.b16 %v67
    %v452 = vunpack.c.l.b16 %v68
    %v453 = vunpack.c.l.b16 %v69
    %v454 = vunpack.c.l.b16 %v70
    %v455 = vunpack.c.l.b16 %v71
    %v456 = vunpack.c.l.b16 %v72
    %v457 = vunpack.c.l.b16 %v73
    %v458 = vunpack.c.l.b16 %v74
    %v459 = vunpack.c.l.b16 %v75
    %v460 = vunpack.c.l.b16 %v76
    %v461 = vunpack.c.l.b16 %v77
    %v462 = vunpack.c.l.b16 %v78
    %v463 = vunpack.c.l.b16 %v79
    %v464 = vunpack.c.l.b16 %v80
    %v465 = vunpack.c.l.b16 %v81
    %v466 = vunpack.c.l.b16 %v82
    %v467 = vunpack.c.l.b16 %v83
    %v468 = vunpack.c.l.b16 %v84
    %v469 = vunpack.c.l.b16 %v85
    %v470 = vunpack.c.l.b16 %v86
    %v471 = vunpack.c.l.b16 %v87
    %v472 = vunpack.c.l.b16 %v88
    %v473 = vunpack.c.l.b16 %v89
    %v474 = vunpack.c.l.b16 %v90
    %v475 = vunpack.c.l.b16 %v91
    %v476 = vunpack.c.l.b16 %v92
    %v477 = vunpack.c.l.b16 %v93
    %v478 = vunpack.c.l.b16 %v94
    %v479 = vunpack.c.l.b16 %v95
    %v480 = vunpack.c.l.b16 %v96
    %v481 = vunpack.c.l.b16 %v97
    %v482 = vunpack.c.l.b16 %v98
    %v483 = vunpack.c.l.b16 %v99
    %v484 = vunpack.c.l.b16 %v100
    %v485 = vunpack.c.l.b16 %v101
    %v486 = vunpack.c.l.b16 %v102
    %v487 = vunpack.c.l.b16 %v103
    %v488 = vunpack.c.l.b16 %v104
    %v489 = vunpack.c.l.b16 %v105
    %v490 = vunpack.c.l.b16 %v106
    %v491 = vunpack.c.l.b16 %v107
    %v492 = vunpack.c.l.b16 %v108
    %v493 = vunpack.c.l.b16 %v109
    %v494 = vunpack.c.l.b16 %v110
    %v495 = vunpack.c.l.b16 %v111
    %v496 = vunpack.c.l.b16 %v112
    %v497 = vunpack.c.l.b16 %v113
    %v498 = vunpack.c.l.b16 %v114
    %v499 = vunpack.c.l.b16 %v115
    %v500 = vunpack.c.l.b16 %v116
    %v501 = vunpack.c.l.b16 %v117
    %v502 = vunpack.c.l.b16 %v118
    %v503 = vunpack.c.l.b16 %v119
    %v504 = vunpack.c.l.b16 %v120
    %v505 = vunpack.c.l.b16 %v121
    %v506 = vunpack.c.l.b16 %v122
    %v507 = vunpack.c.l.b16 %v123
    %v508 = vunpack.c.l.b16 %v124
    %v509 = vunpack.c.l.b16 %v125
    %v510 = vunpack.c.l.b16 %v126
    %v511 = vunpack.c.l.b16 %v127
    %v512 = vunpack.c.l.b16 %v128
    %v513 = vunpack.c.l.b16 %v129
    %v514 = vunpack.c.l.b16 %v130
    %v515 = vunpack.c.l.b16 %v131
    %v516 = vunpack.c.l.b16 %v132
    %v517 = vunpack.c.l.b16 %v133
    %v518 = vunpack.c.l.b16 %v134
    %v519 = vunpack.c.l.b16 %v135
    %v520 = vunpack.c.l.b16 %v136
    %v521 = vunpack.c.l.b16 %v137
    %v522 = vunpack.c.l.b16 %v138
    %v523 = vunpack.c.l.b16 %v139
    %v524 = vunpack.c.l.b16 %v140
    %v525 = vpack.c.b16 %v398, %v397
    %v526 = vpack.c.b16 %v400, %v399
    %v527 = vpack.c.b16 %v402, %v401
    %v528 = vpack.c.b16 %v404, %v403
    %v529 = vpack.c.b16 %v406, %v405
    %v530 = vpack.c.b16 %v408, %v407
    %v531 = vpack.c.b16 %v410, %v409
    %v532 = vpack.c.b16 %v412, %v411
    %v533 = vpack.c.b16 %v414, %v413
    %v534 = vpack.c.b16 %v416, %v415
    %v535 = vpack.c.b16 %v418, %v417
    %v536 = vpack.c.b16 %v420, %v419
    %v537 = vpack.c.b16 %v422, %v421
    %v538 = vpack.c.b16 %v424, %v423
    %v539 = vpack.c.b16 %v426, %v425
    %v540 = vpack.c.b16 %v428, %v427
    %v541 = vpack.c.b16 %v430, %v429
    %v542 = vpack.c.b16 %v432, %v431
    %v543 = vpack.c.b16 %v434, %v433
    %v544 = vpack.c.b16 %v436, %v435
    %v545 = vpack.c.b16 %v438, %v437
    %v546 = vpack.c.b16 %v440, %v439
    %v547 = vpack.c.b16 %v442, %v441
    %v548 = vpack.c.b16 %v444, %v443
    %v549 = vpack.c.b16 %v446, %v445
    %v550 = vpack.c.b16 %v448, %v447
    %v551 = vpack.c.b16 %v450, %v449
    %v552 = vpack.c.b16 %v452, %v451
    %v553 = vpack.c.b16 %v454, %v453
    %v554 = vpack.c.b16 %v456, %v455
    %v555 = vpack.c.b16 %v458, %v457
    %v556 = vpack.c.b16 %v460, %v459
    %v557 = vpack.c.b16 %v462, %v461
    %v558 = vpack.c.b16 %v464, %v463
    %v559 = vpack.c.b16 %v466, %v465
    %v560 = vpack.c.b16 %v468, %v467
    %v561 = vpack.c.b16 %v470, %v469
    %v562 = vpack.c.b16 %v472, %v471
    %v563 = vpack.c.b16 %v474, %v473
    %v564 = vpack.c.b16 %v476, %v475
    %v565 = vpack.c.b16 %v478, %v477
    %v566 = vpack.c.b16 %v480, %v479
    %v567 = vpack.c.b16 %v482, %v481
    %v568 = vpack.c.b16 %v484, %v483
    %v569 = vpack.c.b16 %v486, %v485
    %v570 = vpack.c.b16 %v488, %v487
    %v571 = vpack.c.b16 %v490, %v489
    %v572 = vpack.c.b16 %v492, %v491
    %v573 = vpack.c.b16 %v494, %v493
    %v574 = vpack.c.b16 %v496, %v495
    %v575 = vpack.c.b16 %v498, %v497
    %v576 = vpack.c.b16 %v500, %v499
    %v577 = vpack.c.b16 %v502, %v501
    %v578 = vpack.c.b16 %v504, %v503
    %v579 = vpack.c.b16 %v506, %v505
    %v580 = vpack.c.b16 %v508, %v507
    %v581 = vpack.c.b16 %v510, %v509
    %v582 = vpack.c.b16 %v512, %v511
    %v583 = vpack.c.b16 %v514, %v513
    %v584 = vpack.c.b16 %v516, %v515
    %v585 = vpack.c.b16 %v518, %v517
    %v586 = vpack.c.b16 %v520, %v519
    %v587 = vpack.c.b16 %v522, %v521
    %v588 = vpack.c.b16 %v524, %v523
    %653 = vxpose.xlu0.c.b16.start [1/8] %v525, 128
    %654 = vxpose.xlu0.c.b16.cont [2/8] %v526, 128
    %655 = vxpose.xlu0.c.b16.cont [3/8] %v527, 128
    %656 = vxpose.xlu0.c.b16.cont [4/8] %v528, 128
    %657 = vxpose.xlu0.c.b16.cont [5/8] %v529, 128
    %658 = vxpose.xlu0.c.b16.cont [6/8] %v530, 128
    %659 = vxpose.xlu0.c.b16.cont [7/8] %v531, 128
    %660 = vxpose.xlu0.c.b16.end [8/8] %v532, 128
    %v661 = vpop.trf.xlu0
    %v662 = vpop.trf.xlu0
    %v663 = vpop.trf.xlu0
    %v664 = vpop.trf.xlu0
    %v665 = vpop.trf.xlu0
    %v666 = vpop.trf.xlu0
    %v667 = vpop.trf.xlu0
    %v668 = vpop.trf.xlu0
    %669 = vxpose.xlu0.c.b16.start [1/8] %v533, 128
    %670 = vxpose.xlu0.c.b16.cont [2/8] %v534, 128
    %671 = vxpose.xlu0.c.b16.cont [3/8] %v535, 128
    %672 = vxpose.xlu0.c.b16.cont [4/8] %v536, 128
    %673 = vxpose.xlu0.c.b16.cont [5/8] %v537, 128
    %674 = vxpose.xlu0.c.b16.cont [6/8] %v538, 128
    %675 = vxpose.xlu0.c.b16.cont [7/8] %v539, 128
    %676 = vxpose.xlu0.c.b16.end [8/8] %v540, 128
    %v677 = vpop.trf.xlu0
    %v678 = vpop.trf.xlu0
    %v679 = vpop.trf.xlu0
    %v680 = vpop.trf.xlu0
    %v681 = vpop.trf.xlu0
    %v682 = vpop.trf.xlu0
    %v683 = vpop.trf.xlu0
    %v684 = vpop.trf.xlu0
    %685 = vxpose.xlu0.c.b16.start [1/8] %v541, 128
    %686 = vxpose.xlu0.c.b16.cont [2/8] %v542, 128
    %687 = vxpose.xlu0.c.b16.cont [3/8] %v543, 128
    %688 = vxpose.xlu0.c.b16.cont [4/8] %v544, 128
    %689 = vxpose.xlu0.c.b16.cont [5/8] %v545, 128
    %690 = vxpose.xlu0.c.b16.cont [6/8] %v546, 128
    %691 = vxpose.xlu0.c.b16.cont [7/8] %v547, 128
    %692 = vxpose.xlu0.c.b16.end [8/8] %v548, 128
    %v693 = vpop.trf.xlu0
    %v694 = vpop.trf.xlu0
    %v695 = vpop.trf.xlu0
    %v696 = vpop.trf.xlu0
    %v697 = vpop.trf.xlu0
    %v698 = vpop.trf.xlu0
    %v699 = vpop.trf.xlu0
    %v700 = vpop.trf.xlu0
    %701 = vxpose.xlu0.c.b16.start [1/8] %v549, 128
    %702 = vxpose.xlu0.c.b16.cont [2/8] %v550, 128
    %703 = vxpose.xlu0.c.b16.cont [3/8] %v551, 128
    %704 = vxpose.xlu0.c.b16.cont [4/8] %v552, 128
    %705 = vxpose.xlu0.c.b16.cont [5/8] %v553, 128
    %706 = vxpose.xlu0.c.b16.cont [6/8] %v554, 128
    %707 = vxpose.xlu0.c.b16.cont [7/8] %v555, 128
    %708 = vxpose.xlu0.c.b16.end [8/8] %v556, 128
    %v709 = vpop.trf.xlu0
    %v710 = vpop.trf.xlu0
    %v711 = vpop.trf.xlu0
    %v712 = vpop.trf.xlu0
    %v713 = vpop.trf.xlu0
    %v714 = vpop.trf.xlu0
    %v715 = vpop.trf.xlu0
    %v716 = vpop.trf.xlu0
    %717 = vxpose.xlu0.c.b16.start [1/8] %v557, 128
    %718 = vxpose.xlu0.c.b16.cont [2/8] %v558, 128
    %719 = vxpose.xlu0.c.b16.cont [3/8] %v559, 128
    %720 = vxpose.xlu0.c.b16.cont [4/8] %v560, 128
    %721 = vxpose.xlu0.c.b16.cont [5/8] %v561, 128
    %722 = vxpose.xlu0.c.b16.cont [6/8] %v562, 128
    %723 = vxpose.xlu0.c.b16.cont [7/8] %v563, 128
    %724 = vxpose.xlu0.c.b16.end [8/8] %v564, 128
    %v725 = vpop.trf.xlu0
    %v726 = vpop.trf.xlu0
    %v727 = vpop.trf.xlu0
    %v728 = vpop.trf.xlu0
    %v729 = vpop.trf.xlu0
    %v730 = vpop.trf.xlu0
    %v731 = vpop.trf.xlu0
    %v732 = vpop.trf.xlu0
    %733 = vxpose.xlu0.c.b16.start [1/8] %v565, 128
    %734 = vxpose.xlu0.c.b16.cont [2/8] %v566, 128
    %735 = vxpose.xlu0.c.b16.cont [3/8] %v567, 128
    %736 = vxpose.xlu0.c.b16.cont [4/8] %v568, 128
    %737 = vxpose.xlu0.c.b16.cont [5/8] %v569, 128
    %738 = vxpose.xlu0.c.b16.cont [6/8] %v570, 128
    %739 = vxpose.xlu0.c.b16.cont [7/8] %v571, 128
    %740 = vxpose.xlu0.c.b16.end [8/8] %v572, 128
    %v741 = vpop.trf.xlu0
    %v742 = vpop.trf.xlu0
    %v743 = vpop.trf.xlu0
    %v744 = vpop.trf.xlu0
    %v745 = vpop.trf.xlu0
    %v746 = vpop.trf.xlu0
    %v747 = vpop.trf.xlu0
    %v748 = vpop.trf.xlu0
    %749 = vxpose.xlu0.c.b16.start [1/8] %v573, 128
    %750 = vxpose.xlu0.c.b16.cont [2/8] %v574, 128
    %751 = vxpose.xlu0.c.b16.cont [3/8] %v575, 128
    %752 = vxpose.xlu0.c.b16.cont [4/8] %v576, 128
    %753 = vxpose.xlu0.c.b16.cont [5/8] %v577, 128
    %754 = vxpose.xlu0.c.b16.cont [6/8] %v578, 128
    %755 = vxpose.xlu0.c.b16.cont [7/8] %v579, 128
    %756 = vxpose.xlu0.c.b16.end [8/8] %v580, 128
    %v757 = vpop.trf.xlu0
    %v758 = vpop.trf.xlu0
    %v759 = vpop.trf.xlu0
    %v760 = vpop.trf.xlu0
    %v761 = vpop.trf.xlu0
    %v762 = vpop.trf.xlu0
    %v763 = vpop.trf.xlu0
    %v764 = vpop.trf.xlu0
    %765 = vxpose.xlu0.c.b16.start [1/8] %v581, 128
    %766 = vxpose.xlu0.c.b16.cont [2/8] %v582, 128
    %767 = vxpose.xlu0.c.b16.cont [3/8] %v583, 128
    %768 = vxpose.xlu0.c.b16.cont [4/8] %v584, 128
    %769 = vxpose.xlu0.c.b16.cont [5/8] %v585, 128
    %770 = vxpose.xlu0.c.b16.cont [6/8] %v586, 128
    %771 = vxpose.xlu0.c.b16.cont [7/8] %v587, 128
    %772 = vxpose.xlu0.c.b16.end [8/8] %v588, 128
    %v773 = vpop.trf.xlu0
    %v774 = vpop.trf.xlu0
    %v775 = vpop.trf.xlu0
    %v776 = vpop.trf.xlu0
    %v777 = vpop.trf.xlu0
    %v778 = vpop.trf.xlu0
    %v779 = vpop.trf.xlu0
    %v780 = vpop.trf.xlu0
    %v909 = vunpack.c.l.b16 %v141
    %v910 = vunpack.c.l.b16 %v142
    %v911 = vunpack.c.l.b16 %v143
    %v912 = vunpack.c.l.b16 %v144
    %v913 = vunpack.c.l.b16 %v145
    %v914 = vunpack.c.l.b16 %v146
    %v915 = vunpack.c.l.b16 %v147
    %v916 = vunpack.c.l.b16 %v148
    %v917 = vunpack.c.l.b16 %v149
    %v918 = vunpack.c.l.b16 %v150
    %v919 = vunpack.c.l.b16 %v151
    %v920 = vunpack.c.l.b16 %v152
    %v921 = vunpack.c.l.b16 %v153
    %v922 = vunpack.c.l.b16 %v154
    %v923 = vunpack.c.l.b16 %v155
    %v924 = vunpack.c.l.b16 %v156
    %v925 = vunpack.c.l.b16 %v157
    %v926 = vunpack.c.l.b16 %v158
    %v927 = vunpack.c.l.b16 %v159
    %v928 = vunpack.c.l.b16 %v160
    %v929 = vunpack.c.l.b16 %v161
    %v930 = vunpack.c.l.b16 %v162
    %v931 = vunpack.c.l.b16 %v163
    %v932 = vunpack.c.l.b16 %v164
    %v933 = vunpack.c.l.b16 %v165
    %v934 = vunpack.c.l.b16 %v166
    %v935 = vunpack.c.l.b16 %v167
    %v936 = vunpack.c.l.b16 %v168
    %v937 = vunpack.c.l.b16 %v169
    %v938 = vunpack.c.l.b16 %v170
    %v939 = vunpack.c.l.b16 %v171
    %v940 = vunpack.c.l.b16 %v172
    %v941 = vunpack.c.l.b16 %v173
    %v942 = vunpack.c.l.b16 %v174
    %v943 = vunpack.c.l.b16 %v175
    %v944 = vunpack.c.l.b16 %v176
    %v945 = vunpack.c.l.b16 %v177
    %v946 = vunpack.c.l.b16 %v178
    %v947 = vunpack.c.l.b16 %v179
    %v948 = vunpack.c.l.b16 %v180
    %v949 = vunpack.c.l.b16 %v181
    %v950 = vunpack.c.l.b16 %v182
    %v951 = vunpack.c.l.b16 %v183
    %v952 = vunpack.c.l.b16 %v184
    %v953 = vunpack.c.l.b16 %v185
    %v954 = vunpack.c.l.b16 %v186
    %v955 = vunpack.c.l.b16 %v187
    %v956 = vunpack.c.l.b16 %v188
    %v957 = vunpack.c.l.b16 %v189
    %v958 = vunpack.c.l.b16 %v190
    %v959 = vunpack.c.l.b16 %v191
    %v960 = vunpack.c.l.b16 %v192
    %v961 = vunpack.c.l.b16 %v193
    %v962 = vunpack.c.l.b16 %v194
    %v963 = vunpack.c.l.b16 %v195
    %v964 = vunpack.c.l.b16 %v196
    %v965 = vunpack.c.l.b16 %v197
    %v966 = vunpack.c.l.b16 %v198
    %v967 = vunpack.c.l.b16 %v199
    %v968 = vunpack.c.l.b16 %v200
    %v969 = vunpack.c.l.b16 %v201
    %v970 = vunpack.c.l.b16 %v202
    %v971 = vunpack.c.l.b16 %v203
    %v972 = vunpack.c.l.b16 %v204
    %v973 = vunpack.c.l.b16 %v205
    %v974 = vunpack.c.l.b16 %v206
    %v975 = vunpack.c.l.b16 %v207
    %v976 = vunpack.c.l.b16 %v208
    %v977 = vunpack.c.l.b16 %v209
    %v978 = vunpack.c.l.b16 %v210
    %v979 = vunpack.c.l.b16 %v211
    %v980 = vunpack.c.l.b16 %v212
    %v981 = vunpack.c.l.b16 %v213
    %v982 = vunpack.c.l.b16 %v214
    %v983 = vunpack.c.l.b16 %v215
    %v984 = vunpack.c.l.b16 %v216
    %v985 = vunpack.c.l.b16 %v217
    %v986 = vunpack.c.l.b16 %v218
    %v987 = vunpack.c.l.b16 %v219
    %v988 = vunpack.c.l.b16 %v220
    %v989 = vunpack.c.l.b16 %v221
    %v990 = vunpack.c.l.b16 %v222
    %v991 = vunpack.c.l.b16 %v223
    %v992 = vunpack.c.l.b16 %v224
    %v993 = vunpack.c.l.b16 %v225
    %v994 = vunpack.c.l.b16 %v226
    %v995 = vunpack.c.l.b16 %v227
    %v996 = vunpack.c.l.b16 %v228
    %v997 = vunpack.c.l.b16 %v229
    %v998 = vunpack.c.l.b16 %v230
    %v999 = vunpack.c.l.b16 %v231
    %v1000 = vunpack.c.l.b16 %v232
    %v1001 = vunpack.c.l.b16 %v233
    %v1002 = vunpack.c.l.b16 %v234
    %v1003 = vunpack.c.l.b16 %v235
    %v1004 = vunpack.c.l.b16 %v236
    %v1005 = vunpack.c.l.b16 %v237
    %v1006 = vunpack.c.l.b16 %v238
    %v1007 = vunpack.c.l.b16 %v239
    %v1008 = vunpack.c.l.b16 %v240
    %v1009 = vunpack.c.l.b16 %v241
    %v1010 = vunpack.c.l.b16 %v242
    %v1011 = vunpack.c.l.b16 %v243
    %v1012 = vunpack.c.l.b16 %v244
    %v1013 = vunpack.c.l.b16 %v245
    %v1014 = vunpack.c.l.b16 %v246
    %v1015 = vunpack.c.l.b16 %v247
    %v1016 = vunpack.c.l.b16 %v248
    %v1017 = vunpack.c.l.b16 %v249
    %v1018 = vunpack.c.l.b16 %v250
    %v1019 = vunpack.c.l.b16 %v251
    %v1020 = vunpack.c.l.b16 %v252
    %v1021 = vunpack.c.l.b16 %v253
    %v1022 = vunpack.c.l.b16 %v254
    %v1023 = vunpack.c.l.b16 %v255
    %v1024 = vunpack.c.l.b16 %v256
    %v1025 = vunpack.c.l.b16 %v257
    %v1026 = vunpack.c.l.b16 %v258
    %v1027 = vunpack.c.l.b16 %v259
    %v1028 = vunpack.c.l.b16 %v260
    %v1029 = vunpack.c.l.b16 %v261
    %v1030 = vunpack.c.l.b16 %v262
    %v1031 = vunpack.c.l.b16 %v263
    %v1032 = vunpack.c.l.b16 %v264
    %v1033 = vunpack.c.l.b16 %v265
    %v1034 = vunpack.c.l.b16 %v266
    %v1035 = vunpack.c.l.b16 %v267
    %v1036 = vunpack.c.l.b16 %v268
    %v1037 = vpack.c.b16 %v910, %v909
    %v1038 = vpack.c.b16 %v912, %v911
    %v1039 = vpack.c.b16 %v914, %v913
    %v1040 = vpack.c.b16 %v916, %v915
    %v1041 = vpack.c.b16 %v918, %v917
    %v1042 = vpack.c.b16 %v920, %v919
    %v1043 = vpack.c.b16 %v922, %v921
    %v1044 = vpack.c.b16 %v924, %v923
    %v1045 = vpack.c.b16 %v926, %v925
    %v1046 = vpack.c.b16 %v928, %v927
    %v1047 = vpack.c.b16 %v930, %v929
    %v1048 = vpack.c.b16 %v932, %v931
    %v1049 = vpack.c.b16 %v934, %v933
    %v1050 = vpack.c.b16 %v936, %v935
    %v1051 = vpack.c.b16 %v938, %v937
    %v1052 = vpack.c.b16 %v940, %v939
    %v1053 = vpack.c.b16 %v942, %v941
    %v1054 = vpack.c.b16 %v944, %v943
    %v1055 = vpack.c.b16 %v946, %v945
    %v1056 = vpack.c.b16 %v948, %v947
    %v1057 = vpack.c.b16 %v950, %v949
    %v1058 = vpack.c.b16 %v952, %v951
    %v1059 = vpack.c.b16 %v954, %v953
    %v1060 = vpack.c.b16 %v956, %v955
    %v1061 = vpack.c.b16 %v958, %v957
    %v1062 = vpack.c.b16 %v960, %v959
    %v1063 = vpack.c.b16 %v962, %v961
    %v1064 = vpack.c.b16 %v964, %v963
    %v1065 = vpack.c.b16 %v966, %v965
    %v1066 = vpack.c.b16 %v968, %v967
    %v1067 = vpack.c.b16 %v970, %v969
    %v1068 = vpack.c.b16 %v972, %v971
    %v1069 = vpack.c.b16 %v974, %v973
    %v1070 = vpack.c.b16 %v976, %v975
    %v1071 = vpack.c.b16 %v978, %v977
    %v1072 = vpack.c.b16 %v980, %v979
    %v1073 = vpack.c.b16 %v982, %v981
    %v1074 = vpack.c.b16 %v984, %v983
    %v1075 = vpack.c.b16 %v986, %v985
    %v1076 = vpack.c.b16 %v988, %v987
    %v1077 = vpack.c.b16 %v990, %v989
    %v1078 = vpack.c.b16 %v992, %v991
    %v1079 = vpack.c.b16 %v994, %v993
    %v1080 = vpack.c.b16 %v996, %v995
    %v1081 = vpack.c.b16 %v998, %v997
    %v1082 = vpack.c.b16 %v1000, %v999
    %v1083 = vpack.c.b16 %v1002, %v1001
    %v1084 = vpack.c.b16 %v1004, %v1003
    %v1085 = vpack.c.b16 %v1006, %v1005
    %v1086 = vpack.c.b16 %v1008, %v1007
    %v1087 = vpack.c.b16 %v1010, %v1009
    %v1088 = vpack.c.b16 %v1012, %v1011
    %v1089 = vpack.c.b16 %v1014, %v1013
    %v1090 = vpack.c.b16 %v1016, %v1015
    %v1091 = vpack.c.b16 %v1018, %v1017
    %v1092 = vpack.c.b16 %v1020, %v1019
    %v1093 = vpack.c.b16 %v1022, %v1021
    %v1094 = vpack.c.b16 %v1024, %v1023
    %v1095 = vpack.c.b16 %v1026, %v1025
    %v1096 = vpack.c.b16 %v1028, %v1027
    %v1097 = vpack.c.b16 %v1030, %v1029
    %v1098 = vpack.c.b16 %v1032, %v1031
    %v1099 = vpack.c.b16 %v1034, %v1033
    %v1100 = vpack.c.b16 %v1036, %v1035
    %1165 = vmatprep.subr.bf16.mxu0 0
    %1166 = vmatpush1.bf16.msra.mxu0 %v1044
    %1167 = vmatprep.subr.bf16.mxu0 0
    %1168 = vmatpush1.bf16.msra.mxu0 %v1043
    %1169 = vmatprep.subr.bf16.mxu0 0
    %1170 = vmatpush1.bf16.msra.mxu0 %v1042
    %1171 = vmatprep.subr.bf16.mxu0 0
    %1172 = vmatpush1.bf16.msra.mxu0 %v1041
    %1173 = vmatprep.subr.bf16.mxu0 0
    %1174 = vmatpush1.bf16.msra.mxu0 %v1040
    %1175 = vmatprep.subr.bf16.mxu0 0
    %1176 = vmatpush1.bf16.msra.mxu0 %v1039
    %1177 = vmatprep.subr.bf16.mxu0 0
    %1178 = vmatpush1.bf16.msra.mxu0 %v1038
    %1179 = vmatprep.subr.bf16.mxu0 0
    %1180 = vmatpush1.bf16.msra.mxu0 %v1037
    %1181 = vmatprep.subr.bf16.mxu0 0
    %1182 = vmatpush2.bf16.msra.mxu0 %v1052
    %1183 = vmatprep.subr.bf16.mxu0 0
    %1184 = vmatpush2.bf16.msra.mxu0 %v1051
    %1185 = vmatprep.subr.bf16.mxu0 0
    %1186 = vmatpush2.bf16.msra.mxu0 %v1050
    %1187 = vmatprep.subr.bf16.mxu0 0
    %1188 = vmatpush2.bf16.msra.mxu0 %v1049
    %1189 = vmatprep.subr.bf16.mxu0 0
    %1190 = vmatpush2.bf16.msra.mxu0 %v1048
    %1191 = vmatprep.subr.bf16.mxu0 0
    %1192 = vmatpush2.bf16.msra.mxu0 %v1047
    %1193 = vmatprep.subr.bf16.mxu0 0
    %1194 = vmatpush2.bf16.msra.mxu0 %v1046
    %1195 = vmatprep.subr.bf16.mxu0 0
    %1196 = vmatpush2.bf16.msra.mxu0 %v1045
    %1197 = vmatprep.mubr.bf16.mxu0 %v677
    %1198 = vmatmul.mubr.bf16.gmra.mxu0 %v661
    %v1199 = vpop.f32.mrf.mxu0
    %v1200 = vadd.f32 0.0, %v1199
    %v1201 = vpop.f32.mrf.mxu0
    %v1202 = vpop.f32.mrf.mxu0
    %v1203 = vpop.f32.mrf.mxu0
    %1204 = vdwg.mxu0
    %1205 = vmatprep.subr.bf16.mxu0 0
    %1206 = vmatpush1.bf16.msra.mxu0 %v1060
    %1207 = vmatprep.subr.bf16.mxu0 0
    %1208 = vmatpush1.bf16.msra.mxu0 %v1059
    %1209 = vmatprep.subr.bf16.mxu0 0
    %1210 = vmatpush1.bf16.msra.mxu0 %v1058
    %1211 = vmatprep.subr.bf16.mxu0 0
    %1212 = vmatpush1.bf16.msra.mxu0 %v1057
    %1213 = vmatprep.subr.bf16.mxu0 0
    %1214 = vmatpush1.bf16.msra.mxu0 %v1056
    %1215 = vmatprep.subr.bf16.mxu0 0
    %1216 = vmatpush1.bf16.msra.mxu0 %v1055
    %1217 = vmatprep.subr.bf16.mxu0 0
    %1218 = vmatpush1.bf16.msra.mxu0 %v1054
    %1219 = vmatprep.subr.bf16.mxu0 0
    %1220 = vmatpush1.bf16.msra.mxu0 %v1053
    %1221 = vmatprep.subr.bf16.mxu0 0
    %1222 = vmatpush2.bf16.msra.mxu0 %v1068
    %1223 = vmatprep.subr.bf16.mxu0 0
    %1224 = vmatpush2.bf16.msra.mxu0 %v1067
    %1225 = vmatprep.subr.bf16.mxu0 0
    %1226 = vmatpush2.bf16.msra.mxu0 %v1066
    %1227 = vmatprep.subr.bf16.mxu0 0
    %1228 = vmatpush2.bf16.msra.mxu0 %v1065
    %1229 = vmatprep.subr.bf16.mxu0 0
    %1230 = vmatpush2.bf16.msra.mxu0 %v1064
    %1231 = vmatprep.subr.bf16.mxu0 0
    %1232 = vmatpush2.bf16.msra.mxu0 %v1063
    %1233 = vmatprep.subr.bf16.mxu0 0
    %1234 = vmatpush2.bf16.msra.mxu0 %v1062
    %1235 = vmatprep.subr.bf16.mxu0 0
    %1236 = vmatpush2.bf16.msra.mxu0 %v1061
    %1237 = vmatprep.mubr.bf16.mxu0 %v709
    %1238 = vmatmul.mubr.bf16.gmra.mxu0 %v693
    %v1239 = vpop.f32.mrf.mxu0
    %v1240 = vadd.f32 %v1200, %v1239
    %v1241 = vpop.f32.mrf.mxu0
    %v1242 = vpop.f32.mrf.mxu0
    %v1243 = vpop.f32.mrf.mxu0
    %1244 = vdwg.mxu0
    %1245 = vmatprep.subr.bf16.mxu0 0
    %1246 = vmatpush1.bf16.msra.mxu0 %v1076
    %1247 = vmatprep.subr.bf16.mxu0 0
    %1248 = vmatpush1.bf16.msra.mxu0 %v1075
    %1249 = vmatprep.subr.bf16.mxu0 0
    %1250 = vmatpush1.bf16.msra.mxu0 %v1074
    %1251 = vmatprep.subr.bf16.mxu0 0
    %1252 = vmatpush1.bf16.msra.mxu0 %v1073
    %1253 = vmatprep.subr.bf16.mxu0 0
    %1254 = vmatpush1.bf16.msra.mxu0 %v1072
    %1255 = vmatprep.subr.bf16.mxu0 0
    %1256 = vmatpush1.bf16.msra.mxu0 %v1071
    %1257 = vmatprep.subr.bf16.mxu0 0
    %1258 = vmatpush1.bf16.msra.mxu0 %v1070
    %1259 = vmatprep.subr.bf16.mxu0 0
    %1260 = vmatpush1.bf16.msra.mxu0 %v1069
    %1261 = vmatprep.subr.bf16.mxu0 0
    %1262 = vmatpush2.bf16.msra.mxu0 %v1084
    %1263 = vmatprep.subr.bf16.mxu0 0
    %1264 = vmatpush2.bf16.msra.mxu0 %v1083
    %1265 = vmatprep.subr.bf16.mxu0 0
    %1266 = vmatpush2.bf16.msra.mxu0 %v1082
    %1267 = vmatprep.subr.bf16.mxu0 0
    %1268 = vmatpush2.bf16.msra.mxu0 %v1081
    %1269 = vmatprep.subr.bf16.mxu0 0
    %1270 = vmatpush2.bf16.msra.mxu0 %v1080
    %1271 = vmatprep.subr.bf16.mxu0 0
    %1272 = vmatpush2.bf16.msra.mxu0 %v1079
    %1273 = vmatprep.subr.bf16.mxu0 0
    %1274 = vmatpush2.bf16.msra.mxu0 %v1078
    %1275 = vmatprep.subr.bf16.mxu0 0
    %1276 = vmatpush2.bf16.msra.mxu0 %v1077
    %1277 = vmatprep.mubr.bf16.mxu0 %v741
    %1278 = vmatmul.mubr.bf16.gmra.mxu0 %v725
    %v1279 = vpop.f32.mrf.mxu0
    %v1280 = vadd.f32 %v1240, %v1279
    %v1281 = vpop.f32.mrf.mxu0
    %v1282 = vpop.f32.mrf.mxu0
    %v1283 = vpop.f32.mrf.mxu0
    %1284 = vdwg.mxu0
    %1285 = vmatprep.subr.bf16.mxu0 0
    %1286 = vmatpush1.bf16.msra.mxu0 %v1092
    %1287 = vmatprep.subr.bf16.mxu0 0
    %1288 = vmatpush1.bf16.msra.mxu0 %v1091
    %1289 = vmatprep.subr.bf16.mxu0 0
    %1290 = vmatpush1.bf16.msra.mxu0 %v1090
    %1291 = vmatprep.subr.bf16.mxu0 0
    %1292 = vmatpush1.bf16.msra.mxu0 %v1089
    %1293 = vmatprep.subr.bf16.mxu0 0
    %1294 = vmatpush1.bf16.msra.mxu0 %v1088
    %1295 = vmatprep.subr.bf16.mxu0 0
    %1296 = vmatpush1.bf16.msra.mxu0 %v1087
    %1297 = vmatprep.subr.bf16.mxu0 0
    %1298 = vmatpush1.bf16.msra.mxu0 %v1086
    %1299 = vmatprep.subr.bf16.mxu0 0
    %1300 = vmatpush1.bf16.msra.mxu0 %v1085
    %1301 = vmatprep.subr.bf16.mxu0 0
    %1302 = vmatpush2.bf16.msra.mxu0 %v1100
    %1303 = vmatprep.subr.bf16.mxu0 0
    %1304 = vmatpush2.bf16.msra.mxu0 %v1099
    %1305 = vmatprep.subr.bf16.mxu0 0
    %1306 = vmatpush2.bf16.msra.mxu0 %v1098
    %1307 = vmatprep.subr.bf16.mxu0 0
    %1308 = vmatpush2.bf16.msra.mxu0 %v1097
    %1309 = vmatprep.subr.bf16.mxu0 0
    %1310 = vmatpush2.bf16.msra.mxu0 %v1096
    %1311 = vmatprep.subr.bf16.mxu0 0
    %1312 = vmatpush2.bf16.msra.mxu0 %v1095
    %1313 = vmatprep.subr.bf16.mxu0 0
    %1314 = vmatpush2.bf16.msra.mxu0 %v1094
    %1315 = vmatprep.subr.bf16.mxu0 0
    %1316 = vmatpush2.bf16.msra.mxu0 %v1093
    %1317 = vmatprep.mubr.bf16.mxu0 %v773
    %1318 = vmatmul.mubr.bf16.gmra.mxu0 %v757
    %v1319 = vpop.f32.mrf.mxu0
    %v1320 = vadd.f32 %v1280, %v1319
    %v1321 = vpop.f32.mrf.mxu0
    %v1322 = vpop.f32.mrf.mxu0
    %v1323 = vpop.f32.mrf.mxu0
    %1324 = vdwg.mxu0
    %v1325 = vmul.f32 %v1320, 0.5
    %v1326 = vtanh.pop %v1325
    %v1327 = vadd.f32 %v1326, 1.0
    %v1328 = vmul.f32 %v1327, 0.5
    %vm1329 = vcmask 8192
    %1330 = vst.msk [vmem:[#allocation2] sm:$0x1] %vm1329, %v1328
    // Predicated region
    $region10: #{discriminator_forward.15} parent=1 // pred_check
      _
    $region11: #{discriminator_forward.15} parent=1 // pred_check_branch
      %1332 = sbr.rel (0) target = $region13
    $region12: #{discriminator_forward.15} parent=1 // pred_region
      %s1334 = ssub.s32 16, 16
      %1335 = vsyncadd [#allocation3], %s1334
      %s1337 = sshll.u32 [#allocation2], 4
      %s1338 = int_to_ptr.vmem [resolvable:$true] %s1337
      %1340 = dma.vmem_to_hbm [thread:$0]  %s1338, 16, %s2, [#allocation3]
    $region13: #{discriminator_forward.15} parent=1 // pred_fallthru
      _
    // Predicated region
    $region14: #{discriminator_forward.15} parent=1 // pred_check
      _
    $region15: #{discriminator_forward.15} parent=1 // pred_check_branch
      %1342 = sbr.rel (0) target = $region17
    $region16: #{discriminator_forward.15} parent=1 // pred_region
      %1343 = dma.done [#allocation3], 16
    $region17: #{discriminator_forward.15} parent=1 // pred_fallthru
      _
    %1344 = vsyncpa [#allocation3], 1

</llo_original>
